<compile_context>
chip_gen: v7x
topology: tpu7x:2x2x1
jax: 0.10.0
libtpu: 0.0.40
codegen_flags: <defaults>
</compile_context>

<pallas_src>
import jax
import jax.numpy as jnp
from jax.experimental import pallas as pl
from jax.experimental.pallas import tpu as pltpu


# ---------------------------------------------------------------------------
# Fused DoubleConv kernel:  [pad+concat] -> conv3x3+BN+ReLU -> conv3x3+BN+ReLU
# One grid step == one batch element.
# ---------------------------------------------------------------------------
def _double_conv_kernel(x2_ref, x1_ref, w1_ref, s1_ref, b1_ref,
                        w2_ref, s2_ref, b2_ref, o_ref, xpad_ref, hpad_ref):
    # x2_ref : (1, H, W, C2)   bf16  skip connection
    # x1_ref : (1, H, W, C1)   bf16  upsampled tensor
    # w1_ref : (9*(C2+C1), Cmid_pad) bf16   3x3 taps flattened into K
    # w2_ref : (9*Cmid_pad, Cout_pad) bf16
    # s*/b*  : (1, C*_pad)     f32   fused BN scale / shift (incl. conv bias)
    # o_ref  : (1, H, W, Cout_pad)  f32 (lane-dense: Cout_pad % 128 == 0)
    # xpad_ref : VMEM (H+2, W+2, C2+C1)  bf16  zero-bordered, holds the concat
    # hpad_ref : VMEM (H+2, W+2, Cmid_pad) bf16  zero-bordered intermediate
    _, H, W, C2 = x2_ref.shape
    C1 = x1_ref.shape[-1]
    Cmidp = hpad_ref.shape[-1]
    Coutp = o_ref.shape[-1]

    # ---- fused SAME-pad + channel concat into a zero-bordered VMEM scratch.
    xpad_ref[...] = jnp.zeros(xpad_ref.shape, xpad_ref.dtype)
    xpad_ref[1:H + 1, 1:W + 1, :C2] = x2_ref[0]
    xpad_ref[1:H + 1, 1:W + 1, C2:C2 + C1] = x1_ref[0]

    def conv3x3_bn_relu(xp, w_ref, s_ref, b_ref):
        # Build the im2col patch matrix once, then ONE MXU matmul (K = 9*Cin).
        C = xp.shape[-1]
        patches = jnp.concatenate(
            [xp[dy:dy + H, dx:dx + W, :].reshape(H * W, C)
             for dy in range(3) for dx in range(3)],
            axis=-1)                                             # (H*W, 9*C) bf16
        acc = jnp.dot(patches, w_ref[...],
                      preferred_element_type=jnp.float32)        # (H*W, Cout_pad) f32
        # Fused BN(affine) + ReLU epilogue in f32.
        return jnp.maximum(acc * s_ref[...] + b_ref[...], 0.0)

    # Conv 1 (consumes the fused concat).
    h = conv3x3_bn_relu(xpad_ref[...], w1_ref, s1_ref, b1_ref)   # (H*W, Cmidp) f32

    # Keep the intermediate in VMEM (no HBM round trip), zero halo border.
    hpad_ref[...] = jnp.zeros(hpad_ref.shape, hpad_ref.dtype)
    hpad_ref[1:H + 1, 1:W + 1, :] = h.reshape(H, W, Cmidp).astype(hpad_ref.dtype)

    # Conv 2.
    y = conv3x3_bn_relu(hpad_ref[...], w2_ref, s2_ref, b2_ref)   # (H*W, Coutp) f32
    o_ref[0] = y.reshape(H, W, Coutp).astype(o_ref.dtype)        # lane-dense store


def double_conv_bn_relu(x2, x1, w1, s1, b1, w2, s2, b2):
    """x2: (N,H,W,C2) bf16, x1: (N,H,W,C1) bf16 (concat is fused in-kernel).

    w1: (9*(C2+C1), Cmid_pad) bf16, w2: (9*Cmid_pad, Cout_pad) bf16,
    s*/b*: (1, C*_pad) f32.  Returns (N, H, W, Cout_pad) f32.
    """
    N, H, W, C2 = x2.shape
    C1 = x1.shape[-1]
    Cin = C2 + C1
    Cmidp = w1.shape[-1]
    Coutp = w2.shape[-1]

    return pl.pallas_call(
        _double_conv_kernel,
        out_shape=jax.ShapeDtypeStruct((N, H, W, Coutp), jnp.float32),
        grid=(N,),
        in_specs=[
            pl.BlockSpec((1, H, W, C2), lambda n: (n, 0, 0, 0)),
            pl.BlockSpec((1, H, W, C1), lambda n: (n, 0, 0, 0)),
            pl.BlockSpec((9 * Cin, Cmidp), lambda n: (0, 0)),
            pl.BlockSpec((1, Cmidp), lambda n: (0, 0)),
            pl.BlockSpec((1, Cmidp), lambda n: (0, 0)),
            pl.BlockSpec((9 * Cmidp, Coutp), lambda n: (0, 0)),
            pl.BlockSpec((1, Coutp), lambda n: (0, 0)),
            pl.BlockSpec((1, Coutp), lambda n: (0, 0)),
        ],
        out_specs=pl.BlockSpec((1, H, W, Coutp), lambda n: (n, 0, 0, 0)),
        scratch_shapes=[
            pltpu.VMEM((H + 2, W + 2, Cin), jnp.bfloat16),    # padded concat input
            pltpu.VMEM((H + 2, W + 2, Cmidp), jnp.bfloat16),  # padded intermediate
        ],
        compiler_params=pltpu.CompilerParams(
            dimension_semantics=("parallel",),
            vmem_limit_bytes=32 * 1024 * 1024,   # explicit; safe on v5e/v6e/v7x
        ),
    )(x2, x1, w1, s1, b1, w2, s2, b2)


# ---------------------------------------------------------------------------
# Glue: bilinear upsample x2 (align_corners=True), skip-size pad  (plain JAX)
# ---------------------------------------------------------------------------
def bilinear_upsample_x2(x):  # NHWC, align_corners=True, scale_factor=2
    N, H, W, C = x.shape
    Ho, Wo = 2 * H, 2 * W

    def coords(out_size, in_size):
        if out_size == 1 or in_size == 1:
            return jnp.zeros((out_size,), jnp.float32)
        return jnp.arange(out_size, dtype=jnp.float32) * (in_size - 1) / (out_size - 1)

    ys, xs = coords(Ho, H), coords(Wo, W)
    y0 = jnp.floor(ys).astype(jnp.int32)
    x0 = jnp.floor(xs).astype(jnp.int32)
    y1 = jnp.minimum(y0 + 1, H - 1)
    x1 = jnp.minimum(x0 + 1, W - 1)
    wy = (ys - y0.astype(jnp.float32))[None, :, None, None]
    wx = (xs - x0.astype(jnp.float32))[None, None, :, None]

    # Separable interpolation: 2 gathers per axis instead of 4 full gathers.
    rows = jnp.take(x, y0, axis=1) * (1.0 - wy) + jnp.take(x, y1, axis=1) * wy
    return jnp.take(rows, x0, axis=2) * (1.0 - wx) + jnp.take(rows, x1, axis=2) * wx


# ---------------------------------------------------------------------------
# Parameter prep: fold BN + bias into scale/shift, pad channels, cast weights.
# ---------------------------------------------------------------------------
def _round_up(x, m):
    return ((x + m - 1) // m) * m


def _prep_conv(p, cin_pad, cout_pad, eps=1e-5):
    w = p["w"]                                    # PyTorch OIHW (cout, cin, 3, 3)
    cout, cin = w.shape[0], w.shape[1]
    scale = p["gamma"] / jnp.sqrt(p["var"] + eps)
    shift = p["beta"] + (p["b"] - p["mean"]) * scale

    w = jnp.transpose(w, (2, 3, 1, 0))            # (3, 3, cin, cout)
    w = jnp.pad(w, ((0, 0), (0, 0), (0, cin_pad - cin), (0, cout_pad - cout)))
    w = w.reshape(9 * cin_pad, cout_pad).astype(jnp.bfloat16)
    scale = jnp.pad(scale, (0, cout_pad - cout)).reshape(1, cout_pad).astype(jnp.float32)
    shift = jnp.pad(shift, (0, cout_pad - cout)).reshape(1, cout_pad).astype(jnp.float32)
    return w, scale, shift


# ---------------------------------------------------------------------------
# Full Up.forward
# ---------------------------------------------------------------------------
@jax.jit
def up_forward(x1_nchw, x2_nchw, raw_params):
    x1 = jnp.transpose(x1_nchw, (0, 2, 3, 1)).astype(jnp.float32)
    x2 = jnp.transpose(x2_nchw, (0, 2, 3, 1)).astype(jnp.float32)

    x1 = bilinear_upsample_x2(x1)
    diff_x = x2.shape[2] - x1.shape[2]
    diff_y = x2.shape[1] - x1.shape[1]
    if diff_x or diff_y:
        x1 = jnp.pad(x1, ((0, 0),
                          (diff_y // 2, diff_y - diff_y // 2),
                          (diff_x // 2, diff_x - diff_x // 2),
                          (0, 0)))

    cin = x2.shape[-1] + x1.shape[-1]
    cmid = raw_params["conv1"]["w"].shape[0]
    cout = raw_params["conv2"]["w"].shape[0]
    cmid_pad = _round_up(cmid, 128)               # lane-dense accumulators/stores
    cout_pad = _round_up(cout, 128)

    w1, s1, b1 = _prep_conv(raw_params["conv1"], cin_pad=cin, cout_pad=cmid_pad)
    w2, s2, b2 = _prep_conv(raw_params["conv2"], cin_pad=cmid_pad, cout_pad=cout_pad)

    y = double_conv_bn_relu(x2.astype(jnp.bfloat16), x1.astype(jnp.bfloat16),
                            w1, s1, b1, w2, s2, b2)
    y = y[..., :cout]                             # drop channel padding
    return jnp.transpose(y, (0, 3, 1, 2))         # back to NCHW


# ---------------------------------------------------------------------------
# Deterministic synthetic parameters (no checkpoint)
# ---------------------------------------------------------------------------
def make_params(key, in_channels, out_channels):
    mid_channels = in_channels // 2               # bilinear=True path of Up

    def conv_block(k, cin, cout):
        kw, kb, kg, kbe, km, kv = jax.random.split(k, 6)
        return {
            "w": 0.1 * jax.random.normal(kw, (cout, cin, 3, 3), jnp.float32),
            "b": 0.1 * jax.random.normal(kb, (cout,), jnp.float32),
            "gamma": 1.0 + 0.1 * jax.random.normal(kg, (cout,), jnp.float32),
            "beta": 0.1 * jax.random.normal(kbe, (cout,), jnp.float32),
            "mean": 0.1 * jax.random.normal(km, (cout,), jnp.float32),
            "var": jnp.abs(0.1 * jax.random.normal(kv, (cout,), jnp.float32)) + 0.5,
        }

    k1, k2 = jax.random.split(key)
    return {"conv1": conv_block(k1, in_channels, mid_channels),
            "conv2": conv_block(k2, mid_channels, out_channels)}


# ---------------------------------------------------------------------------
# Pure-JAX reference (lax.conv).  compute_dtype=bf16 mirrors the kernel's
# numerics (bf16 MXU operands, f32 accumulation, f32 BN/ReLU epilogue) so the
# structural correctness of the Pallas kernel can be checked tightly.
# ---------------------------------------------------------------------------
def _conv_bn_relu_ref(x, p, compute_dtype, eps=1e-5):
    w = jnp.transpose(p["w"], (2, 3, 1, 0)).astype(compute_dtype)   # HWIO
    y = jax.lax.conv_general_dilated(
        x.astype(compute_dtype), w, (1, 1), "SAME",
        dimension_numbers=("NHWC", "HWIO", "NHWC"),
        preferred_element_type=jnp.float32)
    y = y + p["b"]
    y = (y - p["mean"]) * (p["gamma"] / jnp.sqrt(p["var"] + eps)) + p["beta"]
    return jnp.maximum(y, 0.0)


def up_forward_ref(x1_nchw, x2_nchw, raw_params, compute_dtype=jnp.bfloat16):
    x1 = jnp.transpose(x1_nchw, (0, 2, 3, 1)).astype(jnp.float32)
    x2 = jnp.transpose(x2_nchw, (0, 2, 3, 1)).astype(jnp.float32)
    x1 = bilinear_upsample_x2(x1)
    diff_x = x2.shape[2] - x1.shape[2]
    diff_y = x2.shape[1] - x1.shape[1]
    x1 = jnp.pad(x1, ((0, 0),
                      (diff_y // 2, diff_y - diff_y // 2),
                      (diff_x // 2, diff_x - diff_x // 2),
                      (0, 0)))
    x = jnp.concatenate([x2, x1], axis=-1)
    h = _conv_bn_relu_ref(x, raw_params["conv1"], compute_dtype)
    h = _conv_bn_relu_ref(h, raw_params["conv2"], compute_dtype)
    return jnp.transpose(h, (0, 3, 1, 2))


# ---------------------------------------------------------------------------
if __name__ == "__main__":
    B = 2
    in_channels, out_channels = 8, 4              # Up(in=8, out=4, bilinear=True)
    H2, W2 = 16, 16                               # skip-connection spatial size
    H1, W1 = H2 // 2, W2 // 2                     # tensor to upscale

    key = jax.random.PRNGKey(0)
    k1, k2, kp = jax.random.split(key, 3)
    x1 = jax.random.normal(k1, (B, in_channels // 2, H1, W1), jnp.float32)  # below level
    x2 = jax.random.normal(k2, (B, in_channels // 2, H2, W2), jnp.float32)  # skip conn.
    params = make_params(kp, in_channels, out_channels)

    out = jax.block_until_ready(up_forward(x1, x2, params))
    # Reference with matching (bf16-operand / f32-accumulate) numerics.
    ref = jax.block_until_ready(up_forward_ref(x1, x2, params, jnp.bfloat16))

    assert out.shape == (B, out_channels, H2, W2), out.shape
    max_err = float(jnp.max(jnp.abs(out - ref)))
    assert jnp.allclose(out, ref, rtol=1e-2, atol=1e-2), f"mismatch vs ref: {max_err}"
    print("KERNEL_OK")
</pallas_src>

<mosaic_0001>
module attributes {stable_mosaic.version = 11 : i64} {
  func.func @_double_conv_kernel(%arg0: i32, %arg1: memref<1x16x16x4xbf16, #tpu.memory_space<vmem>>, %arg2: memref<1x16x16x4xbf16, #tpu.memory_space<vmem>>, %arg3: memref<72x128xbf16, #tpu.memory_space<vmem>>, %arg4: memref<1x128xf32, #tpu.memory_space<vmem>>, %arg5: memref<1x128xf32, #tpu.memory_space<vmem>>, %arg6: memref<1152x128xbf16, #tpu.memory_space<vmem>>, %arg7: memref<1x128xf32, #tpu.memory_space<vmem>>, %arg8: memref<1x128xf32, #tpu.memory_space<vmem>>, %arg9: memref<1x16x16x128xf32, #tpu.memory_space<vmem>>, %arg10: memref<18x18x8xbf16, #tpu.memory_space<vmem>>, %arg11: memref<18x18x128xbf16, #tpu.memory_space<vmem>>) attributes {dimension_semantics = [#tpu.dimension_semantics<parallel>], iteration_bounds = array<i64: 2>, scalar_prefetch = 0 : i64, scratch_operands = 2 : i64, tpu.core_type = #tpu.core_type<tc>, window_params = [{transform_indices = @transform_0, window_bounds = array<i64: 1, 16, 16, 4>}, {transform_indices = @transform_1, window_bounds = array<i64: 1, 16, 16, 4>}, {pipeline_mode = #tpu.pipeline_mode<synchronous>, transform_indices = @transform_2, window_bounds = array<i64: 72, 128>}, {pipeline_mode = #tpu.pipeline_mode<synchronous>, transform_indices = @transform_3, window_bounds = array<i64: 1, 128>}, {pipeline_mode = #tpu.pipeline_mode<synchronous>, transform_indices = @transform_4, window_bounds = array<i64: 1, 128>}, {pipeline_mode = #tpu.pipeline_mode<synchronous>, transform_indices = @transform_5, window_bounds = array<i64: 1152, 128>}, {pipeline_mode = #tpu.pipeline_mode<synchronous>, transform_indices = @transform_6, window_bounds = array<i64: 1, 128>}, {pipeline_mode = #tpu.pipeline_mode<synchronous>, transform_indices = @transform_7, window_bounds = array<i64: 1, 128>}, {transform_indices = @transform_8, window_bounds = array<i64: 1, 16, 16, 128>}]} {
    %cst = arith.constant 0.000000e+00 : bf16
    %0 = vector.broadcast %cst : bf16 to vector<18x18x8xbf16>
    %c0 = arith.constant 0 : index
    %c0_0 = arith.constant 0 : index
    %c0_1 = arith.constant 0 : index
    %1 = vector.load %arg10[%c0, %c0_0, %c0_1] : memref<18x18x8xbf16, #tpu.memory_space<vmem>>, vector<18x18x8xbf16>
    tpu.vector_store %arg10[%c0, %c0_0, %c0_1], %0 {strides = array<i32>} : memref<18x18x8xbf16, #tpu.memory_space<vmem>>, vector<18x18x8xbf16>,
    %c0_2 = arith.constant 0 : index
    %c0_3 = arith.constant 0 : index
    %c0_4 = arith.constant 0 : index
    %c0_5 = arith.constant 0 : index
    %2 = vector.load %arg1[%c0_2, %c0_3, %c0_4, %c0_5] : memref<1x16x16x4xbf16, #tpu.memory_space<vmem>>, vector<1x16x16x4xbf16>
    %3 = vector.shape_cast %2 : vector<1x16x16x4xbf16> to vector<16x16x4xbf16>
    %c1 = arith.constant 1 : index
    %c1_6 = arith.constant 1 : index
    %c0_7 = arith.constant 0 : index
    %4 = vector.load %arg10[%c1, %c1_6, %c0_7] : memref<18x18x8xbf16, #tpu.memory_space<vmem>>, vector<16x16x4xbf16>
    tpu.vector_store %arg10[%c1, %c1_6, %c0_7], %3 {strides = array<i32>} : memref<18x18x8xbf16, #tpu.memory_space<vmem>>, vector<16x16x4xbf16>,
    %c0_8 = arith.constant 0 : index
    %c0_9 = arith.constant 0 : index
    %c0_10 = arith.constant 0 : index
    %c0_11 = arith.constant 0 : index
    %5 = vector.load %arg2[%c0_8, %c0_9, %c0_10, %c0_11] : memref<1x16x16x4xbf16, #tpu.memory_space<vmem>>, vector<1x16x16x4xbf16>
    %6 = vector.shape_cast %5 : vector<1x16x16x4xbf16> to vector<16x16x4xbf16>
    %c1_12 = arith.constant 1 : index
    %c1_13 = arith.constant 1 : index
    %c4 = arith.constant 4 : index
    %7 = vector.load %arg10[%c1_12, %c1_13, %c4] : memref<18x18x8xbf16, #tpu.memory_space<vmem>>, vector<16x16x4xbf16>
    tpu.vector_store %arg10[%c1_12, %c1_13, %c4], %6 {strides = array<i32>} : memref<18x18x8xbf16, #tpu.memory_space<vmem>>, vector<16x16x4xbf16>,
    %c0_14 = arith.constant 0 : index
    %c0_15 = arith.constant 0 : index
    %c0_16 = arith.constant 0 : index
    %8 = vector.load %arg10[%c0_14, %c0_15, %c0_16] : memref<18x18x8xbf16, #tpu.memory_space<vmem>>, vector<18x18x8xbf16>
    %9 = vector.extract_strided_slice %8 {offsets = [0, 0, 0], sizes = [16, 16, 8], strides = [1, 1, 1]} : vector<18x18x8xbf16> to vector<16x16x8xbf16>
    %10 = vector.shape_cast %9 : vector<16x16x8xbf16> to vector<256x8xbf16>
    %11 = vector.extract_strided_slice %8 {offsets = [0, 1, 0], sizes = [16, 16, 8], strides = [1, 1, 1]} : vector<18x18x8xbf16> to vector<16x16x8xbf16>
    %12 = vector.shape_cast %11 : vector<16x16x8xbf16> to vector<256x8xbf16>
    %13 = vector.extract_strided_slice %8 {offsets = [0, 2, 0], sizes = [16, 16, 8], strides = [1, 1, 1]} : vector<18x18x8xbf16> to vector<16x16x8xbf16>
    %14 = vector.shape_cast %13 : vector<16x16x8xbf16> to vector<256x8xbf16>
    %15 = vector.extract_strided_slice %8 {offsets = [1, 0, 0], sizes = [16, 16, 8], strides = [1, 1, 1]} : vector<18x18x8xbf16> to vector<16x16x8xbf16>
    %16 = vector.shape_cast %15 : vector<16x16x8xbf16> to vector<256x8xbf16>
    %17 = vector.extract_strided_slice %8 {offsets = [1, 1, 0], sizes = [16, 16, 8], strides = [1, 1, 1]} : vector<18x18x8xbf16> to vector<16x16x8xbf16>
    %18 = vector.shape_cast %17 : vector<16x16x8xbf16> to vector<256x8xbf16>
    %19 = vector.extract_strided_slice %8 {offsets = [1, 2, 0], sizes = [16, 16, 8], strides = [1, 1, 1]} : vector<18x18x8xbf16> to vector<16x16x8xbf16>
    %20 = vector.shape_cast %19 : vector<16x16x8xbf16> to vector<256x8xbf16>
    %21 = vector.extract_strided_slice %8 {offsets = [2, 0, 0], sizes = [16, 16, 8], strides = [1, 1, 1]} : vector<18x18x8xbf16> to vector<16x16x8xbf16>
    %22 = vector.shape_cast %21 : vector<16x16x8xbf16> to vector<256x8xbf16>
    %23 = vector.extract_strided_slice %8 {offsets = [2, 1, 0], sizes = [16, 16, 8], strides = [1, 1, 1]} : vector<18x18x8xbf16> to vector<16x16x8xbf16>
    %24 = vector.shape_cast %23 : vector<16x16x8xbf16> to vector<256x8xbf16>
    %25 = vector.extract_strided_slice %8 {offsets = [2, 2, 0], sizes = [16, 16, 8], strides = [1, 1, 1]} : vector<18x18x8xbf16> to vector<16x16x8xbf16>
    %26 = vector.shape_cast %25 : vector<16x16x8xbf16> to vector<256x8xbf16>
    %27 = tpu.concatenate %10, %12, %14, %16, %18, %20, %22, %24, %26 in 1 : vector<256x8xbf16>, vector<256x8xbf16>, vector<256x8xbf16>, vector<256x8xbf16>, vector<256x8xbf16>, vector<256x8xbf16>, vector<256x8xbf16>, vector<256x8xbf16>, vector<256x8xbf16> -> vector<256x72xbf16>
    %c0_17 = arith.constant 0 : index
    %c0_18 = arith.constant 0 : index
    %28 = vector.load %arg3[%c0_17, %c0_18] : memref<72x128xbf16, #tpu.memory_space<vmem>>, vector<72x128xbf16>
    %cst_19 = arith.constant dense<0.000000e+00> : vector<256x128xf32>
    %29 = tpu.matmul %27, %28, %cst_19 {dimension_numbers = #tpu.dot_dimension_numbers<[1], [0], [0], [1], [0, 0, 1, 1], [], []>} : vector<256x72xbf16>, vector<72x128xbf16>, vector<256x128xf32> -> vector<256x128xf32>
    %c0_20 = arith.constant 0 : index
    %c0_21 = arith.constant 0 : index
    %30 = vector.load %arg4[%c0_20, %c0_21] : memref<1x128xf32, #tpu.memory_space<vmem>>, vector<1x128xf32>
    %31 = vector.broadcast %30 : vector<1x128xf32> to vector<256x128xf32>
    %32 = arith.mulf %29, %31 : vector<256x128xf32>
    %c0_22 = arith.constant 0 : index
    %c0_23 = arith.constant 0 : index
    %33 = vector.load %arg5[%c0_22, %c0_23] : memref<1x128xf32, #tpu.memory_space<vmem>>, vector<1x128xf32>
    %34 = vector.broadcast %33 : vector<1x128xf32> to vector<256x128xf32>
    %35 = arith.addf %32, %34 : vector<256x128xf32>
    %cst_24 = arith.constant 0.000000e+00 : f32
    %36 = vector.broadcast %cst_24 : f32 to vector<256x128xf32>
    %37 = arith.maximumf %35, %36 : vector<256x128xf32>
    %cst_25 = arith.constant 0.000000e+00 : bf16
    %38 = vector.broadcast %cst_25 : bf16 to vector<18x18x128xbf16>
    %c0_26 = arith.constant 0 : index
    %c0_27 = arith.constant 0 : index
    %c0_28 = arith.constant 0 : index
    %39 = vector.load %arg11[%c0_26, %c0_27, %c0_28] : memref<18x18x128xbf16, #tpu.memory_space<vmem>>, vector<18x18x128xbf16>
    tpu.vector_store %arg11[%c0_26, %c0_27, %c0_28], %38 {strides = array<i32>} : memref<18x18x128xbf16, #tpu.memory_space<vmem>>, vector<18x18x128xbf16>,
    %40 = vector.shape_cast %37 : vector<256x128xf32> to vector<16x16x128xf32>
    %41 = arith.truncf %40 : vector<16x16x128xf32> to vector<16x16x128xbf16>
    %c1_29 = arith.constant 1 : index
    %c1_30 = arith.constant 1 : index
    %c0_31 = arith.constant 0 : index
    %42 = vector.load %arg11[%c1_29, %c1_30, %c0_31] : memref<18x18x128xbf16, #tpu.memory_space<vmem>>, vector<16x16x128xbf16>
    tpu.vector_store %arg11[%c1_29, %c1_30, %c0_31], %41 {strides = array<i32>} : memref<18x18x128xbf16, #tpu.memory_space<vmem>>, vector<16x16x128xbf16>,
    %c0_32 = arith.constant 0 : index
    %c0_33 = arith.constant 0 : index
    %c0_34 = arith.constant 0 : index
    %43 = vector.load %arg11[%c0_32, %c0_33, %c0_34] : memref<18x18x128xbf16, #tpu.memory_space<vmem>>, vector<18x18x128xbf16>
    %44 = vector.extract_strided_slice %43 {offsets = [0, 0, 0], sizes = [16, 16, 128], strides = [1, 1, 1]} : vector<18x18x128xbf16> to vector<16x16x128xbf16>
    %45 = vector.shape_cast %44 : vector<16x16x128xbf16> to vector<256x128xbf16>
    %46 = vector.extract_strided_slice %43 {offsets = [0, 1, 0], sizes = [16, 16, 128], strides = [1, 1, 1]} : vector<18x18x128xbf16> to vector<16x16x128xbf16>
    %47 = vector.shape_cast %46 : vector<16x16x128xbf16> to vector<256x128xbf16>
    %48 = vector.extract_strided_slice %43 {offsets = [0, 2, 0], sizes = [16, 16, 128], strides = [1, 1, 1]} : vector<18x18x128xbf16> to vector<16x16x128xbf16>
    %49 = vector.shape_cast %48 : vector<16x16x128xbf16> to vector<256x128xbf16>
    %50 = vector.extract_strided_slice %43 {offsets = [1, 0, 0], sizes = [16, 16, 128], strides = [1, 1, 1]} : vector<18x18x128xbf16> to vector<16x16x128xbf16>
    %51 = vector.shape_cast %50 : vector<16x16x128xbf16> to vector<256x128xbf16>
    %52 = vector.extract_strided_slice %43 {offsets = [1, 1, 0], sizes = [16, 16, 128], strides = [1, 1, 1]} : vector<18x18x128xbf16> to vector<16x16x128xbf16>
    %53 = vector.shape_cast %52 : vector<16x16x128xbf16> to vector<256x128xbf16>
    %54 = vector.extract_strided_slice %43 {offsets = [1, 2, 0], sizes = [16, 16, 128], strides = [1, 1, 1]} : vector<18x18x128xbf16> to vector<16x16x128xbf16>
    %55 = vector.shape_cast %54 : vector<16x16x128xbf16> to vector<256x128xbf16>
    %56 = vector.extract_strided_slice %43 {offsets = [2, 0, 0], sizes = [16, 16, 128], strides = [1, 1, 1]} : vector<18x18x128xbf16> to vector<16x16x128xbf16>
    %57 = vector.shape_cast %56 : vector<16x16x128xbf16> to vector<256x128xbf16>
    %58 = vector.extract_strided_slice %43 {offsets = [2, 1, 0], sizes = [16, 16, 128], strides = [1, 1, 1]} : vector<18x18x128xbf16> to vector<16x16x128xbf16>
    %59 = vector.shape_cast %58 : vector<16x16x128xbf16> to vector<256x128xbf16>
    %60 = vector.extract_strided_slice %43 {offsets = [2, 2, 0], sizes = [16, 16, 128], strides = [1, 1, 1]} : vector<18x18x128xbf16> to vector<16x16x128xbf16>
    %61 = vector.shape_cast %60 : vector<16x16x128xbf16> to vector<256x128xbf16>
    %62 = tpu.concatenate %45, %47, %49, %51, %53, %55, %57, %59, %61 in 1 : vector<256x128xbf16>, vector<256x128xbf16>, vector<256x128xbf16>, vector<256x128xbf16>, vector<256x128xbf16>, vector<256x128xbf16>, vector<256x128xbf16>, vector<256x128xbf16>, vector<256x128xbf16> -> vector<256x1152xbf16>
    %c0_35 = arith.constant 0 : index
    %c0_36 = arith.constant 0 : index
    %63 = vector.load %arg6[%c0_35, %c0_36] : memref<1152x128xbf16, #tpu.memory_space<vmem>>, vector<1152x128xbf16>
    %cst_37 = arith.constant dense<0.000000e+00> : vector<256x128xf32>
    %64 = tpu.matmul %62, %63, %cst_37 {dimension_numbers = #tpu.dot_dimension_numbers<[1], [0], [0], [1], [0, 0, 1, 1], [], []>} : vector<256x1152xbf16>, vector<1152x128xbf16>, vector<256x128xf32> -> vector<256x128xf32>
    %c0_38 = arith.constant 0 : index
    %c0_39 = arith.constant 0 : index
    %65 = vector.load %arg7[%c0_38, %c0_39] : memref<1x128xf32, #tpu.memory_space<vmem>>, vector<1x128xf32>
    %66 = vector.broadcast %65 : vector<1x128xf32> to vector<256x128xf32>
    %67 = arith.mulf %64, %66 : vector<256x128xf32>
    %c0_40 = arith.constant 0 : index
    %c0_41 = arith.constant 0 : index
    %68 = vector.load %arg8[%c0_40, %c0_41] : memref<1x128xf32, #tpu.memory_space<vmem>>, vector<1x128xf32>
    %69 = vector.broadcast %68 : vector<1x128xf32> to vector<256x128xf32>
    %70 = arith.addf %67, %69 : vector<256x128xf32>
    %cst_42 = arith.constant 0.000000e+00 : f32
    %71 = vector.broadcast %cst_42 : f32 to vector<256x128xf32>
    %72 = arith.maximumf %70, %71 : vector<256x128xf32>
    %73 = vector.shape_cast %72 : vector<256x128xf32> to vector<16x16x128xf32>
    %c0_43 = arith.constant 0 : index
    %c0_44 = arith.constant 0 : index
    %c0_45 = arith.constant 0 : index
    %c0_46 = arith.constant 0 : index
    %74 = vector.load %arg9[%c0_43, %c0_44, %c0_45, %c0_46] : memref<1x16x16x128xf32, #tpu.memory_space<vmem>>, vector<1x16x16x128xf32>
    %75 = vector.shape_cast %74 : vector<1x16x16x128xf32> to vector<16x16x128xf32>
    %76 = vector.shape_cast %73 : vector<16x16x128xf32> to vector<1x16x16x128xf32>
    tpu.vector_store %arg9[%c0_43, %c0_44, %c0_45, %c0_46], %76 {strides = array<i32>} : memref<1x16x16x128xf32, #tpu.memory_space<vmem>>, vector<1x16x16x128xf32>,
    return
  }
  func.func @transform_0(%arg0: i32) -> (i32, i32, i32, i32) {
    %c0_i32 = arith.constant 0 : i32
    %c0_i32_0 = arith.constant 0 : i32
    %c0_i32_1 = arith.constant 0 : i32
    %c0_i32_2 = arith.constant 0 : i32
    return %arg0, %c0_i32, %c0_i32_0, %c0_i32_1 : i32, i32, i32, i32
  }
  func.func @transform_1(%arg0: i32) -> (i32, i32, i32, i32) {
    %c0_i32 = arith.constant 0 : i32
    %c0_i32_0 = arith.constant 0 : i32
    %c0_i32_1 = arith.constant 0 : i32
    %c0_i32_2 = arith.constant 0 : i32
    return %arg0, %c0_i32, %c0_i32_0, %c0_i32_1 : i32, i32, i32, i32
  }
  func.func @transform_2(%arg0: i32) -> (i32, i32) {
    %c0_i32 = arith.constant 0 : i32
    %c0_i32_0 = arith.constant 0 : i32
    %c0_i32_1 = arith.constant 0 : i32
    return %c0_i32, %c0_i32_0 : i32, i32
  }
  func.func @transform_3(%arg0: i32) -> (i32, i32) {
    %c0_i32 = arith.constant 0 : i32
    %c0_i32_0 = arith.constant 0 : i32
    %c0_i32_1 = arith.constant 0 : i32
    return %c0_i32, %c0_i32_0 : i32, i32
  }
  func.func @transform_4(%arg0: i32) -> (i32, i32) {
    %c0_i32 = arith.constant 0 : i32
    %c0_i32_0 = arith.constant 0 : i32
    %c0_i32_1 = arith.constant 0 : i32
    return %c0_i32, %c0_i32_0 : i32, i32
  }
  func.func @transform_5(%arg0: i32) -> (i32, i32) {
    %c0_i32 = arith.constant 0 : i32
    %c0_i32_0 = arith.constant 0 : i32
    %c0_i32_1 = arith.constant 0 : i32
    return %c0_i32, %c0_i32_0 : i32, i32
  }
  func.func @transform_6(%arg0: i32) -> (i32, i32) {
    %c0_i32 = arith.constant 0 : i32
    %c0_i32_0 = arith.constant 0 : i32
    %c0_i32_1 = arith.constant 0 : i32
    return %c0_i32, %c0_i32_0 : i32, i32
  }
  func.func @transform_7(%arg0: i32) -> (i32, i32) {
    %c0_i32 = arith.constant 0 : i32
    %c0_i32_0 = arith.constant 0 : i32
    %c0_i32_1 = arith.constant 0 : i32
    return %c0_i32, %c0_i32_0 : i32, i32
  }
  func.func @transform_8(%arg0: i32) -> (i32, i32, i32, i32) {
    %c0_i32 = arith.constant 0 : i32
    %c0_i32_0 = arith.constant 0 : i32
    %c0_i32_1 = arith.constant 0 : i32
    %c0_i32_2 = arith.constant 0 : i32
    return %arg0, %c0_i32, %c0_i32_0, %c0_i32_1 : i32, i32, i32, i32
  }
}

</mosaic_0001>

<llo_original>
// kernel: up_forward.1
$region0: #{up_forward.1}
  #allocation0 [shape = 'u32[]', space=smem, size = 0x4, offset = 0x4, fixed_abs, tag = 'smem constant byte address 0x4 - core index']
  #allocation1 [shape = 'u32[144,128]{1,0:T(1,128)}', space=vmem, size = 0x12000, scoped, tag = 'internal scratch']
  #allocation2 [shape = 'bf16[18,18,8]{2,1,0:T(8,128)(2,1)}', space=vmem, size = 0x1b000, scoped, tag = 'scratch operand']
  #allocation3 [shape = 'bf16[18,18,128]{2,1,0:T(8,128)(2,1)}', space=vmem, size = 0x1b000, scoped, tag = 'scratch operand']
  %s0 = inlined_call_operand.vmem [shape: bf16[2,16,16,4], index: 0, kind: input, shape index: {}]
  %s1 = inlined_call_operand.vmem [shape: bf16[2,16,16,4], index: 1, kind: input, shape index: {}]
  %s2 = inlined_call_operand.vmem [shape: bf16[72,128], index: 2, kind: input, shape index: {}]
  %s3 = inlined_call_operand.vmem [shape: f32[1,128], index: 3, kind: input, shape index: {}]
  %s4 = inlined_call_operand.vmem [shape: f32[1,128], index: 4, kind: input, shape index: {}]
  %s5 = inlined_call_operand.vmem [shape: bf16[1152,128], index: 5, kind: input, shape index: {}]
  %s6 = inlined_call_operand.vmem [shape: f32[1,128], index: 6, kind: input, shape index: {}]
  %s7 = inlined_call_operand.vmem [shape: f32[1,128], index: 7, kind: input, shape index: {}]
  %s8 = inlined_call_operand.vmem [shape: f32[2,16,16,128], index: 8, kind: output, shape index: {}]
  %s9 = sld [smem:[#allocation0]]
  $region65: #{up_forward.1} parent=0
    _
  %s11 = ssub.s32 1, %s9
  %s12 = scalar_select 0, %s11, %s9
  loop: start=0, step=1, limit=4
  $region2: #{up_forward.1} parent=0 // loop_pre_header
    _
  $region3: #{up_forward.1} parent=0 // loop_header
    %s14 = sphi 0, %s18
    %p15 = scmp.ge.s32.totalorder %s14, 4
    %s24 = sphi 0, %s26
    %s27 = sphi 0, %s24
    %s28 = sphi 0, %s27
    %s44 = sphi 0, %s28
    %s50 = sphi 0, %s52
    %s53 = sphi 0, %s50
    %s54 = sphi 0, %s53
    %s70 = sphi 0, %s54
    %s74 = sphi 0, %s74
    %s76 = sphi 0, %s74
    %s77 = sphi 0, %s76
    %s91 = sphi 0, %s77
    %s95 = sphi 0, %s95
    %s97 = sphi 0, %s95
    %s98 = sphi 0, %s97
    %s112 = sphi 0, %s98
    %s116 = sphi 0, %s116
    %s118 = sphi 0, %s116
    %s119 = sphi 0, %s118
    %s133 = sphi 0, %s119
    %s137 = sphi 0, %s137
    %s139 = sphi 0, %s137
    %s140 = sphi 0, %s139
    %s154 = sphi 0, %s140
    %s158 = sphi 0, %s158
    %s160 = sphi 0, %s158
    %s161 = sphi 0, %s160
    %s175 = sphi 0, %s161
    %s179 = sphi 0, %s179
    %s181 = sphi 0, %s179
    %s182 = sphi 0, %s181
    %s196 = sphi 0, %s182
    %s202 = sphi 0, %s204
    %s205 = sphi 0, %s202
    %s206 = sphi 0, %s205
    %s222 = sphi 0, %s206
  $region4: #{up_forward.1} parent=0 // loop_header_branch
    %17 = sbr.rel (%p15) target = $region8
  $region5: #{up_forward.1} parent=0 // loop_body
    %s19 = ssub.s32 %s14, 1
    %s20 = ssub.s32 %s14, 2
    %s21 = sadd.s32 %s14, 1
    %s22 = ssub.s32 %s14, %s21
    %p23 = scmp.eq.s32.totalorder %s22, 0
    %s25 = sadd.s32 %s24, 1
    %s26 = scalar_select %p23, %s24, %s25
    %p29 = pneg %p23
    %p30 = scmp.eq.s32.totalorder %s14, 1
    %p31 = por %p29, %p30
    %p32 = scmp.ne.s32.totalorder %s24, %s27
    %p33 = scmp.eq.s32.totalorder %s14, 0
    %p34 = por %p32, %p33
    %p35 = scmp.ne.s32.totalorder %s24, %s27
    %p36 = scmp.eq.s32.totalorder %s19, 1
    %p37 = por %p35, %p36
    %p38 = scmp.ne.s32.totalorder %s27, %s28
    %p39 = scmp.eq.s32.totalorder %s19, 0
    %p40 = por %p38, %p39
    %p41 = scmp.ne.s32.totalorder %s27, %s28
    %p42 = scmp.eq.s32.totalorder %s20, 1
    %p43 = por %p41, %p42
    %p45 = scmp.ne.s32.totalorder %s28, %s44
    %p46 = scmp.eq.s32.totalorder %s20, 0
    %p47 = por %p45, %p46
    %s48 = ssub.s32 %s14, %s21
    %p49 = scmp.eq.s32.totalorder %s48, 0
    %s51 = sadd.s32 %s50, 1
    %s52 = scalar_select %p49, %s50, %s51
    %p55 = pneg %p49
    %p56 = scmp.eq.s32.totalorder %s14, 1
    %p57 = por %p55, %p56
    %p58 = scmp.ne.s32.totalorder %s50, %s53
    %p59 = scmp.eq.s32.totalorder %s14, 0
    %p60 = por %p58, %p59
    %p61 = scmp.ne.s32.totalorder %s50, %s53
    %p62 = scmp.eq.s32.totalorder %s19, 1
    %p63 = por %p61, %p62
    %p64 = scmp.ne.s32.totalorder %s53, %s54
    %p65 = scmp.eq.s32.totalorder %s19, 0
    %p66 = por %p64, %p65
    %p67 = scmp.ne.s32.totalorder %s53, %s54
    %p68 = scmp.eq.s32.totalorder %s20, 1
    %p69 = por %p67, %p68
    %p71 = scmp.ne.s32.totalorder %s54, %s70
    %p72 = scmp.eq.s32.totalorder %s20, 0
    %p73 = por %p71, %p72
    %s75 = sadd.s32 %s74, 1
    %p78 = scmp.eq.s32.totalorder %s14, 1
    %p79 = scmp.ne.s32.totalorder %s74, %s76
    %p80 = scmp.eq.s32.totalorder %s14, 0
    %p81 = por %p79, %p80
    %p82 = scmp.ne.s32.totalorder %s74, %s76
    %p83 = scmp.eq.s32.totalorder %s19, 1
    %p84 = por %p82, %p83
    %p85 = scmp.ne.s32.totalorder %s76, %s77
    %p86 = scmp.eq.s32.totalorder %s19, 0
    %p87 = por %p85, %p86
    %p88 = scmp.ne.s32.totalorder %s76, %s77
    %p89 = scmp.eq.s32.totalorder %s20, 1
    %p90 = por %p88, %p89
    %p92 = scmp.ne.s32.totalorder %s77, %s91
    %p93 = scmp.eq.s32.totalorder %s20, 0
    %p94 = por %p92, %p93
    %s96 = sadd.s32 %s95, 1
    %p99 = scmp.eq.s32.totalorder %s14, 1
    %p100 = scmp.ne.s32.totalorder %s95, %s97
    %p101 = scmp.eq.s32.totalorder %s14, 0
    %p102 = por %p100, %p101
    %p103 = scmp.ne.s32.totalorder %s95, %s97
    %p104 = scmp.eq.s32.totalorder %s19, 1
    %p105 = por %p103, %p104
    %p106 = scmp.ne.s32.totalorder %s97, %s98
    %p107 = scmp.eq.s32.totalorder %s19, 0
    %p108 = por %p106, %p107
    %p109 = scmp.ne.s32.totalorder %s97, %s98
    %p110 = scmp.eq.s32.totalorder %s20, 1
    %p111 = por %p109, %p110
    %p113 = scmp.ne.s32.totalorder %s98, %s112
    %p114 = scmp.eq.s32.totalorder %s20, 0
    %p115 = por %p113, %p114
    %s117 = sadd.s32 %s116, 1
    %p120 = scmp.eq.s32.totalorder %s14, 1
    %p121 = scmp.ne.s32.totalorder %s116, %s118
    %p122 = scmp.eq.s32.totalorder %s14, 0
    %p123 = por %p121, %p122
    %p124 = scmp.ne.s32.totalorder %s116, %s118
    %p125 = scmp.eq.s32.totalorder %s19, 1
    %p126 = por %p124, %p125
    %p127 = scmp.ne.s32.totalorder %s118, %s119
    %p128 = scmp.eq.s32.totalorder %s19, 0
    %p129 = por %p127, %p128
    %p130 = scmp.ne.s32.totalorder %s118, %s119
    %p131 = scmp.eq.s32.totalorder %s20, 1
    %p132 = por %p130, %p131
    %p134 = scmp.ne.s32.totalorder %s119, %s133
    %p135 = scmp.eq.s32.totalorder %s20, 0
    %p136 = por %p134, %p135
    %s138 = sadd.s32 %s137, 1
    %p141 = scmp.eq.s32.totalorder %s14, 1
    %p142 = scmp.ne.s32.totalorder %s137, %s139
    %p143 = scmp.eq.s32.totalorder %s14, 0
    %p144 = por %p142, %p143
    %p145 = scmp.ne.s32.totalorder %s137, %s139
    %p146 = scmp.eq.s32.totalorder %s19, 1
    %p147 = por %p145, %p146
    %p148 = scmp.ne.s32.totalorder %s139, %s140
    %p149 = scmp.eq.s32.totalorder %s19, 0
    %p150 = por %p148, %p149
    %p151 = scmp.ne.s32.totalorder %s139, %s140
    %p152 = scmp.eq.s32.totalorder %s20, 1
    %p153 = por %p151, %p152
    %p155 = scmp.ne.s32.totalorder %s140, %s154
    %p156 = scmp.eq.s32.totalorder %s20, 0
    %p157 = por %p155, %p156
    %s159 = sadd.s32 %s158, 1
    %p162 = scmp.eq.s32.totalorder %s14, 1
    %p163 = scmp.ne.s32.totalorder %s158, %s160
    %p164 = scmp.eq.s32.totalorder %s14, 0
    %p165 = por %p163, %p164
    %p166 = scmp.ne.s32.totalorder %s158, %s160
    %p167 = scmp.eq.s32.totalorder %s19, 1
    %p168 = por %p166, %p167
    %p169 = scmp.ne.s32.totalorder %s160, %s161
    %p170 = scmp.eq.s32.totalorder %s19, 0
    %p171 = por %p169, %p170
    %p172 = scmp.ne.s32.totalorder %s160, %s161
    %p173 = scmp.eq.s32.totalorder %s20, 1
    %p174 = por %p172, %p173
    %p176 = scmp.ne.s32.totalorder %s161, %s175
    %p177 = scmp.eq.s32.totalorder %s20, 0
    %p178 = por %p176, %p177
    %s180 = sadd.s32 %s179, 1
    %p183 = scmp.eq.s32.totalorder %s14, 1
    %p184 = scmp.ne.s32.totalorder %s179, %s181
    %p185 = scmp.eq.s32.totalorder %s14, 0
    %p186 = por %p184, %p185
    %p187 = scmp.ne.s32.totalorder %s179, %s181
    %p188 = scmp.eq.s32.totalorder %s19, 1
    %p189 = por %p187, %p188
    %p190 = scmp.ne.s32.totalorder %s181, %s182
    %p191 = scmp.eq.s32.totalorder %s19, 0
    %p192 = por %p190, %p191
    %p193 = scmp.ne.s32.totalorder %s181, %s182
    %p194 = scmp.eq.s32.totalorder %s20, 1
    %p195 = por %p193, %p194
    %p197 = scmp.ne.s32.totalorder %s182, %s196
    %p198 = scmp.eq.s32.totalorder %s20, 0
    %p199 = por %p197, %p198
    %s200 = ssub.s32 %s14, %s21
    %p201 = scmp.eq.s32.totalorder %s200, 0
    %s203 = sadd.s32 %s202, 1
    %s204 = scalar_select %p201, %s202, %s203
    %p207 = pneg %p201
    %p208 = scmp.eq.s32.totalorder %s14, 1
    %p209 = por %p207, %p208
    %p210 = scmp.ne.s32.totalorder %s202, %s205
    %p211 = scmp.eq.s32.totalorder %s14, 0
    %p212 = por %p210, %p211
    %p213 = scmp.ne.s32.totalorder %s202, %s205
    %p214 = scmp.eq.s32.totalorder %s19, 1
    %p215 = por %p213, %p214
    %p216 = scmp.ne.s32.totalorder %s205, %s206
    %p217 = scmp.eq.s32.totalorder %s19, 0
    %p218 = por %p216, %p217
    %p219 = scmp.ne.s32.totalorder %s205, %s206
    %p220 = scmp.eq.s32.totalorder %s20, 1
    %p221 = por %p219, %p220
    %p223 = scmp.ne.s32.totalorder %s206, %s222
    %p224 = scmp.eq.s32.totalorder %s20, 0
    %p225 = por %p223, %p224
    %p226 = scmp.le.s32.totalorder 1, %s14
    %p227 = scmp.lt.s32.totalorder %s14, 3
    %p228 = pnand %p226, %p227
    %p229 = pneg %p228
    // Predicated region
    $region9: #{up_forward.1} parent=5 // pred_check
      _
    $region10: #{up_forward.1} parent=5 // pred_check_branch
      %231 = sbr.rel (%p228) target = $region12
    $region11: #{up_forward.1} parent=5 // pred_region
      %s232 = ssub.s32 %s14, 1
      // Predicated region
      $region13: #{up_forward.1} parent=11 // pred_check
        %p233 = pneg %p87
      $region14: #{up_forward.1} parent=11 // pred_check_branch
        %235 = sbr.rel (%p233) target = $region16
      $region15: #{up_forward.1} parent=11 // pred_region
        _
      $region16: #{up_forward.1} parent=11 // pred_fallthru
        _
      // Predicated region
      $region17: #{up_forward.1} parent=11 // pred_check
        %p236 = pneg %p108
      $region18: #{up_forward.1} parent=11 // pred_check_branch
        %238 = sbr.rel (%p236) target = $region20
      $region19: #{up_forward.1} parent=11 // pred_region
        _
      $region20: #{up_forward.1} parent=11 // pred_fallthru
        _
      // Predicated region
      $region21: #{up_forward.1} parent=11 // pred_check
        %p239 = pneg %p129
      $region22: #{up_forward.1} parent=11 // pred_check_branch
        %241 = sbr.rel (%p239) target = $region24
      $region23: #{up_forward.1} parent=11 // pred_region
        _
      $region24: #{up_forward.1} parent=11 // pred_fallthru
        _
      // Predicated region
      $region25: #{up_forward.1} parent=11 // pred_check
        %p242 = pneg %p150
      $region26: #{up_forward.1} parent=11 // pred_check_branch
        %244 = sbr.rel (%p242) target = $region28
      $region27: #{up_forward.1} parent=11 // pred_region
        _
      $region28: #{up_forward.1} parent=11 // pred_fallthru
        _
      // Predicated region
      $region29: #{up_forward.1} parent=11 // pred_check
        %p245 = pneg %p171
      $region30: #{up_forward.1} parent=11 // pred_check_branch
        %247 = sbr.rel (%p245) target = $region32
      $region31: #{up_forward.1} parent=11 // pred_region
        _
      $region32: #{up_forward.1} parent=11 // pred_fallthru
        _
      // Predicated region
      $region33: #{up_forward.1} parent=11 // pred_check
        %p248 = pneg %p192
      $region34: #{up_forward.1} parent=11 // pred_check_branch
        %250 = sbr.rel (%p248) target = $region36
      $region35: #{up_forward.1} parent=11 // pred_region
        _
      $region36: #{up_forward.1} parent=11 // pred_fallthru
        _
    $region12: #{up_forward.1} parent=5 // pred_fallthru
      _
    %p251 = scmp.lt.s32.totalorder %s14, 2
    // Predicated region
    $region37: #{up_forward.1} parent=5 // pred_check
      %p252 = pneg %p251
    $region38: #{up_forward.1} parent=5 // pred_check_branch
      %254 = sbr.rel (%p252) target = $region40
    $region39: #{up_forward.1} parent=5 // pred_region
      // Predicated region
      $region41: #{up_forward.1} parent=39 // pred_check
        %p255 = pneg %p34
      $region42: #{up_forward.1} parent=39 // pred_check_branch
        %257 = sbr.rel (%p255) target = $region44
      $region43: #{up_forward.1} parent=39 // pred_region
        %p258 = scmp.lt.s32.totalorder %s14, 1
        %s259 = scalar_select %p258, %s14, 1
        %s260 = smul.addr %s259, 32
        %s261 = smul.addr %s260, 4
        %s262 = scalar_lea.vmem %s0, %s261
      $region44: #{up_forward.1} parent=39 // pred_fallthru
        _
      // Predicated region
      $region45: #{up_forward.1} parent=39 // pred_check
        %p263 = pneg %p60
      $region46: #{up_forward.1} parent=39 // pred_check_branch
        %265 = sbr.rel (%p263) target = $region48
      $region47: #{up_forward.1} parent=39 // pred_region
        %p266 = scmp.lt.s32.totalorder %s14, 1
        %s267 = scalar_select %p266, %s14, 1
        %s268 = smul.addr %s267, 32
        %s269 = smul.addr %s268, 4
        %s270 = scalar_lea.vmem %s1, %s269
      $region48: #{up_forward.1} parent=39 // pred_fallthru
        _
    $region40: #{up_forward.1} parent=5 // pred_fallthru
      _
    %p271 = scmp.le.s32.totalorder 1, %s14
    %p272 = scmp.lt.s32.totalorder %s14, 3
    %p273 = pnand %p271, %p272
    %p274 = pneg %p273
    // Predicated region
    $region49: #{up_forward.1} parent=5 // pred_check
      _
    $region50: #{up_forward.1} parent=5 // pred_check_branch
      %276 = sbr.rel (%p273) target = $region52
    $region51: #{up_forward.1} parent=5 // pred_region
      %s277 = ssub.s32 %s14, 1
      %p278 = scmp.lt.s32.totalorder %s19, 1
      %s279 = scalar_select %p278, %s19, 1
      %s280 = smul.addr %s279, 32
      %s281 = smul.addr %s280, 4
      %s282 = scalar_lea.vmem %s0, %s281
      %p283 = pneg %p40
      %p284 = pneg %p37
      %p285 = scmp.lt.s32.totalorder %s19, 1
      %s286 = scalar_select %p285, %s19, 1
      %s287 = smul.addr %s286, 32
      %s288 = smul.addr %s287, 4
      %s289 = scalar_lea.vmem %s1, %s288
      %p290 = pneg %p66
      %p291 = pneg %p63
      %p292 = pneg %p87
      %p293 = pneg %p84
      %p294 = pneg %p108
      %p295 = pneg %p105
      %p296 = pneg %p129
      %p297 = pneg %p126
      %p298 = pneg %p150
      %p299 = pneg %p147
      %p300 = pneg %p171
      %p301 = pneg %p168
      %p302 = pneg %p192
      %p303 = pneg %p189
      %p304 = pneg %p218
      %p305 = pneg %p215
      %p306 = scmp.lt.s32.totalorder %s19, 1
      %s307 = scalar_select %p306, %s19, 1
      %s308 = smul.addr %s307, 32
      %s309 = smul.addr %s308, 8
      %s310 = scalar_lea.vmem %s8, %s309
      %p311 = scmp.lt.s32.totalorder %s19, 1
      %s312 = scalar_select %p311, %s19, 1
      %s313 = smul.addr %s312, 32
      %s314 = smul.addr %s313, 4
      %s315 = scalar_lea.vmem %s0, %s314
      %p316 = scmp.lt.s32.totalorder %s19, 1
      %s317 = scalar_select %p316, %s19, 1
      %s318 = smul.addr %s317, 32
      %s319 = smul.addr %s318, 4
      %s320 = scalar_lea.vmem %s1, %s319
      %p321 = scmp.lt.s32.totalorder %s19, 1
      %s322 = scalar_select %p321, %s19, 1
      %s323 = smul.addr %s322, 32
      %s324 = smul.addr %s323, 8
      %s325 = scalar_lea.vmem %s8, %s324
      %vm327 = vcmask 60416
      %328 = vst.msk [vmem:[#allocation2] sm:$0xf] %vm327, 0
      %329 = vst.msk [vmem:[#allocation2 + $0x4] sm:$0xf] %vm327, 0
      %vm330 = vcmask 57344
      %331 = vst.msk [vmem:[#allocation2 + $0x8] sm:$0x1] %vm330, 0
      %332 = vst.msk [vmem:[#allocation2 + $0xc] sm:$0xf] %vm327, 0
      %333 = vst.msk [vmem:[#allocation2 + $0x10] sm:$0xf] %vm327, 0
      %334 = vst.msk [vmem:[#allocation2 + $0x14] sm:$0x1] %vm330, 0
      %335 = vst.msk [vmem:[#allocation2 + $0x18] sm:$0xf] %vm327, 0
      %336 = vst.msk [vmem:[#allocation2 + $0x1c] sm:$0xf] %vm327, 0
      %337 = vst.msk [vmem:[#allocation2 + $0x20] sm:$0x1] %vm330, 0
      %338 = vst.msk [vmem:[#allocation2 + $0x24] sm:$0xf] %vm327, 0
      %339 = vst.msk [vmem:[#allocation2 + $0x28] sm:$0xf] %vm327, 0
      %340 = vst.msk [vmem:[#allocation2 + $0x2c] sm:$0x1] %vm330, 0
      %341 = vst.msk [vmem:[#allocation2 + $0x30] sm:$0xf] %vm327, 0
      %342 = vst.msk [vmem:[#allocation2 + $0x34] sm:$0xf] %vm327, 0
      %343 = vst.msk [vmem:[#allocation2 + $0x38] sm:$0x1] %vm330, 0
      %344 = vst.msk [vmem:[#allocation2 + $0x3c] sm:$0xf] %vm327, 0
      %345 = vst.msk [vmem:[#allocation2 + $0x40] sm:$0xf] %vm327, 0
      %346 = vst.msk [vmem:[#allocation2 + $0x44] sm:$0x1] %vm330, 0
      %347 = vst.msk [vmem:[#allocation2 + $0x48] sm:$0xf] %vm327, 0
      %348 = vst.msk [vmem:[#allocation2 + $0x4c] sm:$0xf] %vm327, 0
      %349 = vst.msk [vmem:[#allocation2 + $0x50] sm:$0x1] %vm330, 0
      %350 = vst.msk [vmem:[#allocation2 + $0x54] sm:$0xf] %vm327, 0
      %351 = vst.msk [vmem:[#allocation2 + $0x58] sm:$0xf] %vm327, 0
      %352 = vst.msk [vmem:[#allocation2 + $0x5c] sm:$0x1] %vm330, 0
      %353 = vst.msk [vmem:[#allocation2 + $0x60] sm:$0xf] %vm327, 0
      %354 = vst.msk [vmem:[#allocation2 + $0x64] sm:$0xf] %vm327, 0
      %355 = vst.msk [vmem:[#allocation2 + $0x68] sm:$0x1] %vm330, 0
      %356 = vst.msk [vmem:[#allocation2 + $0x6c] sm:$0xf] %vm327, 0
      %357 = vst.msk [vmem:[#allocation2 + $0x70] sm:$0xf] %vm327, 0
      %358 = vst.msk [vmem:[#allocation2 + $0x74] sm:$0x1] %vm330, 0
      %359 = vst.msk [vmem:[#allocation2 + $0x78] sm:$0xf] %vm327, 0
      %360 = vst.msk [vmem:[#allocation2 + $0x7c] sm:$0xf] %vm327, 0
      %361 = vst.msk [vmem:[#allocation2 + $0x80] sm:$0x1] %vm330, 0
      %362 = vst.msk [vmem:[#allocation2 + $0x84] sm:$0xf] %vm327, 0
      %363 = vst.msk [vmem:[#allocation2 + $0x88] sm:$0xf] %vm327, 0
      %364 = vst.msk [vmem:[#allocation2 + $0x8c] sm:$0x1] %vm330, 0
      %365 = vst.msk [vmem:[#allocation2 + $0x90] sm:$0xf] %vm327, 0
      %366 = vst.msk [vmem:[#allocation2 + $0x94] sm:$0xf] %vm327, 0
      %367 = vst.msk [vmem:[#allocation2 + $0x98] sm:$0x1] %vm330, 0
      %368 = vst.msk [vmem:[#allocation2 + $0x9c] sm:$0xf] %vm327, 0
      %369 = vst.msk [vmem:[#allocation2 + $0xa0] sm:$0xf] %vm327, 0
      %370 = vst.msk [vmem:[#allocation2 + $0xa4] sm:$0x1] %vm330, 0
      %371 = vst.msk [vmem:[#allocation2 + $0xa8] sm:$0xf] %vm327, 0
      %372 = vst.msk [vmem:[#allocation2 + $0xac] sm:$0xf] %vm327, 0
      %373 = vst.msk [vmem:[#allocation2 + $0xb0] sm:$0x1] %vm330, 0
      %374 = vst.msk [vmem:[#allocation2 + $0xb4] sm:$0xf] %vm327, 0
      %375 = vst.msk [vmem:[#allocation2 + $0xb8] sm:$0xf] %vm327, 0
      %376 = vst.msk [vmem:[#allocation2 + $0xbc] sm:$0x1] %vm330, 0
      %377 = vst.msk [vmem:[#allocation2 + $0xc0] sm:$0xf] %vm327, 0
      %378 = vst.msk [vmem:[#allocation2 + $0xc4] sm:$0xf] %vm327, 0
      %379 = vst.msk [vmem:[#allocation2 + $0xc8] sm:$0x1] %vm330, 0
      %380 = vst.msk [vmem:[#allocation2 + $0xcc] sm:$0xf] %vm327, 0
      %381 = vst.msk [vmem:[#allocation2 + $0xd0] sm:$0xf] %vm327, 0
      %382 = vst.msk [vmem:[#allocation2 + $0xd4] sm:$0x1] %vm330, 0
      %v383 = vld [vmem:[%s315] sm:$0xf]
      %v384 = vld [vmem:[%s315 + $0x4] sm:$0xf]
      %v385 = vld [vmem:[%s315 + $0x8] sm:$0xf]
      %v386 = vld [vmem:[%s315 + $0xc] sm:$0xf]
      %v387 = vld [vmem:[%s315 + $0x10] sm:$0xf]
      %v388 = vld [vmem:[%s315 + $0x14] sm:$0xf]
      %v389 = vld [vmem:[%s315 + $0x18] sm:$0xf]
      %v390 = vld [vmem:[%s315 + $0x1c] sm:$0xf]
      %v391 = vld [vmem:[%s315 + $0x20] sm:$0xf]
      %v392 = vld [vmem:[%s315 + $0x24] sm:$0xf]
      %v393 = vld [vmem:[%s315 + $0x28] sm:$0xf]
      %v394 = vld [vmem:[%s315 + $0x2c] sm:$0xf]
      %v395 = vld [vmem:[%s315 + $0x30] sm:$0xf]
      %v396 = vld [vmem:[%s315 + $0x34] sm:$0xf]
      %v397 = vld [vmem:[%s315 + $0x38] sm:$0xf]
      %v398 = vld [vmem:[%s315 + $0x3c] sm:$0xf]
      %v399 = vld [vmem:[%s315 + $0x40] sm:$0xf]
      %v400 = vld [vmem:[%s315 + $0x44] sm:$0xf]
      %v401 = vld [vmem:[%s315 + $0x48] sm:$0xf]
      %v402 = vld [vmem:[%s315 + $0x4c] sm:$0xf]
      %v403 = vld [vmem:[%s315 + $0x50] sm:$0xf]
      %v404 = vld [vmem:[%s315 + $0x54] sm:$0xf]
      %v405 = vld [vmem:[%s315 + $0x58] sm:$0xf]
      %v406 = vld [vmem:[%s315 + $0x5c] sm:$0xf]
      %v407 = vld [vmem:[%s315 + $0x60] sm:$0xf]
      %v408 = vld [vmem:[%s315 + $0x64] sm:$0xf]
      %v409 = vld [vmem:[%s315 + $0x68] sm:$0xf]
      %v410 = vld [vmem:[%s315 + $0x6c] sm:$0xf]
      %v411 = vld [vmem:[%s315 + $0x70] sm:$0xf]
      %v412 = vld [vmem:[%s315 + $0x74] sm:$0xf]
      %v413 = vld [vmem:[%s315 + $0x78] sm:$0xf]
      %v414 = vld [vmem:[%s315 + $0x7c] sm:$0xf]
      %vm415 = vsmask.f32 256
      %vm416 = vsmask.f32 4368
      %vm417 = vmor %vm415, %vm416
      %v419 = vshrl.u32 %v383, 16
      %v421 = vrot.slane %v419, 7
      %v422 = vshll.u32 %v383, 16
      %v424 = vor.u32 %v421, %v422
      %v425 = vrot.slane %v421, 4
      %v427 = vshrl.u32 %v384, 16
      %v429 = vrot.slane %v427, 7
      %v430 = vshll.u32 %v384, 16
      %v432 = vor.u32 %v429, %v430
      %v433 = vsel %vm417, %v425, %v432
      %v434 = vrot.slane %v429, 4
      %v436 = vshrl.u32 %v385, 16
      %v438 = vrot.slane %v436, 7
      %v439 = vshll.u32 %v385, 16
      %v441 = vor.u32 %v438, %v439
      %v442 = vrot.slane %v438, 4
      %v444 = vshrl.u32 %v386, 16
      %v446 = vrot.slane %v444, 7
      %v447 = vshll.u32 %v386, 16
      %v449 = vor.u32 %v446, %v447
      %v450 = vsel %vm417, %v442, %v449
      %v451 = vrot.slane %v446, 4
      %v453 = vshrl.u32 %v387, 16
      %v455 = vrot.slane %v453, 7
      %v456 = vshll.u32 %v387, 16
      %v458 = vor.u32 %v455, %v456
      %v459 = vrot.slane %v455, 4
      %v461 = vshrl.u32 %v388, 16
      %v463 = vrot.slane %v461, 7
      %v464 = vshll.u32 %v388, 16
      %v466 = vor.u32 %v463, %v464
      %v467 = vsel %vm417, %v459, %v466
      %v468 = vrot.slane %v463, 4
      %v470 = vshrl.u32 %v389, 16
      %v472 = vrot.slane %v470, 7
      %v473 = vshll.u32 %v389, 16
      %v475 = vor.u32 %v472, %v473
      %v476 = vrot.slane %v472, 4
      %v478 = vshrl.u32 %v390, 16
      %v480 = vrot.slane %v478, 7
      %v481 = vshll.u32 %v390, 16
      %v483 = vor.u32 %v480, %v481
      %v484 = vsel %vm417, %v476, %v483
      %v485 = vrot.slane %v480, 4
      %v487 = vshrl.u32 %v391, 16
      %v489 = vrot.slane %v487, 7
      %v490 = vshll.u32 %v391, 16
      %v492 = vor.u32 %v489, %v490
      %v493 = vrot.slane %v489, 4
      %v495 = vshrl.u32 %v392, 16
      %v497 = vrot.slane %v495, 7
      %v498 = vshll.u32 %v392, 16
      %v500 = vor.u32 %v497, %v498
      %v501 = vsel %vm417, %v493, %v500
      %v502 = vrot.slane %v497, 4
      %v504 = vshrl.u32 %v393, 16
      %v506 = vrot.slane %v504, 7
      %v507 = vshll.u32 %v393, 16
      %v509 = vor.u32 %v506, %v507
      %v510 = vrot.slane %v506, 4
      %v512 = vshrl.u32 %v394, 16
      %v514 = vrot.slane %v512, 7
      %v515 = vshll.u32 %v394, 16
      %v517 = vor.u32 %v514, %v515
      %v518 = vsel %vm417, %v510, %v517
      %v519 = vrot.slane %v514, 4
      %v521 = vshrl.u32 %v395, 16
      %v523 = vrot.slane %v521, 7
      %v524 = vshll.u32 %v395, 16
      %v526 = vor.u32 %v523, %v524
      %v527 = vrot.slane %v523, 4
      %v529 = vshrl.u32 %v396, 16
      %v531 = vrot.slane %v529, 7
      %v532 = vshll.u32 %v396, 16
      %v534 = vor.u32 %v531, %v532
      %v535 = vsel %vm417, %v527, %v534
      %v536 = vrot.slane %v531, 4
      %v538 = vshrl.u32 %v397, 16
      %v540 = vrot.slane %v538, 7
      %v541 = vshll.u32 %v397, 16
      %v543 = vor.u32 %v540, %v541
      %v544 = vrot.slane %v540, 4
      %v546 = vshrl.u32 %v398, 16
      %v548 = vrot.slane %v546, 7
      %v549 = vshll.u32 %v398, 16
      %v551 = vor.u32 %v548, %v549
      %v552 = vsel %vm417, %v544, %v551
      %v553 = vrot.slane %v548, 4
      %v555 = vshrl.u32 %v399, 16
      %v557 = vrot.slane %v555, 7
      %v558 = vshll.u32 %v399, 16
      %v560 = vor.u32 %v557, %v558
      %v561 = vrot.slane %v557, 4
      %v563 = vshrl.u32 %v400, 16
      %v565 = vrot.slane %v563, 7
      %v566 = vshll.u32 %v400, 16
      %v568 = vor.u32 %v565, %v566
      %v569 = vsel %vm417, %v561, %v568
      %v570 = vrot.slane %v565, 4
      %v572 = vshrl.u32 %v401, 16
      %v574 = vrot.slane %v572, 7
      %v575 = vshll.u32 %v401, 16
      %v577 = vor.u32 %v574, %v575
      %v578 = vrot.slane %v574, 4
      %v580 = vshrl.u32 %v402, 16
      %v582 = vrot.slane %v580, 7
      %v583 = vshll.u32 %v402, 16
      %v585 = vor.u32 %v582, %v583
      %v586 = vsel %vm417, %v578, %v585
      %v587 = vrot.slane %v582, 4
      %v589 = vshrl.u32 %v403, 16
      %v591 = vrot.slane %v589, 7
      %v592 = vshll.u32 %v403, 16
      %v594 = vor.u32 %v591, %v592
      %v595 = vrot.slane %v591, 4
      %v597 = vshrl.u32 %v404, 16
      %v599 = vrot.slane %v597, 7
      %v600 = vshll.u32 %v404, 16
      %v602 = vor.u32 %v599, %v600
      %v603 = vsel %vm417, %v595, %v602
      %v604 = vrot.slane %v599, 4
      %v606 = vshrl.u32 %v405, 16
      %v608 = vrot.slane %v606, 7
      %v609 = vshll.u32 %v405, 16
      %v611 = vor.u32 %v608, %v609
      %v612 = vrot.slane %v608, 4
      %v614 = vshrl.u32 %v406, 16
      %v616 = vrot.slane %v614, 7
      %v617 = vshll.u32 %v406, 16
      %v619 = vor.u32 %v616, %v617
      %v620 = vsel %vm417, %v612, %v619
      %v621 = vrot.slane %v616, 4
      %v623 = vshrl.u32 %v407, 16
      %v625 = vrot.slane %v623, 7
      %v626 = vshll.u32 %v407, 16
      %v628 = vor.u32 %v625, %v626
      %v629 = vrot.slane %v625, 4
      %v631 = vshrl.u32 %v408, 16
      %v633 = vrot.slane %v631, 7
      %v634 = vshll.u32 %v408, 16
      %v636 = vor.u32 %v633, %v634
      %v637 = vsel %vm417, %v629, %v636
      %v638 = vrot.slane %v633, 4
      %v640 = vshrl.u32 %v409, 16
      %v642 = vrot.slane %v640, 7
      %v643 = vshll.u32 %v409, 16
      %v645 = vor.u32 %v642, %v643
      %v646 = vrot.slane %v642, 4
      %v648 = vshrl.u32 %v410, 16
      %v650 = vrot.slane %v648, 7
      %v651 = vshll.u32 %v410, 16
      %v653 = vor.u32 %v650, %v651
      %v654 = vsel %vm417, %v646, %v653
      %v655 = vrot.slane %v650, 4
      %v657 = vshrl.u32 %v411, 16
      %v659 = vrot.slane %v657, 7
      %v660 = vshll.u32 %v411, 16
      %v662 = vor.u32 %v659, %v660
      %v663 = vrot.slane %v659, 4
      %v665 = vshrl.u32 %v412, 16
      %v667 = vrot.slane %v665, 7
      %v668 = vshll.u32 %v412, 16
      %v670 = vor.u32 %v667, %v668
      %v671 = vsel %vm417, %v663, %v670
      %v672 = vrot.slane %v667, 4
      %v674 = vshrl.u32 %v413, 16
      %v676 = vrot.slane %v674, 7
      %v677 = vshll.u32 %v413, 16
      %v679 = vor.u32 %v676, %v677
      %v680 = vrot.slane %v676, 4
      %v682 = vshrl.u32 %v414, 16
      %v684 = vrot.slane %v682, 7
      %v685 = vshll.u32 %v414, 16
      %v687 = vor.u32 %v684, %v685
      %v688 = vsel %vm417, %v680, %v687
      %v689 = vrot.slane %v684, 4
      %s738 = scalar_lea.vmem [#allocation2], 12
      %vm739 = vcmask 27648
      %vm740 = vsmask.f32 7938
      %vm741 = vmand %vm739, %vm740
      %v742 = vld [vmem:[%s738] sm:$0xf]
      %v743 = vsel %vm741, %v424, %v742
      %744 = vst [vmem:[%s738] sm:$0xf] %v743
      %vm745 = vcmask 27648
      %746 = vst.msk [vmem:[%s738 + $0x4] sm:$0xf] %vm745, %v433
      %vm747 = vcmask 24576
      %vm748 = vmand %vm747, %vm415
      %v749 = vld [vmem:[%s738 + $0x8] sm:$0x1]
      %v750 = vsel %vm748, %v434, %v749
      %751 = vst [vmem:[%s738 + $0x8] sm:$0x1] %v750
      %v752 = vld [vmem:[%s738 + $0xc] sm:$0xf]
      %v753 = vsel %vm741, %v441, %v752
      %754 = vst [vmem:[%s738 + $0xc] sm:$0xf] %v753
      %755 = vst.msk [vmem:[%s738 + $0x10] sm:$0xf] %vm745, %v450
      %v756 = vld [vmem:[%s738 + $0x14] sm:$0x1]
      %v757 = vsel %vm748, %v451, %v756
      %758 = vst [vmem:[%s738 + $0x14] sm:$0x1] %v757
      %v759 = vld [vmem:[%s738 + $0x18] sm:$0xf]
      %v760 = vsel %vm741, %v458, %v759
      %761 = vst [vmem:[%s738 + $0x18] sm:$0xf] %v760
      %762 = vst.msk [vmem:[%s738 + $0x1c] sm:$0xf] %vm745, %v467
      %v763 = vld [vmem:[%s738 + $0x20] sm:$0x1]
      %v764 = vsel %vm748, %v468, %v763
      %765 = vst [vmem:[%s738 + $0x20] sm:$0x1] %v764
      %v766 = vld [vmem:[%s738 + $0x24] sm:$0xf]
      %v767 = vsel %vm741, %v475, %v766
      %768 = vst [vmem:[%s738 + $0x24] sm:$0xf] %v767
      %769 = vst.msk [vmem:[%s738 + $0x28] sm:$0xf] %vm745, %v484
      %v770 = vld [vmem:[%s738 + $0x2c] sm:$0x1]
      %v771 = vsel %vm748, %v485, %v770
      %772 = vst [vmem:[%s738 + $0x2c] sm:$0x1] %v771
      %v773 = vld [vmem:[%s738 + $0x30] sm:$0xf]
      %v774 = vsel %vm741, %v492, %v773
      %775 = vst [vmem:[%s738 + $0x30] sm:$0xf] %v774
      %776 = vst.msk [vmem:[%s738 + $0x34] sm:$0xf] %vm745, %v501
      %v777 = vld [vmem:[%s738 + $0x38] sm:$0x1]
      %v778 = vsel %vm748, %v502, %v777
      %779 = vst [vmem:[%s738 + $0x38] sm:$0x1] %v778
      %v780 = vld [vmem:[%s738 + $0x3c] sm:$0xf]
      %v781 = vsel %vm741, %v509, %v780
      %782 = vst [vmem:[%s738 + $0x3c] sm:$0xf] %v781
      %783 = vst.msk [vmem:[%s738 + $0x40] sm:$0xf] %vm745, %v518
      %v784 = vld [vmem:[%s738 + $0x44] sm:$0x1]
      %v785 = vsel %vm748, %v519, %v784
      %786 = vst [vmem:[%s738 + $0x44] sm:$0x1] %v785
      %v787 = vld [vmem:[%s738 + $0x48] sm:$0xf]
      %v788 = vsel %vm741, %v526, %v787
      %789 = vst [vmem:[%s738 + $0x48] sm:$0xf] %v788
      %790 = vst.msk [vmem:[%s738 + $0x4c] sm:$0xf] %vm745, %v535
      %v791 = vld [vmem:[%s738 + $0x50] sm:$0x1]
      %v792 = vsel %vm748, %v536, %v791
      %793 = vst [vmem:[%s738 + $0x50] sm:$0x1] %v792
      %v794 = vld [vmem:[%s738 + $0x54] sm:$0xf]
      %v795 = vsel %vm741, %v543, %v794
      %796 = vst [vmem:[%s738 + $0x54] sm:$0xf] %v795
      %797 = vst.msk [vmem:[%s738 + $0x58] sm:$0xf] %vm745, %v552
      %v798 = vld [vmem:[%s738 + $0x5c] sm:$0x1]
      %v799 = vsel %vm748, %v553, %v798
      %800 = vst [vmem:[%s738 + $0x5c] sm:$0x1] %v799
      %v801 = vld [vmem:[%s738 + $0x60] sm:$0xf]
      %v802 = vsel %vm741, %v560, %v801
      %803 = vst [vmem:[%s738 + $0x60] sm:$0xf] %v802
      %804 = vst.msk [vmem:[%s738 + $0x64] sm:$0xf] %vm745, %v569
      %v805 = vld [vmem:[%s738 + $0x68] sm:$0x1]
      %v806 = vsel %vm748, %v570, %v805
      %807 = vst [vmem:[%s738 + $0x68] sm:$0x1] %v806
      %v808 = vld [vmem:[%s738 + $0x6c] sm:$0xf]
      %v809 = vsel %vm741, %v577, %v808
      %810 = vst [vmem:[%s738 + $0x6c] sm:$0xf] %v809
      %811 = vst.msk [vmem:[%s738 + $0x70] sm:$0xf] %vm745, %v586
      %v812 = vld [vmem:[%s738 + $0x74] sm:$0x1]
      %v813 = vsel %vm748, %v587, %v812
      %814 = vst [vmem:[%s738 + $0x74] sm:$0x1] %v813
      %v815 = vld [vmem:[%s738 + $0x78] sm:$0xf]
      %v816 = vsel %vm741, %v594, %v815
      %817 = vst [vmem:[%s738 + $0x78] sm:$0xf] %v816
      %818 = vst.msk [vmem:[%s738 + $0x7c] sm:$0xf] %vm745, %v603
      %v819 = vld [vmem:[%s738 + $0x80] sm:$0x1]
      %v820 = vsel %vm748, %v604, %v819
      %821 = vst [vmem:[%s738 + $0x80] sm:$0x1] %v820
      %v822 = vld [vmem:[%s738 + $0x84] sm:$0xf]
      %v823 = vsel %vm741, %v611, %v822
      %824 = vst [vmem:[%s738 + $0x84] sm:$0xf] %v823
      %825 = vst.msk [vmem:[%s738 + $0x88] sm:$0xf] %vm745, %v620
      %v826 = vld [vmem:[%s738 + $0x8c] sm:$0x1]
      %v827 = vsel %vm748, %v621, %v826
      %828 = vst [vmem:[%s738 + $0x8c] sm:$0x1] %v827
      %v829 = vld [vmem:[%s738 + $0x90] sm:$0xf]
      %v830 = vsel %vm741, %v628, %v829
      %831 = vst [vmem:[%s738 + $0x90] sm:$0xf] %v830
      %832 = vst.msk [vmem:[%s738 + $0x94] sm:$0xf] %vm745, %v637
      %v833 = vld [vmem:[%s738 + $0x98] sm:$0x1]
      %v834 = vsel %vm748, %v638, %v833
      %835 = vst [vmem:[%s738 + $0x98] sm:$0x1] %v834
      %v836 = vld [vmem:[%s738 + $0x9c] sm:$0xf]
      %v837 = vsel %vm741, %v645, %v836
      %838 = vst [vmem:[%s738 + $0x9c] sm:$0xf] %v837
      %839 = vst.msk [vmem:[%s738 + $0xa0] sm:$0xf] %vm745, %v654
      %v840 = vld [vmem:[%s738 + $0xa4] sm:$0x1]
      %v841 = vsel %vm748, %v655, %v840
      %842 = vst [vmem:[%s738 + $0xa4] sm:$0x1] %v841
      %v843 = vld [vmem:[%s738 + $0xa8] sm:$0xf]
      %v844 = vsel %vm741, %v662, %v843
      %845 = vst [vmem:[%s738 + $0xa8] sm:$0xf] %v844
      %846 = vst.msk [vmem:[%s738 + $0xac] sm:$0xf] %vm745, %v671
      %v847 = vld [vmem:[%s738 + $0xb0] sm:$0x1]
      %v848 = vsel %vm748, %v672, %v847
      %849 = vst [vmem:[%s738 + $0xb0] sm:$0x1] %v848
      %v850 = vld [vmem:[%s738 + $0xb4] sm:$0xf]
      %v851 = vsel %vm741, %v679, %v850
      %852 = vst [vmem:[%s738 + $0xb4] sm:$0xf] %v851
      %853 = vst.msk [vmem:[%s738 + $0xb8] sm:$0xf] %vm745, %v688
      %v854 = vld [vmem:[%s738 + $0xbc] sm:$0x1]
      %v855 = vsel %vm748, %v689, %v854
      %856 = vst [vmem:[%s738 + $0xbc] sm:$0x1] %v855
      %v857 = vld [vmem:[%s320] sm:$0xf]
      %v858 = vld [vmem:[%s320 + $0x4] sm:$0xf]
      %v859 = vld [vmem:[%s320 + $0x8] sm:$0xf]
      %v860 = vld [vmem:[%s320 + $0xc] sm:$0xf]
      %v861 = vld [vmem:[%s320 + $0x10] sm:$0xf]
      %v862 = vld [vmem:[%s320 + $0x14] sm:$0xf]
      %v863 = vld [vmem:[%s320 + $0x18] sm:$0xf]
      %v864 = vld [vmem:[%s320 + $0x1c] sm:$0xf]
      %v865 = vld [vmem:[%s320 + $0x20] sm:$0xf]
      %v866 = vld [vmem:[%s320 + $0x24] sm:$0xf]
      %v867 = vld [vmem:[%s320 + $0x28] sm:$0xf]
      %v868 = vld [vmem:[%s320 + $0x2c] sm:$0xf]
      %v869 = vld [vmem:[%s320 + $0x30] sm:$0xf]
      %v870 = vld [vmem:[%s320 + $0x34] sm:$0xf]
      %v871 = vld [vmem:[%s320 + $0x38] sm:$0xf]
      %v872 = vld [vmem:[%s320 + $0x3c] sm:$0xf]
      %v873 = vld [vmem:[%s320 + $0x40] sm:$0xf]
      %v874 = vld [vmem:[%s320 + $0x44] sm:$0xf]
      %v875 = vld [vmem:[%s320 + $0x48] sm:$0xf]
      %v876 = vld [vmem:[%s320 + $0x4c] sm:$0xf]
      %v877 = vld [vmem:[%s320 + $0x50] sm:$0xf]
      %v878 = vld [vmem:[%s320 + $0x54] sm:$0xf]
      %v879 = vld [vmem:[%s320 + $0x58] sm:$0xf]
      %v880 = vld [vmem:[%s320 + $0x5c] sm:$0xf]
      %v881 = vld [vmem:[%s320 + $0x60] sm:$0xf]
      %v882 = vld [vmem:[%s320 + $0x64] sm:$0xf]
      %v883 = vld [vmem:[%s320 + $0x68] sm:$0xf]
      %v884 = vld [vmem:[%s320 + $0x6c] sm:$0xf]
      %v885 = vld [vmem:[%s320 + $0x70] sm:$0xf]
      %v886 = vld [vmem:[%s320 + $0x74] sm:$0xf]
      %v887 = vld [vmem:[%s320 + $0x78] sm:$0xf]
      %v888 = vld [vmem:[%s320 + $0x7c] sm:$0xf]
      %v890 = vshrl.u32 %v857, 16
      %v892 = vrot.slane %v890, 7
      %v893 = vshll.u32 %v857, 16
      %v895 = vor.u32 %v892, %v893
      %v896 = vrot.slane %v892, 4
      %v898 = vshrl.u32 %v858, 16
      %v900 = vrot.slane %v898, 7
      %v901 = vshll.u32 %v858, 16
      %v903 = vor.u32 %v900, %v901
      %v904 = vsel %vm417, %v896, %v903
      %v905 = vrot.slane %v900, 4
      %v907 = vshrl.u32 %v859, 16
      %v909 = vrot.slane %v907, 7
      %v910 = vshll.u32 %v859, 16
      %v912 = vor.u32 %v909, %v910
      %v913 = vrot.slane %v909, 4
      %v915 = vshrl.u32 %v860, 16
      %v917 = vrot.slane %v915, 7
      %v918 = vshll.u32 %v860, 16
      %v920 = vor.u32 %v917, %v918
      %v921 = vsel %vm417, %v913, %v920
      %v922 = vrot.slane %v917, 4
      %v924 = vshrl.u32 %v861, 16
      %v926 = vrot.slane %v924, 7
      %v927 = vshll.u32 %v861, 16
      %v929 = vor.u32 %v926, %v927
      %v930 = vrot.slane %v926, 4
      %v932 = vshrl.u32 %v862, 16
      %v934 = vrot.slane %v932, 7
      %v935 = vshll.u32 %v862, 16
      %v937 = vor.u32 %v934, %v935
      %v938 = vsel %vm417, %v930, %v937
      %v939 = vrot.slane %v934, 4
      %v941 = vshrl.u32 %v863, 16
      %v943 = vrot.slane %v941, 7
      %v944 = vshll.u32 %v863, 16
      %v946 = vor.u32 %v943, %v944
      %v947 = vrot.slane %v943, 4
      %v949 = vshrl.u32 %v864, 16
      %v951 = vrot.slane %v949, 7
      %v952 = vshll.u32 %v864, 16
      %v954 = vor.u32 %v951, %v952
      %v955 = vsel %vm417, %v947, %v954
      %v956 = vrot.slane %v951, 4
      %v958 = vshrl.u32 %v865, 16
      %v960 = vrot.slane %v958, 7
      %v961 = vshll.u32 %v865, 16
      %v963 = vor.u32 %v960, %v961
      %v964 = vrot.slane %v960, 4
      %v966 = vshrl.u32 %v866, 16
      %v968 = vrot.slane %v966, 7
      %v969 = vshll.u32 %v866, 16
      %v971 = vor.u32 %v968, %v969
      %v972 = vsel %vm417, %v964, %v971
      %v973 = vrot.slane %v968, 4
      %v975 = vshrl.u32 %v867, 16
      %v977 = vrot.slane %v975, 7
      %v978 = vshll.u32 %v867, 16
      %v980 = vor.u32 %v977, %v978
      %v981 = vrot.slane %v977, 4
      %v983 = vshrl.u32 %v868, 16
      %v985 = vrot.slane %v983, 7
      %v986 = vshll.u32 %v868, 16
      %v988 = vor.u32 %v985, %v986
      %v989 = vsel %vm417, %v981, %v988
      %v990 = vrot.slane %v985, 4
      %v992 = vshrl.u32 %v869, 16
      %v994 = vrot.slane %v992, 7
      %v995 = vshll.u32 %v869, 16
      %v997 = vor.u32 %v994, %v995
      %v998 = vrot.slane %v994, 4
      %v1000 = vshrl.u32 %v870, 16
      %v1002 = vrot.slane %v1000, 7
      %v1003 = vshll.u32 %v870, 16
      %v1005 = vor.u32 %v1002, %v1003
      %v1006 = vsel %vm417, %v998, %v1005
      %v1007 = vrot.slane %v1002, 4
      %v1009 = vshrl.u32 %v871, 16
      %v1011 = vrot.slane %v1009, 7
      %v1012 = vshll.u32 %v871, 16
      %v1014 = vor.u32 %v1011, %v1012
      %v1015 = vrot.slane %v1011, 4
      %v1017 = vshrl.u32 %v872, 16
      %v1019 = vrot.slane %v1017, 7
      %v1020 = vshll.u32 %v872, 16
      %v1022 = vor.u32 %v1019, %v1020
      %v1023 = vsel %vm417, %v1015, %v1022
      %v1024 = vrot.slane %v1019, 4
      %v1026 = vshrl.u32 %v873, 16
      %v1028 = vrot.slane %v1026, 7
      %v1029 = vshll.u32 %v873, 16
      %v1031 = vor.u32 %v1028, %v1029
      %v1032 = vrot.slane %v1028, 4
      %v1034 = vshrl.u32 %v874, 16
      %v1036 = vrot.slane %v1034, 7
      %v1037 = vshll.u32 %v874, 16
      %v1039 = vor.u32 %v1036, %v1037
      %v1040 = vsel %vm417, %v1032, %v1039
      %v1041 = vrot.slane %v1036, 4
      %v1043 = vshrl.u32 %v875, 16
      %v1045 = vrot.slane %v1043, 7
      %v1046 = vshll.u32 %v875, 16
      %v1048 = vor.u32 %v1045, %v1046
      %v1049 = vrot.slane %v1045, 4
      %v1051 = vshrl.u32 %v876, 16
      %v1053 = vrot.slane %v1051, 7
      %v1054 = vshll.u32 %v876, 16
      %v1056 = vor.u32 %v1053, %v1054
      %v1057 = vsel %vm417, %v1049, %v1056
      %v1058 = vrot.slane %v1053, 4
      %v1060 = vshrl.u32 %v877, 16
      %v1062 = vrot.slane %v1060, 7
      %v1063 = vshll.u32 %v877, 16
      %v1065 = vor.u32 %v1062, %v1063
      %v1066 = vrot.slane %v1062, 4
      %v1068 = vshrl.u32 %v878, 16
      %v1070 = vrot.slane %v1068, 7
      %v1071 = vshll.u32 %v878, 16
      %v1073 = vor.u32 %v1070, %v1071
      %v1074 = vsel %vm417, %v1066, %v1073
      %v1075 = vrot.slane %v1070, 4
      %v1077 = vshrl.u32 %v879, 16
      %v1079 = vrot.slane %v1077, 7
      %v1080 = vshll.u32 %v879, 16
      %v1082 = vor.u32 %v1079, %v1080
      %v1083 = vrot.slane %v1079, 4
      %v1085 = vshrl.u32 %v880, 16
      %v1087 = vrot.slane %v1085, 7
      %v1088 = vshll.u32 %v880, 16
      %v1090 = vor.u32 %v1087, %v1088
      %v1091 = vsel %vm417, %v1083, %v1090
      %v1092 = vrot.slane %v1087, 4
      %v1094 = vshrl.u32 %v881, 16
      %v1096 = vrot.slane %v1094, 7
      %v1097 = vshll.u32 %v881, 16
      %v1099 = vor.u32 %v1096, %v1097
      %v1100 = vrot.slane %v1096, 4
      %v1102 = vshrl.u32 %v882, 16
      %v1104 = vrot.slane %v1102, 7
      %v1105 = vshll.u32 %v882, 16
      %v1107 = vor.u32 %v1104, %v1105
      %v1108 = vsel %vm417, %v1100, %v1107
      %v1109 = vrot.slane %v1104, 4
      %v1111 = vshrl.u32 %v883, 16
      %v1113 = vrot.slane %v1111, 7
      %v1114 = vshll.u32 %v883, 16
      %v1116 = vor.u32 %v1113, %v1114
      %v1117 = vrot.slane %v1113, 4
      %v1119 = vshrl.u32 %v884, 16
      %v1121 = vrot.slane %v1119, 7
      %v1122 = vshll.u32 %v884, 16
      %v1124 = vor.u32 %v1121, %v1122
      %v1125 = vsel %vm417, %v1117, %v1124
      %v1126 = vrot.slane %v1121, 4
      %v1128 = vshrl.u32 %v885, 16
      %v1130 = vrot.slane %v1128, 7
      %v1131 = vshll.u32 %v885, 16
      %v1133 = vor.u32 %v1130, %v1131
      %v1134 = vrot.slane %v1130, 4
      %v1136 = vshrl.u32 %v886, 16
      %v1138 = vrot.slane %v1136, 7
      %v1139 = vshll.u32 %v886, 16
      %v1141 = vor.u32 %v1138, %v1139
      %v1142 = vsel %vm417, %v1134, %v1141
      %v1143 = vrot.slane %v1138, 4
      %v1145 = vshrl.u32 %v887, 16
      %v1147 = vrot.slane %v1145, 7
      %v1148 = vshll.u32 %v887, 16
      %v1150 = vor.u32 %v1147, %v1148
      %v1151 = vrot.slane %v1147, 4
      %v1153 = vshrl.u32 %v888, 16
      %v1155 = vrot.slane %v1153, 7
      %v1156 = vshll.u32 %v888, 16
      %v1158 = vor.u32 %v1155, %v1156
      %v1159 = vsel %vm417, %v1151, %v1158
      %v1160 = vrot.slane %v1155, 4
      %1161 = vrot.lane.b32.xlu0 %v895, 4
      %v1162 = vpop.permute.xlu0 %1161
      %1163 = vrot.lane.b32.xlu0 %v904, 4
      %v1164 = vpop.permute.xlu0 %1163
      %1165 = vrot.lane.b32.xlu0 %v905, 4
      %v1166 = vpop.permute.xlu0 %1165
      %1167 = vrot.lane.b32.xlu0 %v912, 4
      %v1168 = vpop.permute.xlu0 %1167
      %1169 = vrot.lane.b32.xlu0 %v921, 4
      %v1170 = vpop.permute.xlu0 %1169
      %1171 = vrot.lane.b32.xlu0 %v922, 4
      %v1172 = vpop.permute.xlu0 %1171
      %1173 = vrot.lane.b32.xlu0 %v929, 4
      %v1174 = vpop.permute.xlu0 %1173
      %1175 = vrot.lane.b32.xlu0 %v938, 4
      %v1176 = vpop.permute.xlu0 %1175
      %1177 = vrot.lane.b32.xlu0 %v939, 4
      %v1178 = vpop.permute.xlu0 %1177
      %1179 = vrot.lane.b32.xlu0 %v946, 4
      %v1180 = vpop.permute.xlu0 %1179
      %1181 = vrot.lane.b32.xlu0 %v955, 4
      %v1182 = vpop.permute.xlu0 %1181
      %1183 = vrot.lane.b32.xlu0 %v956, 4
      %v1184 = vpop.permute.xlu0 %1183
      %1185 = vrot.lane.b32.xlu0 %v963, 4
      %v1186 = vpop.permute.xlu0 %1185
      %1187 = vrot.lane.b32.xlu0 %v972, 4
      %v1188 = vpop.permute.xlu0 %1187
      %1189 = vrot.lane.b32.xlu0 %v973, 4
      %v1190 = vpop.permute.xlu0 %1189
      %1191 = vrot.lane.b32.xlu0 %v980, 4
      %v1192 = vpop.permute.xlu0 %1191
      %1193 = vrot.lane.b32.xlu0 %v989, 4
      %v1194 = vpop.permute.xlu0 %1193
      %1195 = vrot.lane.b32.xlu0 %v990, 4
      %v1196 = vpop.permute.xlu0 %1195
      %1197 = vrot.lane.b32.xlu0 %v997, 4
      %v1198 = vpop.permute.xlu0 %1197
      %1199 = vrot.lane.b32.xlu0 %v1006, 4
      %v1200 = vpop.permute.xlu0 %1199
      %1201 = vrot.lane.b32.xlu0 %v1007, 4
      %v1202 = vpop.permute.xlu0 %1201
      %1203 = vrot.lane.b32.xlu0 %v1014, 4
      %v1204 = vpop.permute.xlu0 %1203
      %1205 = vrot.lane.b32.xlu0 %v1023, 4
      %v1206 = vpop.permute.xlu0 %1205
      %1207 = vrot.lane.b32.xlu0 %v1024, 4
      %v1208 = vpop.permute.xlu0 %1207
      %1209 = vrot.lane.b32.xlu0 %v1031, 4
      %v1210 = vpop.permute.xlu0 %1209
      %1211 = vrot.lane.b32.xlu0 %v1040, 4
      %v1212 = vpop.permute.xlu0 %1211
      %1213 = vrot.lane.b32.xlu0 %v1041, 4
      %v1214 = vpop.permute.xlu0 %1213
      %1215 = vrot.lane.b32.xlu0 %v1048, 4
      %v1216 = vpop.permute.xlu0 %1215
      %1217 = vrot.lane.b32.xlu0 %v1057, 4
      %v1218 = vpop.permute.xlu0 %1217
      %1219 = vrot.lane.b32.xlu0 %v1058, 4
      %v1220 = vpop.permute.xlu0 %1219
      %1221 = vrot.lane.b32.xlu0 %v1065, 4
      %v1222 = vpop.permute.xlu0 %1221
      %1223 = vrot.lane.b32.xlu0 %v1074, 4
      %v1224 = vpop.permute.xlu0 %1223
      %1225 = vrot.lane.b32.xlu0 %v1075, 4
      %v1226 = vpop.permute.xlu0 %1225
      %1227 = vrot.lane.b32.xlu0 %v1082, 4
      %v1228 = vpop.permute.xlu0 %1227
      %1229 = vrot.lane.b32.xlu0 %v1091, 4
      %v1230 = vpop.permute.xlu0 %1229
      %1231 = vrot.lane.b32.xlu0 %v1092, 4
      %v1232 = vpop.permute.xlu0 %1231
      %1233 = vrot.lane.b32.xlu0 %v1099, 4
      %v1234 = vpop.permute.xlu0 %1233
      %1235 = vrot.lane.b32.xlu0 %v1108, 4
      %v1236 = vpop.permute.xlu0 %1235
      %1237 = vrot.lane.b32.xlu0 %v1109, 4
      %v1238 = vpop.permute.xlu0 %1237
      %1239 = vrot.lane.b32.xlu0 %v1116, 4
      %v1240 = vpop.permute.xlu0 %1239
      %1241 = vrot.lane.b32.xlu0 %v1125, 4
      %v1242 = vpop.permute.xlu0 %1241
      %1243 = vrot.lane.b32.xlu0 %v1126, 4
      %v1244 = vpop.permute.xlu0 %1243
      %1245 = vrot.lane.b32.xlu0 %v1133, 4
      %v1246 = vpop.permute.xlu0 %1245
      %1247 = vrot.lane.b32.xlu0 %v1142, 4
      %v1248 = vpop.permute.xlu0 %1247
      %1249 = vrot.lane.b32.xlu0 %v1143, 4
      %v1250 = vpop.permute.xlu0 %1249
      %1251 = vrot.lane.b32.xlu0 %v1150, 4
      %v1252 = vpop.permute.xlu0 %1251
      %1253 = vrot.lane.b32.xlu0 %v1159, 4
      %v1254 = vpop.permute.xlu0 %1253
      %1255 = vrot.lane.b32.xlu0 %v1160, 4
      %v1256 = vpop.permute.xlu0 %1255
      %vm1305 = vcmask 60448
      %vm1306 = vmand %vm1305, %vm740
      %v1307 = vld [vmem:[%s738] sm:$0xf]
      %v1308 = vsel %vm1306, %v1162, %v1307
      %1309 = vst [vmem:[%s738] sm:$0xf] %v1308
      %vm1310 = vcmask 60448
      %1311 = vst.msk [vmem:[%s738 + $0x4] sm:$0xf] %vm1310, %v1164
      %vm1312 = vcmask 57376
      %vm1313 = vmand %vm1312, %vm415
      %v1314 = vld [vmem:[%s738 + $0x8] sm:$0x1]
      %v1315 = vsel %vm1313, %v1166, %v1314
      %1316 = vst [vmem:[%s738 + $0x8] sm:$0x1] %v1315
      %v1317 = vld [vmem:[%s738 + $0xc] sm:$0xf]
      %v1318 = vsel %vm1306, %v1168, %v1317
      %1319 = vst [vmem:[%s738 + $0xc] sm:$0xf] %v1318
      %1320 = vst.msk [vmem:[%s738 + $0x10] sm:$0xf] %vm1310, %v1170
      %v1321 = vld [vmem:[%s738 + $0x14] sm:$0x1]
      %v1322 = vsel %vm1313, %v1172, %v1321
      %1323 = vst [vmem:[%s738 + $0x14] sm:$0x1] %v1322
      %v1324 = vld [vmem:[%s738 + $0x18] sm:$0xf]
      %v1325 = vsel %vm1306, %v1174, %v1324
      %1326 = vst [vmem:[%s738 + $0x18] sm:$0xf] %v1325
      %1327 = vst.msk [vmem:[%s738 + $0x1c] sm:$0xf] %vm1310, %v1176
      %v1328 = vld [vmem:[%s738 + $0x20] sm:$0x1]
      %v1329 = vsel %vm1313, %v1178, %v1328
      %1330 = vst [vmem:[%s738 + $0x20] sm:$0x1] %v1329
      %v1331 = vld [vmem:[%s738 + $0x24] sm:$0xf]
      %v1332 = vsel %vm1306, %v1180, %v1331
      %1333 = vst [vmem:[%s738 + $0x24] sm:$0xf] %v1332
      %1334 = vst.msk [vmem:[%s738 + $0x28] sm:$0xf] %vm1310, %v1182
      %v1335 = vld [vmem:[%s738 + $0x2c] sm:$0x1]
      %v1336 = vsel %vm1313, %v1184, %v1335
      %1337 = vst [vmem:[%s738 + $0x2c] sm:$0x1] %v1336
      %v1338 = vld [vmem:[%s738 + $0x30] sm:$0xf]
      %v1339 = vsel %vm1306, %v1186, %v1338
      %1340 = vst [vmem:[%s738 + $0x30] sm:$0xf] %v1339
      %1341 = vst.msk [vmem:[%s738 + $0x34] sm:$0xf] %vm1310, %v1188
      %v1342 = vld [vmem:[%s738 + $0x38] sm:$0x1]
      %v1343 = vsel %vm1313, %v1190, %v1342
      %1344 = vst [vmem:[%s738 + $0x38] sm:$0x1] %v1343
      %v1345 = vld [vmem:[%s738 + $0x3c] sm:$0xf]
      %v1346 = vsel %vm1306, %v1192, %v1345
      %1347 = vst [vmem:[%s738 + $0x3c] sm:$0xf] %v1346
      %1348 = vst.msk [vmem:[%s738 + $0x40] sm:$0xf] %vm1310, %v1194
      %v1349 = vld [vmem:[%s738 + $0x44] sm:$0x1]
      %v1350 = vsel %vm1313, %v1196, %v1349
      %1351 = vst [vmem:[%s738 + $0x44] sm:$0x1] %v1350
      %v1352 = vld [vmem:[%s738 + $0x48] sm:$0xf]
      %v1353 = vsel %vm1306, %v1198, %v1352
      %1354 = vst [vmem:[%s738 + $0x48] sm:$0xf] %v1353
      %1355 = vst.msk [vmem:[%s738 + $0x4c] sm:$0xf] %vm1310, %v1200
      %v1356 = vld [vmem:[%s738 + $0x50] sm:$0x1]
      %v1357 = vsel %vm1313, %v1202, %v1356
      %1358 = vst [vmem:[%s738 + $0x50] sm:$0x1] %v1357
      %v1359 = vld [vmem:[%s738 + $0x54] sm:$0xf]
      %v1360 = vsel %vm1306, %v1204, %v1359
      %1361 = vst [vmem:[%s738 + $0x54] sm:$0xf] %v1360
      %1362 = vst.msk [vmem:[%s738 + $0x58] sm:$0xf] %vm1310, %v1206
      %v1363 = vld [vmem:[%s738 + $0x5c] sm:$0x1]
      %v1364 = vsel %vm1313, %v1208, %v1363
      %1365 = vst [vmem:[%s738 + $0x5c] sm:$0x1] %v1364
      %v1366 = vld [vmem:[%s738 + $0x60] sm:$0xf]
      %v1367 = vsel %vm1306, %v1210, %v1366
      %1368 = vst [vmem:[%s738 + $0x60] sm:$0xf] %v1367
      %1369 = vst.msk [vmem:[%s738 + $0x64] sm:$0xf] %vm1310, %v1212
      %v1370 = vld [vmem:[%s738 + $0x68] sm:$0x1]
      %v1371 = vsel %vm1313, %v1214, %v1370
      %1372 = vst [vmem:[%s738 + $0x68] sm:$0x1] %v1371
      %v1373 = vld [vmem:[%s738 + $0x6c] sm:$0xf]
      %v1374 = vsel %vm1306, %v1216, %v1373
      %1375 = vst [vmem:[%s738 + $0x6c] sm:$0xf] %v1374
      %1376 = vst.msk [vmem:[%s738 + $0x70] sm:$0xf] %vm1310, %v1218
      %v1377 = vld [vmem:[%s738 + $0x74] sm:$0x1]
      %v1378 = vsel %vm1313, %v1220, %v1377
      %1379 = vst [vmem:[%s738 + $0x74] sm:$0x1] %v1378
      %v1380 = vld [vmem:[%s738 + $0x78] sm:$0xf]
      %v1381 = vsel %vm1306, %v1222, %v1380
      %1382 = vst [vmem:[%s738 + $0x78] sm:$0xf] %v1381
      %1383 = vst.msk [vmem:[%s738 + $0x7c] sm:$0xf] %vm1310, %v1224
      %v1384 = vld [vmem:[%s738 + $0x80] sm:$0x1]
      %v1385 = vsel %vm1313, %v1226, %v1384
      %1386 = vst [vmem:[%s738 + $0x80] sm:$0x1] %v1385
      %v1387 = vld [vmem:[%s738 + $0x84] sm:$0xf]
      %v1388 = vsel %vm1306, %v1228, %v1387
      %1389 = vst [vmem:[%s738 + $0x84] sm:$0xf] %v1388
      %1390 = vst.msk [vmem:[%s738 + $0x88] sm:$0xf] %vm1310, %v1230
      %v1391 = vld [vmem:[%s738 + $0x8c] sm:$0x1]
      %v1392 = vsel %vm1313, %v1232, %v1391
      %1393 = vst [vmem:[%s738 + $0x8c] sm:$0x1] %v1392
      %v1394 = vld [vmem:[%s738 + $0x90] sm:$0xf]
      %v1395 = vsel %vm1306, %v1234, %v1394
      %1396 = vst [vmem:[%s738 + $0x90] sm:$0xf] %v1395
      %1397 = vst.msk [vmem:[%s738 + $0x94] sm:$0xf] %vm1310, %v1236
      %v1398 = vld [vmem:[%s738 + $0x98] sm:$0x1]
      %v1399 = vsel %vm1313, %v1238, %v1398
      %1400 = vst [vmem:[%s738 + $0x98] sm:$0x1] %v1399
      %v1401 = vld [vmem:[%s738 + $0x9c] sm:$0xf]
      %v1402 = vsel %vm1306, %v1240, %v1401
      %1403 = vst [vmem:[%s738 + $0x9c] sm:$0xf] %v1402
      %1404 = vst.msk [vmem:[%s738 + $0xa0] sm:$0xf] %vm1310, %v1242
      %v1405 = vld [vmem:[%s738 + $0xa4] sm:$0x1]
      %v1406 = vsel %vm1313, %v1244, %v1405
      %1407 = vst [vmem:[%s738 + $0xa4] sm:$0x1] %v1406
      %v1408 = vld [vmem:[%s738 + $0xa8] sm:$0xf]
      %v1409 = vsel %vm1306, %v1246, %v1408
      %1410 = vst [vmem:[%s738 + $0xa8] sm:$0xf] %v1409
      %1411 = vst.msk [vmem:[%s738 + $0xac] sm:$0xf] %vm1310, %v1248
      %v1412 = vld [vmem:[%s738 + $0xb0] sm:$0x1]
      %v1413 = vsel %vm1313, %v1250, %v1412
      %1414 = vst [vmem:[%s738 + $0xb0] sm:$0x1] %v1413
      %v1415 = vld [vmem:[%s738 + $0xb4] sm:$0xf]
      %v1416 = vsel %vm1306, %v1252, %v1415
      %1417 = vst [vmem:[%s738 + $0xb4] sm:$0xf] %v1416
      %1418 = vst.msk [vmem:[%s738 + $0xb8] sm:$0xf] %vm1310, %v1254
      %v1419 = vld [vmem:[%s738 + $0xbc] sm:$0x1]
      %v1420 = vsel %vm1313, %v1256, %v1419
      %1421 = vst [vmem:[%s738 + $0xbc] sm:$0x1] %v1420
      %v1422 = vld [vmem:[#allocation2] sm:$0xf]
      %v1423 = vld [vmem:[#allocation2 + $0x4] sm:$0xf]
      %v1424 = vld [vmem:[#allocation2 + $0x8] sm:$0x1]
      %v1425 = vld [vmem:[#allocation2 + $0xc] sm:$0xf]
      %v1426 = vld [vmem:[#allocation2 + $0x10] sm:$0xf]
      %v1427 = vld [vmem:[#allocation2 + $0x14] sm:$0x1]
      %v1428 = vld [vmem:[#allocation2 + $0x18] sm:$0xf]
      %v1429 = vld [vmem:[#allocation2 + $0x1c] sm:$0xf]
      %v1430 = vld [vmem:[#allocation2 + $0x20] sm:$0x1]
      %v1431 = vld [vmem:[#allocation2 + $0x24] sm:$0xf]
      %v1432 = vld [vmem:[#allocation2 + $0x28] sm:$0xf]
      %v1433 = vld [vmem:[#allocation2 + $0x2c] sm:$0x1]
      %v1434 = vld [vmem:[#allocation2 + $0x30] sm:$0xf]
      %v1435 = vld [vmem:[#allocation2 + $0x34] sm:$0xf]
      %v1436 = vld [vmem:[#allocation2 + $0x38] sm:$0x1]
      %v1437 = vld [vmem:[#allocation2 + $0x3c] sm:$0xf]
      %v1438 = vld [vmem:[#allocation2 + $0x40] sm:$0xf]
      %v1439 = vld [vmem:[#allocation2 + $0x44] sm:$0x1]
      %v1440 = vld [vmem:[#allocation2 + $0x48] sm:$0xf]
      %v1441 = vld [vmem:[#allocation2 + $0x4c] sm:$0xf]
      %v1442 = vld [vmem:[#allocation2 + $0x50] sm:$0x1]
      %v1443 = vld [vmem:[#allocation2 + $0x54] sm:$0xf]
      %v1444 = vld [vmem:[#allocation2 + $0x58] sm:$0xf]
      %v1445 = vld [vmem:[#allocation2 + $0x5c] sm:$0x1]
      %v1446 = vld [vmem:[#allocation2 + $0x60] sm:$0xf]
      %v1447 = vld [vmem:[#allocation2 + $0x64] sm:$0xf]
      %v1448 = vld [vmem:[#allocation2 + $0x68] sm:$0x1]
      %v1449 = vld [vmem:[#allocation2 + $0x6c] sm:$0xf]
      %v1450 = vld [vmem:[#allocation2 + $0x70] sm:$0xf]
      %v1451 = vld [vmem:[#allocation2 + $0x74] sm:$0x1]
      %v1452 = vld [vmem:[#allocation2 + $0x78] sm:$0xf]
      %v1453 = vld [vmem:[#allocation2 + $0x7c] sm:$0xf]
      %v1454 = vld [vmem:[#allocation2 + $0x80] sm:$0x1]
      %v1455 = vld [vmem:[#allocation2 + $0x84] sm:$0xf]
      %v1456 = vld [vmem:[#allocation2 + $0x88] sm:$0xf]
      %v1457 = vld [vmem:[#allocation2 + $0x8c] sm:$0x1]
      %v1458 = vld [vmem:[#allocation2 + $0x90] sm:$0xf]
      %v1459 = vld [vmem:[#allocation2 + $0x94] sm:$0xf]
      %v1460 = vld [vmem:[#allocation2 + $0x98] sm:$0x1]
      %v1461 = vld [vmem:[#allocation2 + $0x9c] sm:$0xf]
      %v1462 = vld [vmem:[#allocation2 + $0xa0] sm:$0xf]
      %v1463 = vld [vmem:[#allocation2 + $0xa4] sm:$0x1]
      %v1464 = vld [vmem:[#allocation2 + $0xa8] sm:$0xf]
      %v1465 = vld [vmem:[#allocation2 + $0xac] sm:$0xf]
      %v1466 = vld [vmem:[#allocation2 + $0xb0] sm:$0x1]
      %v1467 = vld [vmem:[#allocation2 + $0xb4] sm:$0xf]
      %v1468 = vld [vmem:[#allocation2 + $0xb8] sm:$0xf]
      %v1469 = vld [vmem:[#allocation2 + $0xbc] sm:$0x1]
      %v1470 = vld [vmem:[#allocation2 + $0xc0] sm:$0xf]
      %v1471 = vld [vmem:[#allocation2 + $0xc4] sm:$0xf]
      %v1472 = vld [vmem:[#allocation2 + $0xc8] sm:$0x1]
      %v1473 = vld [vmem:[#allocation2 + $0xcc] sm:$0xf]
      %v1474 = vld [vmem:[#allocation2 + $0xd0] sm:$0xf]
      %v1475 = vld [vmem:[#allocation2 + $0xd4] sm:$0x1]
      %vm1476 = vsmask.f32 3328
      %vm1477 = vsmask.f32 7440
      %vm1478 = vmor %vm1476, %vm1477
      %v1480 = vshrl.u32 %v1422, 16
      %v1482 = vrot.slane %v1480, 4
      %v1483 = vshll.u32 %v1422, 16
      %v1485 = vrot.slane %v1483, 5
      %v1486 = vor.u32 %v1482, %v1485
      %v1487 = vrot.slane %v1486, 4
      %v1489 = vshll.u32 %v1423, 16
      %v1491 = vrot.slane %v1489, 5
      %v1492 = vsel %vm1478, %v1487, %v1491
      %v1493 = vshrl.u32 %v1423, 16
      %v1495 = vrot.slane %v1493, 4
      %v1496 = vor.u32 %v1495, %v1491
      %v1497 = vrot.slane %v1496, 4
      %v1499 = vshll.u32 %v1424, 16
      %v1501 = vrot.slane %v1499, 5
      %v1502 = vsel %vm1478, %v1497, %v1501
      %v1504 = vshrl.u32 %v1425, 16
      %v1506 = vrot.slane %v1504, 4
      %v1507 = vshll.u32 %v1425, 16
      %v1509 = vrot.slane %v1507, 5
      %v1510 = vor.u32 %v1506, %v1509
      %v1511 = vrot.slane %v1510, 4
      %v1513 = vshll.u32 %v1426, 16
      %v1515 = vrot.slane %v1513, 5
      %v1516 = vsel %vm1478, %v1511, %v1515
      %v1517 = vshrl.u32 %v1426, 16
      %v1519 = vrot.slane %v1517, 4
      %v1520 = vor.u32 %v1519, %v1515
      %v1521 = vrot.slane %v1520, 4
      %v1523 = vshll.u32 %v1427, 16
      %v1525 = vrot.slane %v1523, 5
      %v1526 = vsel %vm1478, %v1521, %v1525
      %v1528 = vshrl.u32 %v1428, 16
      %v1530 = vrot.slane %v1528, 4
      %v1531 = vshll.u32 %v1428, 16
      %v1533 = vrot.slane %v1531, 5
      %v1534 = vor.u32 %v1530, %v1533
      %v1535 = vrot.slane %v1534, 4
      %v1537 = vshll.u32 %v1429, 16
      %v1539 = vrot.slane %v1537, 5
      %v1540 = vsel %vm1478, %v1535, %v1539
      %v1541 = vshrl.u32 %v1429, 16
      %v1543 = vrot.slane %v1541, 4
      %v1544 = vor.u32 %v1543, %v1539
      %v1545 = vrot.slane %v1544, 4
      %v1547 = vshll.u32 %v1430, 16
      %v1549 = vrot.slane %v1547, 5
      %v1550 = vsel %vm1478, %v1545, %v1549
      %v1552 = vshrl.u32 %v1431, 16
      %v1554 = vrot.slane %v1552, 4
      %v1555 = vshll.u32 %v1431, 16
      %v1557 = vrot.slane %v1555, 5
      %v1558 = vor.u32 %v1554, %v1557
      %v1559 = vrot.slane %v1558, 4
      %v1561 = vshll.u32 %v1432, 16
      %v1563 = vrot.slane %v1561, 5
      %v1564 = vsel %vm1478, %v1559, %v1563
      %v1565 = vshrl.u32 %v1432, 16
      %v1567 = vrot.slane %v1565, 4
      %v1568 = vor.u32 %v1567, %v1563
      %v1569 = vrot.slane %v1568, 4
      %v1571 = vshll.u32 %v1433, 16
      %v1573 = vrot.slane %v1571, 5
      %v1574 = vsel %vm1478, %v1569, %v1573
      %v1576 = vshrl.u32 %v1434, 16
      %v1578 = vrot.slane %v1576, 4
      %v1579 = vshll.u32 %v1434, 16
      %v1581 = vrot.slane %v1579, 5
      %v1582 = vor.u32 %v1578, %v1581
      %v1583 = vrot.slane %v1582, 4
      %v1585 = vshll.u32 %v1435, 16
      %v1587 = vrot.slane %v1585, 5
      %v1588 = vsel %vm1478, %v1583, %v1587
      %v1589 = vshrl.u32 %v1435, 16
      %v1591 = vrot.slane %v1589, 4
      %v1592 = vor.u32 %v1591, %v1587
      %v1593 = vrot.slane %v1592, 4
      %v1595 = vshll.u32 %v1436, 16
      %v1597 = vrot.slane %v1595, 5
      %v1598 = vsel %vm1478, %v1593, %v1597
      %v1600 = vshrl.u32 %v1437, 16
      %v1602 = vrot.slane %v1600, 4
      %v1603 = vshll.u32 %v1437, 16
      %v1605 = vrot.slane %v1603, 5
      %v1606 = vor.u32 %v1602, %v1605
      %v1607 = vrot.slane %v1606, 4
      %v1609 = vshll.u32 %v1438, 16
      %v1611 = vrot.slane %v1609, 5
      %v1612 = vsel %vm1478, %v1607, %v1611
      %v1613 = vshrl.u32 %v1438, 16
      %v1615 = vrot.slane %v1613, 4
      %v1616 = vor.u32 %v1615, %v1611
      %v1617 = vrot.slane %v1616, 4
      %v1619 = vshll.u32 %v1439, 16
      %v1621 = vrot.slane %v1619, 5
      %v1622 = vsel %vm1478, %v1617, %v1621
      %v1624 = vshrl.u32 %v1440, 16
      %v1626 = vrot.slane %v1624, 4
      %v1627 = vshll.u32 %v1440, 16
      %v1629 = vrot.slane %v1627, 5
      %v1630 = vor.u32 %v1626, %v1629
      %v1631 = vrot.slane %v1630, 4
      %v1633 = vshll.u32 %v1441, 16
      %v1635 = vrot.slane %v1633, 5
      %v1636 = vsel %vm1478, %v1631, %v1635
      %v1637 = vshrl.u32 %v1441, 16
      %v1639 = vrot.slane %v1637, 4
      %v1640 = vor.u32 %v1639, %v1635
      %v1641 = vrot.slane %v1640, 4
      %v1643 = vshll.u32 %v1442, 16
      %v1645 = vrot.slane %v1643, 5
      %v1646 = vsel %vm1478, %v1641, %v1645
      %v1648 = vshrl.u32 %v1443, 16
      %v1650 = vrot.slane %v1648, 4
      %v1651 = vshll.u32 %v1443, 16
      %v1653 = vrot.slane %v1651, 5
      %v1654 = vor.u32 %v1650, %v1653
      %v1655 = vrot.slane %v1654, 4
      %v1657 = vshll.u32 %v1444, 16
      %v1659 = vrot.slane %v1657, 5
      %v1660 = vsel %vm1478, %v1655, %v1659
      %v1661 = vshrl.u32 %v1444, 16
      %v1663 = vrot.slane %v1661, 4
      %v1664 = vor.u32 %v1663, %v1659
      %v1665 = vrot.slane %v1664, 4
      %v1667 = vshll.u32 %v1445, 16
      %v1669 = vrot.slane %v1667, 5
      %v1670 = vsel %vm1478, %v1665, %v1669
      %v1672 = vshrl.u32 %v1446, 16
      %v1674 = vrot.slane %v1672, 4
      %v1675 = vshll.u32 %v1446, 16
      %v1677 = vrot.slane %v1675, 5
      %v1678 = vor.u32 %v1674, %v1677
      %v1679 = vrot.slane %v1678, 4
      %v1681 = vshll.u32 %v1447, 16
      %v1683 = vrot.slane %v1681, 5
      %v1684 = vsel %vm1478, %v1679, %v1683
      %v1685 = vshrl.u32 %v1447, 16
      %v1687 = vrot.slane %v1685, 4
      %v1688 = vor.u32 %v1687, %v1683
      %v1689 = vrot.slane %v1688, 4
      %v1691 = vshll.u32 %v1448, 16
      %v1693 = vrot.slane %v1691, 5
      %v1694 = vsel %vm1478, %v1689, %v1693
      %v1696 = vshrl.u32 %v1449, 16
      %v1698 = vrot.slane %v1696, 4
      %v1699 = vshll.u32 %v1449, 16
      %v1701 = vrot.slane %v1699, 5
      %v1702 = vor.u32 %v1698, %v1701
      %v1703 = vrot.slane %v1702, 4
      %v1705 = vshll.u32 %v1450, 16
      %v1707 = vrot.slane %v1705, 5
      %v1708 = vsel %vm1478, %v1703, %v1707
      %v1709 = vshrl.u32 %v1450, 16
      %v1711 = vrot.slane %v1709, 4
      %v1712 = vor.u32 %v1711, %v1707
      %v1713 = vrot.slane %v1712, 4
      %v1715 = vshll.u32 %v1451, 16
      %v1717 = vrot.slane %v1715, 5
      %v1718 = vsel %vm1478, %v1713, %v1717
      %v1720 = vshrl.u32 %v1452, 16
      %v1722 = vrot.slane %v1720, 4
      %v1723 = vshll.u32 %v1452, 16
      %v1725 = vrot.slane %v1723, 5
      %v1726 = vor.u32 %v1722, %v1725
      %v1727 = vrot.slane %v1726, 4
      %v1729 = vshll.u32 %v1453, 16
      %v1731 = vrot.slane %v1729, 5
      %v1732 = vsel %vm1478, %v1727, %v1731
      %v1733 = vshrl.u32 %v1453, 16
      %v1735 = vrot.slane %v1733, 4
      %v1736 = vor.u32 %v1735, %v1731
      %v1737 = vrot.slane %v1736, 4
      %v1739 = vshll.u32 %v1454, 16
      %v1741 = vrot.slane %v1739, 5
      %v1742 = vsel %vm1478, %v1737, %v1741
      %v1744 = vshrl.u32 %v1455, 16
      %v1746 = vrot.slane %v1744, 4
      %v1747 = vshll.u32 %v1455, 16
      %v1749 = vrot.slane %v1747, 5
      %v1750 = vor.u32 %v1746, %v1749
      %v1751 = vrot.slane %v1750, 4
      %v1753 = vshll.u32 %v1456, 16
      %v1755 = vrot.slane %v1753, 5
      %v1756 = vsel %vm1478, %v1751, %v1755
      %v1757 = vshrl.u32 %v1456, 16
      %v1759 = vrot.slane %v1757, 4
      %v1760 = vor.u32 %v1759, %v1755
      %v1761 = vrot.slane %v1760, 4
      %v1763 = vshll.u32 %v1457, 16
      %v1765 = vrot.slane %v1763, 5
      %v1766 = vsel %vm1478, %v1761, %v1765
      %v1768 = vshrl.u32 %v1458, 16
      %v1770 = vrot.slane %v1768, 4
      %v1771 = vshll.u32 %v1458, 16
      %v1773 = vrot.slane %v1771, 5
      %v1774 = vor.u32 %v1770, %v1773
      %v1775 = vrot.slane %v1774, 4
      %v1777 = vshll.u32 %v1459, 16
      %v1779 = vrot.slane %v1777, 5
      %v1780 = vsel %vm1478, %v1775, %v1779
      %v1781 = vshrl.u32 %v1459, 16
      %v1783 = vrot.slane %v1781, 4
      %v1784 = vor.u32 %v1783, %v1779
      %v1785 = vrot.slane %v1784, 4
      %v1787 = vshll.u32 %v1460, 16
      %v1789 = vrot.slane %v1787, 5
      %v1790 = vsel %vm1478, %v1785, %v1789
      %v1792 = vshrl.u32 %v1461, 16
      %v1794 = vrot.slane %v1792, 4
      %v1795 = vshll.u32 %v1461, 16
      %v1797 = vrot.slane %v1795, 5
      %v1798 = vor.u32 %v1794, %v1797
      %v1799 = vrot.slane %v1798, 4
      %v1801 = vshll.u32 %v1462, 16
      %v1803 = vrot.slane %v1801, 5
      %v1804 = vsel %vm1478, %v1799, %v1803
      %v1805 = vshrl.u32 %v1462, 16
      %v1807 = vrot.slane %v1805, 4
      %v1808 = vor.u32 %v1807, %v1803
      %v1809 = vrot.slane %v1808, 4
      %v1811 = vshll.u32 %v1463, 16
      %v1813 = vrot.slane %v1811, 5
      %v1814 = vsel %vm1478, %v1809, %v1813
      %v1816 = vshrl.u32 %v1464, 16
      %v1818 = vrot.slane %v1816, 4
      %v1819 = vshll.u32 %v1464, 16
      %v1821 = vrot.slane %v1819, 5
      %v1822 = vor.u32 %v1818, %v1821
      %v1823 = vrot.slane %v1822, 4
      %v1825 = vshll.u32 %v1465, 16
      %v1827 = vrot.slane %v1825, 5
      %v1828 = vsel %vm1478, %v1823, %v1827
      %v1829 = vshrl.u32 %v1465, 16
      %v1831 = vrot.slane %v1829, 4
      %v1832 = vor.u32 %v1831, %v1827
      %v1833 = vrot.slane %v1832, 4
      %v1835 = vshll.u32 %v1466, 16
      %v1837 = vrot.slane %v1835, 5
      %v1838 = vsel %vm1478, %v1833, %v1837
      %v1840 = vshrl.u32 %v1467, 16
      %v1842 = vrot.slane %v1840, 4
      %v1843 = vshll.u32 %v1467, 16
      %v1845 = vrot.slane %v1843, 5
      %v1846 = vor.u32 %v1842, %v1845
      %v1847 = vrot.slane %v1846, 4
      %v1849 = vshll.u32 %v1468, 16
      %v1851 = vrot.slane %v1849, 5
      %v1852 = vsel %vm1478, %v1847, %v1851
      %v1853 = vshrl.u32 %v1468, 16
      %v1855 = vrot.slane %v1853, 4
      %v1856 = vor.u32 %v1855, %v1851
      %v1857 = vrot.slane %v1856, 4
      %v1859 = vshll.u32 %v1469, 16
      %v1861 = vrot.slane %v1859, 5
      %v1862 = vsel %vm1478, %v1857, %v1861
      %vm1911 = vcmask 1042432
      %vm1912 = vcmask 1046532
      %vm1913 = vmor %vm1911, %vm1912
      %v1914 = vrot.slane %v1422, 5
      %v1915 = vrot.slane %v1914, 4
      %v1916 = vrot.slane %v1423, 5
      %v1917 = vsel %vm1913, %v1915, %v1916
      %v1918 = vrot.slane %v1916, 4
      %v1919 = vrot.slane %v1424, 5
      %v1920 = vsel %vm1913, %v1918, %v1919
      %v1921 = vrot.slane %v1425, 5
      %v1922 = vrot.slane %v1921, 4
      %v1923 = vrot.slane %v1426, 5
      %v1924 = vsel %vm1913, %v1922, %v1923
      %v1925 = vrot.slane %v1923, 4
      %v1926 = vrot.slane %v1427, 5
      %v1927 = vsel %vm1913, %v1925, %v1926
      %v1928 = vrot.slane %v1428, 5
      %v1929 = vrot.slane %v1928, 4
      %v1930 = vrot.slane %v1429, 5
      %v1931 = vsel %vm1913, %v1929, %v1930
      %v1932 = vrot.slane %v1930, 4
      %v1933 = vrot.slane %v1430, 5
      %v1934 = vsel %vm1913, %v1932, %v1933
      %v1935 = vrot.slane %v1431, 5
      %v1936 = vrot.slane %v1935, 4
      %v1937 = vrot.slane %v1432, 5
      %v1938 = vsel %vm1913, %v1936, %v1937
      %v1939 = vrot.slane %v1937, 4
      %v1940 = vrot.slane %v1433, 5
      %v1941 = vsel %vm1913, %v1939, %v1940
      %v1942 = vrot.slane %v1434, 5
      %v1943 = vrot.slane %v1942, 4
      %v1944 = vrot.slane %v1435, 5
      %v1945 = vsel %vm1913, %v1943, %v1944
      %v1946 = vrot.slane %v1944, 4
      %v1947 = vrot.slane %v1436, 5
      %v1948 = vsel %vm1913, %v1946, %v1947
      %v1949 = vrot.slane %v1437, 5
      %v1950 = vrot.slane %v1949, 4
      %v1951 = vrot.slane %v1438, 5
      %v1952 = vsel %vm1913, %v1950, %v1951
      %v1953 = vrot.slane %v1951, 4
      %v1954 = vrot.slane %v1439, 5
      %v1955 = vsel %vm1913, %v1953, %v1954
      %v1956 = vrot.slane %v1440, 5
      %v1957 = vrot.slane %v1956, 4
      %v1958 = vrot.slane %v1441, 5
      %v1959 = vsel %vm1913, %v1957, %v1958
      %v1960 = vrot.slane %v1958, 4
      %v1961 = vrot.slane %v1442, 5
      %v1962 = vsel %vm1913, %v1960, %v1961
      %v1963 = vrot.slane %v1443, 5
      %v1964 = vrot.slane %v1963, 4
      %v1965 = vrot.slane %v1444, 5
      %v1966 = vsel %vm1913, %v1964, %v1965
      %v1967 = vrot.slane %v1965, 4
      %v1968 = vrot.slane %v1445, 5
      %v1969 = vsel %vm1913, %v1967, %v1968
      %v1970 = vrot.slane %v1446, 5
      %v1971 = vrot.slane %v1970, 4
      %v1972 = vrot.slane %v1447, 5
      %v1973 = vsel %vm1913, %v1971, %v1972
      %v1974 = vrot.slane %v1972, 4
      %v1975 = vrot.slane %v1448, 5
      %v1976 = vsel %vm1913, %v1974, %v1975
      %v1977 = vrot.slane %v1449, 5
      %v1978 = vrot.slane %v1977, 4
      %v1979 = vrot.slane %v1450, 5
      %v1980 = vsel %vm1913, %v1978, %v1979
      %v1981 = vrot.slane %v1979, 4
      %v1982 = vrot.slane %v1451, 5
      %v1983 = vsel %vm1913, %v1981, %v1982
      %v1984 = vrot.slane %v1452, 5
      %v1985 = vrot.slane %v1984, 4
      %v1986 = vrot.slane %v1453, 5
      %v1987 = vsel %vm1913, %v1985, %v1986
      %v1988 = vrot.slane %v1986, 4
      %v1989 = vrot.slane %v1454, 5
      %v1990 = vsel %vm1913, %v1988, %v1989
      %v1991 = vrot.slane %v1455, 5
      %v1992 = vrot.slane %v1991, 4
      %v1993 = vrot.slane %v1456, 5
      %v1994 = vsel %vm1913, %v1992, %v1993
      %v1995 = vrot.slane %v1993, 4
      %v1996 = vrot.slane %v1457, 5
      %v1997 = vsel %vm1913, %v1995, %v1996
      %v1998 = vrot.slane %v1458, 5
      %v1999 = vrot.slane %v1998, 4
      %v2000 = vrot.slane %v1459, 5
      %v2001 = vsel %vm1913, %v1999, %v2000
      %v2002 = vrot.slane %v2000, 4
      %v2003 = vrot.slane %v1460, 5
      %v2004 = vsel %vm1913, %v2002, %v2003
      %v2005 = vrot.slane %v1461, 5
      %v2006 = vrot.slane %v2005, 4
      %v2007 = vrot.slane %v1462, 5
      %v2008 = vsel %vm1913, %v2006, %v2007
      %v2009 = vrot.slane %v2007, 4
      %v2010 = vrot.slane %v1463, 5
      %v2011 = vsel %vm1913, %v2009, %v2010
      %v2012 = vrot.slane %v1464, 5
      %v2013 = vrot.slane %v2012, 4
      %v2014 = vrot.slane %v1465, 5
      %v2015 = vsel %vm1913, %v2013, %v2014
      %v2016 = vrot.slane %v2014, 4
      %v2017 = vrot.slane %v1466, 5
      %v2018 = vsel %vm1913, %v2016, %v2017
      %v2019 = vrot.slane %v1467, 5
      %v2020 = vrot.slane %v2019, 4
      %v2021 = vrot.slane %v1468, 5
      %v2022 = vsel %vm1913, %v2020, %v2021
      %v2023 = vrot.slane %v2021, 4
      %v2024 = vrot.slane %v1469, 5
      %v2025 = vsel %vm1913, %v2023, %v2024
      %v2027 = vshrl.u32 %v1470, 16
      %v2029 = vrot.slane %v2027, 4
      %v2030 = vshll.u32 %v1470, 16
      %v2032 = vrot.slane %v2030, 5
      %v2033 = vor.u32 %v2029, %v2032
      %v2034 = vrot.slane %v2033, 4
      %v2036 = vshll.u32 %v1471, 16
      %v2038 = vrot.slane %v2036, 5
      %v2039 = vsel %vm1478, %v2034, %v2038
      %v2040 = vshrl.u32 %v1471, 16
      %v2042 = vrot.slane %v2040, 4
      %v2043 = vor.u32 %v2042, %v2038
      %v2044 = vrot.slane %v2043, 4
      %v2046 = vshll.u32 %v1472, 16
      %v2048 = vrot.slane %v2046, 5
      %v2049 = vsel %vm1478, %v2044, %v2048
      %v2053 = vrot.slane %v1470, 5
      %v2054 = vrot.slane %v2053, 4
      %v2055 = vrot.slane %v1471, 5
      %v2056 = vsel %vm1913, %v2054, %v2055
      %v2057 = vrot.slane %v2055, 4
      %v2058 = vrot.slane %v1472, 5
      %v2059 = vsel %vm1913, %v2057, %v2058
      %v2061 = vshrl.u32 %v1473, 16
      %v2063 = vrot.slane %v2061, 4
      %v2064 = vshll.u32 %v1473, 16
      %v2066 = vrot.slane %v2064, 5
      %v2067 = vor.u32 %v2063, %v2066
      %v2068 = vrot.slane %v2067, 4
      %v2070 = vshll.u32 %v1474, 16
      %v2072 = vrot.slane %v2070, 5
      %v2073 = vsel %vm1478, %v2068, %v2072
      %v2074 = vshrl.u32 %v1474, 16
      %v2076 = vrot.slane %v2074, 4
      %v2077 = vor.u32 %v2076, %v2072
      %v2078 = vrot.slane %v2077, 4
      %v2080 = vshll.u32 %v1475, 16
      %v2082 = vrot.slane %v2080, 5
      %v2083 = vsel %vm1478, %v2078, %v2082
      %v2087 = vrot.slane %v1473, 5
      %v2088 = vrot.slane %v2087, 4
      %v2089 = vrot.slane %v1474, 5
      %v2090 = vsel %vm1913, %v2088, %v2089
      %v2091 = vrot.slane %v2089, 4
      %v2092 = vrot.slane %v1475, 5
      %v2093 = vsel %vm1913, %v2091, %v2092
      %v2094 = vunpack.c.l.b16 %v1422
      %v2095 = vunpack.c.l.b16 %v1423
      %v2096 = vunpack.c.l.b16 %v1425
      %v2097 = vunpack.c.l.b16 %v1426
      %v2098 = vunpack.c.l.b16 %v1428
      %v2099 = vunpack.c.l.b16 %v1429
      %v2100 = vunpack.c.l.b16 %v1431
      %v2101 = vunpack.c.l.b16 %v1432
      %v2102 = vunpack.c.l.b16 %v1434
      %v2103 = vunpack.c.l.b16 %v1435
      %v2104 = vunpack.c.l.b16 %v1437
      %v2105 = vunpack.c.l.b16 %v1438
      %v2106 = vunpack.c.l.b16 %v1440
      %v2107 = vunpack.c.l.b16 %v1441
      %v2108 = vunpack.c.l.b16 %v1443
      %v2109 = vunpack.c.l.b16 %v1444
      %v2110 = vunpack.c.l.b16 %v1446
      %v2111 = vunpack.c.l.b16 %v1447
      %v2112 = vunpack.c.l.b16 %v1449
      %v2113 = vunpack.c.l.b16 %v1450
      %v2114 = vunpack.c.l.b16 %v1452
      %v2115 = vunpack.c.l.b16 %v1453
      %v2116 = vunpack.c.l.b16 %v1455
      %v2117 = vunpack.c.l.b16 %v1456
      %v2118 = vunpack.c.l.b16 %v1458
      %v2119 = vunpack.c.l.b16 %v1459
      %v2120 = vunpack.c.l.b16 %v1461
      %v2121 = vunpack.c.l.b16 %v1462
      %v2122 = vunpack.c.l.b16 %v1464
      %v2123 = vunpack.c.l.b16 %v1465
      %v2124 = vunpack.c.l.b16 %v1467
      %v2125 = vunpack.c.l.b16 %v1468
      %v2126 = vpack.c.b16 %v2095, %v2094
      %v2127 = vpack.c.b16 %v2097, %v2096
      %v2128 = vpack.c.b16 %v2099, %v2098
      %v2129 = vpack.c.b16 %v2101, %v2100
      %v2130 = vpack.c.b16 %v2103, %v2102
      %v2131 = vpack.c.b16 %v2105, %v2104
      %v2132 = vpack.c.b16 %v2107, %v2106
      %v2133 = vpack.c.b16 %v2109, %v2108
      %v2134 = vpack.c.b16 %v2111, %v2110
      %v2135 = vpack.c.b16 %v2113, %v2112
      %v2136 = vpack.c.b16 %v2115, %v2114
      %v2137 = vpack.c.b16 %v2117, %v2116
      %v2138 = vpack.c.b16 %v2119, %v2118
      %v2139 = vpack.c.b16 %v2121, %v2120
      %v2140 = vpack.c.b16 %v2123, %v2122
      %v2141 = vpack.c.b16 %v2125, %v2124
      %v2142 = vunpack.c.l.b16 %v1492
      %v2143 = vunpack.c.l.b16 %v1502
      %v2144 = vunpack.c.l.b16 %v1516
      %v2145 = vunpack.c.l.b16 %v1526
      %v2146 = vunpack.c.l.b16 %v1540
      %v2147 = vunpack.c.l.b16 %v1550
      %v2148 = vunpack.c.l.b16 %v1564
      %v2149 = vunpack.c.l.b16 %v1574
      %v2150 = vunpack.c.l.b16 %v1588
      %v2151 = vunpack.c.l.b16 %v1598
      %v2152 = vunpack.c.l.b16 %v1612
      %v2153 = vunpack.c.l.b16 %v1622
      %v2154 = vunpack.c.l.b16 %v1636
      %v2155 = vunpack.c.l.b16 %v1646
      %v2156 = vunpack.c.l.b16 %v1660
      %v2157 = vunpack.c.l.b16 %v1670
      %v2158 = vunpack.c.l.b16 %v1684
      %v2159 = vunpack.c.l.b16 %v1694
      %v2160 = vunpack.c.l.b16 %v1708
      %v2161 = vunpack.c.l.b16 %v1718
      %v2162 = vunpack.c.l.b16 %v1732
      %v2163 = vunpack.c.l.b16 %v1742
      %v2164 = vunpack.c.l.b16 %v1756
      %v2165 = vunpack.c.l.b16 %v1766
      %v2166 = vunpack.c.l.b16 %v1780
      %v2167 = vunpack.c.l.b16 %v1790
      %v2168 = vunpack.c.l.b16 %v1804
      %v2169 = vunpack.c.l.b16 %v1814
      %v2170 = vunpack.c.l.b16 %v1828
      %v2171 = vunpack.c.l.b16 %v1838
      %v2172 = vunpack.c.l.b16 %v1852
      %v2173 = vunpack.c.l.b16 %v1862
      %v2174 = vpack.c.b16 %v2143, %v2142
      %v2175 = vpack.c.b16 %v2145, %v2144
      %v2176 = vpack.c.b16 %v2147, %v2146
      %v2177 = vpack.c.b16 %v2149, %v2148
      %v2178 = vpack.c.b16 %v2151, %v2150
      %v2179 = vpack.c.b16 %v2153, %v2152
      %v2180 = vpack.c.b16 %v2155, %v2154
      %v2181 = vpack.c.b16 %v2157, %v2156
      %v2182 = vpack.c.b16 %v2159, %v2158
      %v2183 = vpack.c.b16 %v2161, %v2160
      %v2184 = vpack.c.b16 %v2163, %v2162
      %v2185 = vpack.c.b16 %v2165, %v2164
      %v2186 = vpack.c.b16 %v2167, %v2166
      %v2187 = vpack.c.b16 %v2169, %v2168
      %v2188 = vpack.c.b16 %v2171, %v2170
      %v2189 = vpack.c.b16 %v2173, %v2172
      %2190 = vrot.lane.b32.xlu0 %v2174, 8
      %v2191 = vpop.permute.xlu0 %2190
      %2192 = vrot.lane.b32.xlu0 %v2175, 8
      %v2193 = vpop.permute.xlu0 %2192
      %2194 = vrot.lane.b32.xlu0 %v2176, 8
      %v2195 = vpop.permute.xlu0 %2194
      %2196 = vrot.lane.b32.xlu0 %v2177, 8
      %v2197 = vpop.permute.xlu0 %2196
      %2198 = vrot.lane.b32.xlu0 %v2178, 8
      %v2199 = vpop.permute.xlu0 %2198
      %2200 = vrot.lane.b32.xlu0 %v2179, 8
      %v2201 = vpop.permute.xlu0 %2200
      %2202 = vrot.lane.b32.xlu0 %v2180, 8
      %v2203 = vpop.permute.xlu0 %2202
      %2204 = vrot.lane.b32.xlu0 %v2181, 8
      %v2205 = vpop.permute.xlu0 %2204
      %2206 = vrot.lane.b32.xlu0 %v2182, 8
      %v2207 = vpop.permute.xlu0 %2206
      %2208 = vrot.lane.b32.xlu0 %v2183, 8
      %v2209 = vpop.permute.xlu0 %2208
      %2210 = vrot.lane.b32.xlu0 %v2184, 8
      %v2211 = vpop.permute.xlu0 %2210
      %2212 = vrot.lane.b32.xlu0 %v2185, 8
      %v2213 = vpop.permute.xlu0 %2212
      %2214 = vrot.lane.b32.xlu0 %v2186, 8
      %v2215 = vpop.permute.xlu0 %2214
      %2216 = vrot.lane.b32.xlu0 %v2187, 8
      %v2217 = vpop.permute.xlu0 %2216
      %2218 = vrot.lane.b32.xlu0 %v2188, 8
      %v2219 = vpop.permute.xlu0 %2218
      %2220 = vrot.lane.b32.xlu0 %v2189, 8
      %v2221 = vpop.permute.xlu0 %2220
      %v2222 = vunpack.c.l.b16 %v1917
      %v2223 = vunpack.c.l.b16 %v1920
      %v2224 = vunpack.c.l.b16 %v1924
      %v2225 = vunpack.c.l.b16 %v1927
      %v2226 = vunpack.c.l.b16 %v1931
      %v2227 = vunpack.c.l.b16 %v1934
      %v2228 = vunpack.c.l.b16 %v1938
      %v2229 = vunpack.c.l.b16 %v1941
      %v2230 = vunpack.c.l.b16 %v1945
      %v2231 = vunpack.c.l.b16 %v1948
      %v2232 = vunpack.c.l.b16 %v1952
      %v2233 = vunpack.c.l.b16 %v1955
      %v2234 = vunpack.c.l.b16 %v1959
      %v2235 = vunpack.c.l.b16 %v1962
      %v2236 = vunpack.c.l.b16 %v1966
      %v2237 = vunpack.c.l.b16 %v1969
      %v2238 = vunpack.c.l.b16 %v1973
      %v2239 = vunpack.c.l.b16 %v1976
      %v2240 = vunpack.c.l.b16 %v1980
      %v2241 = vunpack.c.l.b16 %v1983
      %v2242 = vunpack.c.l.b16 %v1987
      %v2243 = vunpack.c.l.b16 %v1990
      %v2244 = vunpack.c.l.b16 %v1994
      %v2245 = vunpack.c.l.b16 %v1997
      %v2246 = vunpack.c.l.b16 %v2001
      %v2247 = vunpack.c.l.b16 %v2004
      %v2248 = vunpack.c.l.b16 %v2008
      %v2249 = vunpack.c.l.b16 %v2011
      %v2250 = vunpack.c.l.b16 %v2015
      %v2251 = vunpack.c.l.b16 %v2018
      %v2252 = vunpack.c.l.b16 %v2022
      %v2253 = vunpack.c.l.b16 %v2025
      %v2254 = vpack.c.b16 %v2223, %v2222
      %v2255 = vpack.c.b16 %v2225, %v2224
      %v2256 = vpack.c.b16 %v2227, %v2226
      %v2257 = vpack.c.b16 %v2229, %v2228
      %v2258 = vpack.c.b16 %v2231, %v2230
      %v2259 = vpack.c.b16 %v2233, %v2232
      %v2260 = vpack.c.b16 %v2235, %v2234
      %v2261 = vpack.c.b16 %v2237, %v2236
      %v2262 = vpack.c.b16 %v2239, %v2238
      %v2263 = vpack.c.b16 %v2241, %v2240
      %v2264 = vpack.c.b16 %v2243, %v2242
      %v2265 = vpack.c.b16 %v2245, %v2244
      %v2266 = vpack.c.b16 %v2247, %v2246
      %v2267 = vpack.c.b16 %v2249, %v2248
      %v2268 = vpack.c.b16 %v2251, %v2250
      %v2269 = vpack.c.b16 %v2253, %v2252
      %2270 = vrot.lane.b32.xlu0 %v2254, 16
      %v2271 = vpop.permute.xlu0 %2270
      %2272 = vrot.lane.b32.xlu0 %v2255, 16
      %v2273 = vpop.permute.xlu0 %2272
      %2274 = vrot.lane.b32.xlu0 %v2256, 16
      %v2275 = vpop.permute.xlu0 %2274
      %2276 = vrot.lane.b32.xlu0 %v2257, 16
      %v2277 = vpop.permute.xlu0 %2276
      %2278 = vrot.lane.b32.xlu0 %v2258, 16
      %v2279 = vpop.permute.xlu0 %2278
      %2280 = vrot.lane.b32.xlu0 %v2259, 16
      %v2281 = vpop.permute.xlu0 %2280
      %2282 = vrot.lane.b32.xlu0 %v2260, 16
      %v2283 = vpop.permute.xlu0 %2282
      %2284 = vrot.lane.b32.xlu0 %v2261, 16
      %v2285 = vpop.permute.xlu0 %2284
      %2286 = vrot.lane.b32.xlu0 %v2262, 16
      %v2287 = vpop.permute.xlu0 %2286
      %2288 = vrot.lane.b32.xlu0 %v2263, 16
      %v2289 = vpop.permute.xlu0 %2288
      %2290 = vrot.lane.b32.xlu0 %v2264, 16
      %v2291 = vpop.permute.xlu0 %2290
      %2292 = vrot.lane.b32.xlu0 %v2265, 16
      %v2293 = vpop.permute.xlu0 %2292
      %2294 = vrot.lane.b32.xlu0 %v2266, 16
      %v2295 = vpop.permute.xlu0 %2294
      %2296 = vrot.lane.b32.xlu0 %v2267, 16
      %v2297 = vpop.permute.xlu0 %2296
      %2298 = vrot.lane.b32.xlu0 %v2268, 16
      %v2299 = vpop.permute.xlu0 %2298
      %2300 = vrot.lane.b32.xlu0 %v2269, 16
      %v2301 = vpop.permute.xlu0 %2300
      %v2302 = vunpack.c.l.b16 %v1470
      %v2303 = vunpack.c.l.b16 %v1471
      %v2304 = vpack.c.b16 %v2303, %v2302
      %2305 = vrot.lane.b32.xlu0 %v2127, 24
      %v2306 = vpop.permute.xlu0 %2305
      %2307 = vrot.lane.b32.xlu0 %v2128, 24
      %v2308 = vpop.permute.xlu0 %2307
      %2309 = vrot.lane.b32.xlu0 %v2129, 24
      %v2310 = vpop.permute.xlu0 %2309
      %2311 = vrot.lane.b32.xlu0 %v2130, 24
      %v2312 = vpop.permute.xlu0 %2311
      %2313 = vrot.lane.b32.xlu0 %v2131, 24
      %v2314 = vpop.permute.xlu0 %2313
      %2315 = vrot.lane.b32.xlu0 %v2132, 24
      %v2316 = vpop.permute.xlu0 %2315
      %2317 = vrot.lane.b32.xlu0 %v2133, 24
      %v2318 = vpop.permute.xlu0 %2317
      %2319 = vrot.lane.b32.xlu0 %v2134, 24
      %v2320 = vpop.permute.xlu0 %2319
      %2321 = vrot.lane.b32.xlu0 %v2135, 24
      %v2322 = vpop.permute.xlu0 %2321
      %2323 = vrot.lane.b32.xlu0 %v2136, 24
      %v2324 = vpop.permute.xlu0 %2323
      %2325 = vrot.lane.b32.xlu0 %v2137, 24
      %v2326 = vpop.permute.xlu0 %2325
      %2327 = vrot.lane.b32.xlu0 %v2138, 24
      %v2328 = vpop.permute.xlu0 %2327
      %2329 = vrot.lane.b32.xlu0 %v2139, 24
      %v2330 = vpop.permute.xlu0 %2329
      %2331 = vrot.lane.b32.xlu0 %v2140, 24
      %v2332 = vpop.permute.xlu0 %2331
      %2333 = vrot.lane.b32.xlu0 %v2141, 24
      %v2334 = vpop.permute.xlu0 %2333
      %2335 = vrot.lane.b32.xlu0 %v2304, 24
      %v2336 = vpop.permute.xlu0 %2335
      %v2337 = vunpack.c.l.b16 %v2039
      %v2338 = vunpack.c.l.b16 %v2049
      %v2339 = vpack.c.b16 %v2338, %v2337
      %2340 = vrot.lane.b32.xlu0 %v2175, 32
      %v2341 = vpop.permute.xlu0 %2340
      %2342 = vrot.lane.b32.xlu0 %v2176, 32
      %v2343 = vpop.permute.xlu0 %2342
      %2344 = vrot.lane.b32.xlu0 %v2177, 32
      %v2345 = vpop.permute.xlu0 %2344
      %2346 = vrot.lane.b32.xlu0 %v2178, 32
      %v2347 = vpop.permute.xlu0 %2346
      %2348 = vrot.lane.b32.xlu0 %v2179, 32
      %v2349 = vpop.permute.xlu0 %2348
      %2350 = vrot.lane.b32.xlu0 %v2180, 32
      %v2351 = vpop.permute.xlu0 %2350
      %2352 = vrot.lane.b32.xlu0 %v2181, 32
      %v2353 = vpop.permute.xlu0 %2352
      %2354 = vrot.lane.b32.xlu0 %v2182, 32
      %v2355 = vpop.permute.xlu0 %2354
      %2356 = vrot.lane.b32.xlu0 %v2183, 32
      %v2357 = vpop.permute.xlu0 %2356
      %2358 = vrot.lane.b32.xlu0 %v2184, 32
      %v2359 = vpop.permute.xlu0 %2358
      %2360 = vrot.lane.b32.xlu0 %v2185, 32
      %v2361 = vpop.permute.xlu0 %2360
      %2362 = vrot.lane.b32.xlu0 %v2186, 32
      %v2363 = vpop.permute.xlu0 %2362
      %2364 = vrot.lane.b32.xlu0 %v2187, 32
      %v2365 = vpop.permute.xlu0 %2364
      %2366 = vrot.lane.b32.xlu0 %v2188, 32
      %v2367 = vpop.permute.xlu0 %2366
      %2368 = vrot.lane.b32.xlu0 %v2189, 32
      %v2369 = vpop.permute.xlu0 %2368
      %2370 = vrot.lane.b32.xlu0 %v2339, 32
      %v2371 = vpop.permute.xlu0 %2370
      %v2372 = vunpack.c.l.b16 %v2056
      %v2373 = vunpack.c.l.b16 %v2059
      %v2374 = vpack.c.b16 %v2373, %v2372
      %2375 = vrot.lane.b32.xlu0 %v2255, 40
      %v2376 = vpop.permute.xlu0 %2375
      %2377 = vrot.lane.b32.xlu0 %v2256, 40
      %v2378 = vpop.permute.xlu0 %2377
      %2379 = vrot.lane.b32.xlu0 %v2257, 40
      %v2380 = vpop.permute.xlu0 %2379
      %2381 = vrot.lane.b32.xlu0 %v2258, 40
      %v2382 = vpop.permute.xlu0 %2381
      %2383 = vrot.lane.b32.xlu0 %v2259, 40
      %v2384 = vpop.permute.xlu0 %2383
      %2385 = vrot.lane.b32.xlu0 %v2260, 40
      %v2386 = vpop.permute.xlu0 %2385
      %2387 = vrot.lane.b32.xlu0 %v2261, 40
      %v2388 = vpop.permute.xlu0 %2387
      %2389 = vrot.lane.b32.xlu0 %v2262, 40
      %v2390 = vpop.permute.xlu0 %2389
      %2391 = vrot.lane.b32.xlu0 %v2263, 40
      %v2392 = vpop.permute.xlu0 %2391
      %2393 = vrot.lane.b32.xlu0 %v2264, 40
      %v2394 = vpop.permute.xlu0 %2393
      %2395 = vrot.lane.b32.xlu0 %v2265, 40
      %v2396 = vpop.permute.xlu0 %2395
      %2397 = vrot.lane.b32.xlu0 %v2266, 40
      %v2398 = vpop.permute.xlu0 %2397
      %2399 = vrot.lane.b32.xlu0 %v2267, 40
      %v2400 = vpop.permute.xlu0 %2399
      %2401 = vrot.lane.b32.xlu0 %v2268, 40
      %v2402 = vpop.permute.xlu0 %2401
      %2403 = vrot.lane.b32.xlu0 %v2269, 40
      %v2404 = vpop.permute.xlu0 %2403
      %2405 = vrot.lane.b32.xlu0 %v2374, 40
      %v2406 = vpop.permute.xlu0 %2405
      %v2407 = vunpack.c.l.b16 %v1473
      %v2408 = vunpack.c.l.b16 %v1474
      %v2409 = vpack.c.b16 %v2408, %v2407
      %2410 = vrot.lane.b32.xlu0 %v2128, 48
      %v2411 = vpop.permute.xlu0 %2410
      %2412 = vrot.lane.b32.xlu0 %v2129, 48
      %v2413 = vpop.permute.xlu0 %2412
      %2414 = vrot.lane.b32.xlu0 %v2130, 48
      %v2415 = vpop.permute.xlu0 %2414
      %2416 = vrot.lane.b32.xlu0 %v2131, 48
      %v2417 = vpop.permute.xlu0 %2416
      %2418 = vrot.lane.b32.xlu0 %v2132, 48
      %v2419 = vpop.permute.xlu0 %2418
      %2420 = vrot.lane.b32.xlu0 %v2133, 48
      %v2421 = vpop.permute.xlu0 %2420
      %2422 = vrot.lane.b32.xlu0 %v2134, 48
      %v2423 = vpop.permute.xlu0 %2422
      %2424 = vrot.lane.b32.xlu0 %v2135, 48
      %v2425 = vpop.permute.xlu0 %2424
      %2426 = vrot.lane.b32.xlu0 %v2136, 48
      %v2427 = vpop.permute.xlu0 %2426
      %2428 = vrot.lane.b32.xlu0 %v2137, 48
      %v2429 = vpop.permute.xlu0 %2428
      %2430 = vrot.lane.b32.xlu0 %v2138, 48
      %v2431 = vpop.permute.xlu0 %2430
      %2432 = vrot.lane.b32.xlu0 %v2139, 48
      %v2433 = vpop.permute.xlu0 %2432
      %2434 = vrot.lane.b32.xlu0 %v2140, 48
      %v2435 = vpop.permute.xlu0 %2434
      %2436 = vrot.lane.b32.xlu0 %v2141, 48
      %v2437 = vpop.permute.xlu0 %2436
      %2438 = vrot.lane.b32.xlu0 %v2304, 48
      %v2439 = vpop.permute.xlu0 %2438
      %2440 = vrot.lane.b32.xlu0 %v2409, 48
      %v2441 = vpop.permute.xlu0 %2440
      %v2442 = vunpack.c.l.b16 %v2073
      %v2443 = vunpack.c.l.b16 %v2083
      %v2444 = vpack.c.b16 %v2443, %v2442
      %2445 = vrot.lane.b32.xlu0 %v2176, 56
      %v2446 = vpop.permute.xlu0 %2445
      %2447 = vrot.lane.b32.xlu0 %v2177, 56
      %v2448 = vpop.permute.xlu0 %2447
      %2449 = vrot.lane.b32.xlu0 %v2178, 56
      %v2450 = vpop.permute.xlu0 %2449
      %2451 = vrot.lane.b32.xlu0 %v2179, 56
      %v2452 = vpop.permute.xlu0 %2451
      %2453 = vrot.lane.b32.xlu0 %v2180, 56
      %v2454 = vpop.permute.xlu0 %2453
      %2455 = vrot.lane.b32.xlu0 %v2181, 56
      %v2456 = vpop.permute.xlu0 %2455
      %2457 = vrot.lane.b32.xlu0 %v2182, 56
      %v2458 = vpop.permute.xlu0 %2457
      %2459 = vrot.lane.b32.xlu0 %v2183, 56
      %v2460 = vpop.permute.xlu0 %2459
      %2461 = vrot.lane.b32.xlu0 %v2184, 56
      %v2462 = vpop.permute.xlu0 %2461
      %2463 = vrot.lane.b32.xlu0 %v2185, 56
      %v2464 = vpop.permute.xlu0 %2463
      %2465 = vrot.lane.b32.xlu0 %v2186, 56
      %v2466 = vpop.permute.xlu0 %2465
      %2467 = vrot.lane.b32.xlu0 %v2187, 56
      %v2468 = vpop.permute.xlu0 %2467
      %2469 = vrot.lane.b32.xlu0 %v2188, 56
      %v2470 = vpop.permute.xlu0 %2469
      %2471 = vrot.lane.b32.xlu0 %v2189, 56
      %v2472 = vpop.permute.xlu0 %2471
      %2473 = vrot.lane.b32.xlu0 %v2339, 56
      %v2474 = vpop.permute.xlu0 %2473
      %2475 = vrot.lane.b32.xlu0 %v2444, 56
      %v2476 = vpop.permute.xlu0 %2475
      %v2477 = vunpack.c.l.b16 %v2090
      %v2478 = vunpack.c.l.b16 %v2093
      %v2479 = vpack.c.b16 %v2478, %v2477
      %2480 = vrot.lane.b32.xlu0 %v2256, 64
      %v2481 = vpop.permute.xlu0 %2480
      %2482 = vrot.lane.b32.xlu0 %v2257, 64
      %v2483 = vpop.permute.xlu0 %2482
      %2484 = vrot.lane.b32.xlu0 %v2258, 64
      %v2485 = vpop.permute.xlu0 %2484
      %2486 = vrot.lane.b32.xlu0 %v2259, 64
      %v2487 = vpop.permute.xlu0 %2486
      %2488 = vrot.lane.b32.xlu0 %v2260, 64
      %v2489 = vpop.permute.xlu0 %2488
      %2490 = vrot.lane.b32.xlu0 %v2261, 64
      %v2491 = vpop.permute.xlu0 %2490
      %2492 = vrot.lane.b32.xlu0 %v2262, 64
      %v2493 = vpop.permute.xlu0 %2492
      %2494 = vrot.lane.b32.xlu0 %v2263, 64
      %v2495 = vpop.permute.xlu0 %2494
      %2496 = vrot.lane.b32.xlu0 %v2264, 64
      %v2497 = vpop.permute.xlu0 %2496
      %2498 = vrot.lane.b32.xlu0 %v2265, 64
      %v2499 = vpop.permute.xlu0 %2498
      %2500 = vrot.lane.b32.xlu0 %v2266, 64
      %v2501 = vpop.permute.xlu0 %2500
      %2502 = vrot.lane.b32.xlu0 %v2267, 64
      %v2503 = vpop.permute.xlu0 %2502
      %2504 = vrot.lane.b32.xlu0 %v2268, 64
      %v2505 = vpop.permute.xlu0 %2504
      %2506 = vrot.lane.b32.xlu0 %v2269, 64
      %v2507 = vpop.permute.xlu0 %2506
      %2508 = vrot.lane.b32.xlu0 %v2374, 64
      %v2509 = vpop.permute.xlu0 %2508
      %2510 = vrot.lane.b32.xlu0 %v2479, 64
      %v2511 = vpop.permute.xlu0 %2510
      %vm2512 = vcmask 64512
      %v2515 = vsel %vm2512, %v2126, %v2191
      %v2518 = vsel %vm2512, %v2127, %v2193
      %v2521 = vsel %vm2512, %v2128, %v2195
      %v2524 = vsel %vm2512, %v2129, %v2197
      %v2527 = vsel %vm2512, %v2130, %v2199
      %v2530 = vsel %vm2512, %v2131, %v2201
      %v2533 = vsel %vm2512, %v2132, %v2203
      %v2536 = vsel %vm2512, %v2133, %v2205
      %v2539 = vsel %vm2512, %v2134, %v2207
      %v2542 = vsel %vm2512, %v2135, %v2209
      %v2545 = vsel %vm2512, %v2136, %v2211
      %v2548 = vsel %vm2512, %v2137, %v2213
      %v2551 = vsel %vm2512, %v2138, %v2215
      %v2554 = vsel %vm2512, %v2139, %v2217
      %v2557 = vsel %vm2512, %v2140, %v2219
      %v2560 = vsel %vm2512, %v2141, %v2221
      %vm2561 = vcmask 130048
      %v2563 = vsel %vm2561, %v2515, %v2271
      %v2565 = vsel %vm2561, %v2518, %v2273
      %v2567 = vsel %vm2561, %v2521, %v2275
      %v2569 = vsel %vm2561, %v2524, %v2277
      %v2571 = vsel %vm2561, %v2527, %v2279
      %v2573 = vsel %vm2561, %v2530, %v2281
      %v2575 = vsel %vm2561, %v2533, %v2283
      %v2577 = vsel %vm2561, %v2536, %v2285
      %v2579 = vsel %vm2561, %v2539, %v2287
      %v2581 = vsel %vm2561, %v2542, %v2289
      %v2583 = vsel %vm2561, %v2545, %v2291
      %v2585 = vsel %vm2561, %v2548, %v2293
      %v2587 = vsel %vm2561, %v2551, %v2295
      %v2589 = vsel %vm2561, %v2554, %v2297
      %v2591 = vsel %vm2561, %v2557, %v2299
      %v2593 = vsel %vm2561, %v2560, %v2301
      %vm2594 = vcmask 195584
      %v2596 = vsel %vm2594, %v2563, %v2306
      %v2598 = vsel %vm2594, %v2565, %v2308
      %v2600 = vsel %vm2594, %v2567, %v2310
      %v2602 = vsel %vm2594, %v2569, %v2312
      %v2604 = vsel %vm2594, %v2571, %v2314
      %v2606 = vsel %vm2594, %v2573, %v2316
      %v2608 = vsel %vm2594, %v2575, %v2318
      %v2610 = vsel %vm2594, %v2577, %v2320
      %v2612 = vsel %vm2594, %v2579, %v2322
      %v2614 = vsel %vm2594, %v2581, %v2324
      %v2616 = vsel %vm2594, %v2583, %v2326
      %v2618 = vsel %vm2594, %v2585, %v2328
      %v2620 = vsel %vm2594, %v2587, %v2330
      %v2622 = vsel %vm2594, %v2589, %v2332
      %v2624 = vsel %vm2594, %v2591, %v2334
      %v2626 = vsel %vm2594, %v2593, %v2336
      %vm2627 = vcmask 261120
      %v2629 = vsel %vm2627, %v2596, %v2341
      %v2631 = vsel %vm2627, %v2598, %v2343
      %v2633 = vsel %vm2627, %v2600, %v2345
      %v2635 = vsel %vm2627, %v2602, %v2347
      %v2637 = vsel %vm2627, %v2604, %v2349
      %v2639 = vsel %vm2627, %v2606, %v2351
      %v2641 = vsel %vm2627, %v2608, %v2353
      %v2643 = vsel %vm2627, %v2610, %v2355
      %v2645 = vsel %vm2627, %v2612, %v2357
      %v2647 = vsel %vm2627, %v2614, %v2359
      %v2649 = vsel %vm2627, %v2616, %v2361
      %v2651 = vsel %vm2627, %v2618, %v2363
      %v2653 = vsel %vm2627, %v2620, %v2365
      %v2655 = vsel %vm2627, %v2622, %v2367
      %v2657 = vsel %vm2627, %v2624, %v2369
      %v2659 = vsel %vm2627, %v2626, %v2371
      %vm2660 = vcmask 326656
      %v2662 = vsel %vm2660, %v2629, %v2376
      %v2664 = vsel %vm2660, %v2631, %v2378
      %v2666 = vsel %vm2660, %v2633, %v2380
      %v2668 = vsel %vm2660, %v2635, %v2382
      %v2670 = vsel %vm2660, %v2637, %v2384
      %v2672 = vsel %vm2660, %v2639, %v2386
      %v2674 = vsel %vm2660, %v2641, %v2388
      %v2676 = vsel %vm2660, %v2643, %v2390
      %v2678 = vsel %vm2660, %v2645, %v2392
      %v2680 = vsel %vm2660, %v2647, %v2394
      %v2682 = vsel %vm2660, %v2649, %v2396
      %v2684 = vsel %vm2660, %v2651, %v2398
      %v2686 = vsel %vm2660, %v2653, %v2400
      %v2688 = vsel %vm2660, %v2655, %v2402
      %v2690 = vsel %vm2660, %v2657, %v2404
      %v2692 = vsel %vm2660, %v2659, %v2406
      %vm2693 = vcmask 392192
      %v2695 = vsel %vm2693, %v2662, %v2411
      %v2697 = vsel %vm2693, %v2664, %v2413
      %v2699 = vsel %vm2693, %v2666, %v2415
      %v2701 = vsel %vm2693, %v2668, %v2417
      %v2703 = vsel %vm2693, %v2670, %v2419
      %v2705 = vsel %vm2693, %v2672, %v2421
      %v2707 = vsel %vm2693, %v2674, %v2423
      %v2709 = vsel %vm2693, %v2676, %v2425
      %v2711 = vsel %vm2693, %v2678, %v2427
      %v2713 = vsel %vm2693, %v2680, %v2429
      %v2715 = vsel %vm2693, %v2682, %v2431
      %v2717 = vsel %vm2693, %v2684, %v2433
      %v2719 = vsel %vm2693, %v2686, %v2435
      %v2721 = vsel %vm2693, %v2688, %v2437
      %v2723 = vsel %vm2693, %v2690, %v2439
      %v2725 = vsel %vm2693, %v2692, %v2441
      %vm2726 = vcmask 457728
      %v2728 = vsel %vm2726, %v2695, %v2446
      %v2730 = vsel %vm2726, %v2697, %v2448
      %v2732 = vsel %vm2726, %v2699, %v2450
      %v2734 = vsel %vm2726, %v2701, %v2452
      %v2736 = vsel %vm2726, %v2703, %v2454
      %v2738 = vsel %vm2726, %v2705, %v2456
      %v2740 = vsel %vm2726, %v2707, %v2458
      %v2742 = vsel %vm2726, %v2709, %v2460
      %v2744 = vsel %vm2726, %v2711, %v2462
      %v2746 = vsel %vm2726, %v2713, %v2464
      %v2748 = vsel %vm2726, %v2715, %v2466
      %v2750 = vsel %vm2726, %v2717, %v2468
      %v2752 = vsel %vm2726, %v2719, %v2470
      %v2754 = vsel %vm2726, %v2721, %v2472
      %v2756 = vsel %vm2726, %v2723, %v2474
      %v2758 = vsel %vm2726, %v2725, %v2476
      %vm2759 = vcmask 523264
      %v2761 = vsel %vm2759, %v2728, %v2481
      %v2763 = vsel %vm2759, %v2730, %v2483
      %v2765 = vsel %vm2759, %v2732, %v2485
      %v2767 = vsel %vm2759, %v2734, %v2487
      %v2769 = vsel %vm2759, %v2736, %v2489
      %v2771 = vsel %vm2759, %v2738, %v2491
      %v2773 = vsel %vm2759, %v2740, %v2493
      %v2775 = vsel %vm2759, %v2742, %v2495
      %v2777 = vsel %vm2759, %v2744, %v2497
      %v2779 = vsel %vm2759, %v2746, %v2499
      %v2781 = vsel %vm2759, %v2748, %v2501
      %v2783 = vsel %vm2759, %v2750, %v2503
      %v2785 = vsel %vm2759, %v2752, %v2505
      %v2787 = vsel %vm2759, %v2754, %v2507
      %v2789 = vsel %vm2759, %v2756, %v2509
      %v2791 = vsel %vm2759, %v2758, %v2511
      %v2792 = vld [vmem:[%s2] sm:$0xf]
      %v2793 = vld [vmem:[%s2 + $0x4] sm:$0xf]
      %v2794 = vld [vmem:[%s2 + $0x8] sm:$0xf]
      %v2795 = vld [vmem:[%s2 + $0xc] sm:$0xf]
      %v2796 = vld [vmem:[%s2 + $0x10] sm:$0xf]
      %v2797 = vld [vmem:[%s2 + $0x14] sm:$0xf]
      %v2798 = vld [vmem:[%s2 + $0x18] sm:$0xf]
      %v2799 = vld [vmem:[%s2 + $0x1c] sm:$0xf]
      %v2800 = vld [vmem:[%s2 + $0x20] sm:$0xf]
      %v2810 = vunpack.c.l.b16 %v2792
      %v2811 = vunpack.c.l.b16 %v2793
      %v2812 = vunpack.c.l.b16 %v2794
      %v2813 = vunpack.c.l.b16 %v2795
      %v2814 = vunpack.c.l.b16 %v2796
      %v2815 = vunpack.c.l.b16 %v2797
      %v2816 = vunpack.c.l.b16 %v2798
      %v2817 = vunpack.c.l.b16 %v2799
      %v2818 = vunpack.c.l.b16 %v2800
      %v2819 = vpack.c.b16 %v2811, %v2810
      %v2820 = vpack.c.b16 %v2813, %v2812
      %v2821 = vpack.c.b16 %v2815, %v2814
      %v2822 = vpack.c.b16 %v2817, %v2816
      %v2823 = vpack.c.b16 %v2818, %v2818
      %vm2828 = vcmask 588800
      %v2829 = vsel %vm2828, %v2761, 0
      %v2831 = vsel %vm2828, %v2763, 0
      %v2833 = vsel %vm2828, %v2765, 0
      %v2835 = vsel %vm2828, %v2767, 0
      %v2837 = vsel %vm2828, %v2769, 0
      %v2839 = vsel %vm2828, %v2771, 0
      %v2841 = vsel %vm2828, %v2773, 0
      %v2843 = vsel %vm2828, %v2775, 0
      %v2845 = vsel %vm2828, %v2777, 0
      %v2847 = vsel %vm2828, %v2779, 0
      %v2849 = vsel %vm2828, %v2781, 0
      %v2851 = vsel %vm2828, %v2783, 0
      %v2853 = vsel %vm2828, %v2785, 0
      %v2855 = vsel %vm2828, %v2787, 0
      %v2857 = vsel %vm2828, %v2789, 0
      %v2859 = vsel %vm2828, %v2791, 0
      %vm2861 = vcmask 1043456
      %v2863 = vsel %vm2861, %v2823, 0
      %2865 = vmatprep.subr.bf16.mxu0 0
      %2866 = vmatpush1.bf16.msra.mxu0 %v2819
      %2867 = vmatprep.subr.bf16.mxu0 0
      %2868 = vmatpush1.bf16.msra.mxu0 %v2820
      %2869 = vmatprep.subr.bf16.mxu0 0
      %2870 = vmatpush1.bf16.msra.mxu0 %v2821
      %2871 = vmatprep.subr.bf16.mxu0 0
      %2872 = vmatpush1.bf16.msra.mxu0 %v2822
      %2873 = vmatprep.subr.bf16.mxu0 0
      %2874 = vmatpush1.bf16.msra.mxu0 %v2863
      %2875 = vmatprep.subr.bf16.mxu0 0
      %2876 = vmatpush1.bf16.msra.mxu0 0
      %2877 = vmatprep.subr.bf16.mxu0 0
      %2878 = vmatpush1.bf16.msra.mxu0 0
      %2879 = vmatprep.subr.bf16.mxu0 0
      %2880 = vmatpush1.bf16.msra.mxu0 0
      %2881 = vmatprep.subr.bf16.mxu0 0
      %2882 = vmatpush1.bf16.msra.mxu0 0
      %2883 = vmatprep.subr.bf16.mxu0 0
      %2884 = vmatpush1.bf16.msra.mxu0 0
      %2885 = vmatprep.subr.bf16.mxu0 0
      %2886 = vmatpush1.bf16.msra.mxu0 0
      %2887 = vmatprep.subr.bf16.mxu0 0
      %2888 = vmatpush1.bf16.msra.mxu0 0
      %2889 = vmatprep.subr.bf16.mxu0 0
      %2890 = vmatpush1.bf16.msra.mxu0 0
      %2891 = vmatprep.subr.bf16.mxu0 0
      %2892 = vmatpush1.bf16.msra.mxu0 0
      %2893 = vmatprep.subr.bf16.mxu0 0
      %2894 = vmatpush1.bf16.msra.mxu0 0
      %2895 = vmatprep.subr.bf16.mxu0 0
      %2896 = vmatpush1.bf16.msra.mxu0 0
      %2897 = vmatprep.mubr.bf16.mxu0 0
      %2898 = vmatmul.mubr.bf16.gmra.mrb[0].mxu0 %v2829
      %v2899 = vpop.f32.mrb[0].mxu0
      %v2900 = vadd.f32 0.0, %v2899
      %v2901 = vpop.f32.mrb[0].mxu0
      %v2902 = vpop.f32.mrb[0].mxu0
      %v2903 = vadd.f32 0.0, %v2902
      %v2904 = vpop.f32.mrb[0].mxu0
      %2905 = vmatprep.mubr.bf16.mxu0 0
      %2906 = vmatmul.mubr.bf16.gmra.mrb[0].mxu0 %v2831
      %v2907 = vpop.f32.mrb[0].mxu0
      %v2908 = vadd.f32 0.0, %v2907
      %v2909 = vpop.f32.mrb[0].mxu0
      %v2910 = vpop.f32.mrb[0].mxu0
      %v2911 = vadd.f32 0.0, %v2910
      %v2912 = vpop.f32.mrb[0].mxu0
      %2913 = vmatprep.mubr.bf16.mxu0 0
      %2914 = vmatmul.mubr.bf16.gmra.mrb[0].mxu0 %v2833
      %v2915 = vpop.f32.mrb[0].mxu0
      %v2916 = vadd.f32 0.0, %v2915
      %v2917 = vpop.f32.mrb[0].mxu0
      %v2918 = vpop.f32.mrb[0].mxu0
      %v2919 = vadd.f32 0.0, %v2918
      %v2920 = vpop.f32.mrb[0].mxu0
      %2921 = vmatprep.mubr.bf16.mxu0 0
      %2922 = vmatmul.mubr.bf16.gmra.mrb[0].mxu0 %v2835
      %v2923 = vpop.f32.mrb[0].mxu0
      %v2924 = vadd.f32 0.0, %v2923
      %v2925 = vpop.f32.mrb[0].mxu0
      %v2926 = vpop.f32.mrb[0].mxu0
      %v2927 = vadd.f32 0.0, %v2926
      %v2928 = vpop.f32.mrb[0].mxu0
      %2929 = vmatprep.mubr.bf16.mxu0 0
      %2930 = vmatmul.mubr.bf16.gmra.mrb[0].mxu0 %v2837
      %v2931 = vpop.f32.mrb[0].mxu0
      %v2932 = vadd.f32 0.0, %v2931
      %v2933 = vpop.f32.mrb[0].mxu0
      %v2934 = vpop.f32.mrb[0].mxu0
      %v2935 = vadd.f32 0.0, %v2934
      %v2936 = vpop.f32.mrb[0].mxu0
      %2937 = vmatprep.mubr.bf16.mxu0 0
      %2938 = vmatmul.mubr.bf16.gmra.mrb[0].mxu0 %v2839
      %v2939 = vpop.f32.mrb[0].mxu0
      %v2940 = vadd.f32 0.0, %v2939
      %v2941 = vpop.f32.mrb[0].mxu0
      %v2942 = vpop.f32.mrb[0].mxu0
      %v2943 = vadd.f32 0.0, %v2942
      %v2944 = vpop.f32.mrb[0].mxu0
      %2945 = vmatprep.mubr.bf16.mxu0 0
      %2946 = vmatmul.mubr.bf16.gmra.mrb[0].mxu0 %v2841
      %v2947 = vpop.f32.mrb[0].mxu0
      %v2948 = vadd.f32 0.0, %v2947
      %v2949 = vpop.f32.mrb[0].mxu0
      %v2950 = vpop.f32.mrb[0].mxu0
      %v2951 = vadd.f32 0.0, %v2950
      %v2952 = vpop.f32.mrb[0].mxu0
      %2953 = vmatprep.mubr.bf16.mxu0 0
      %2954 = vmatmul.mubr.bf16.gmra.mrb[0].mxu0 %v2843
      %v2955 = vpop.f32.mrb[0].mxu0
      %v2956 = vadd.f32 0.0, %v2955
      %v2957 = vpop.f32.mrb[0].mxu0
      %v2958 = vpop.f32.mrb[0].mxu0
      %v2959 = vadd.f32 0.0, %v2958
      %v2960 = vpop.f32.mrb[0].mxu0
      %2961 = vmatprep.mubr.bf16.mxu0 0
      %2962 = vmatmul.mubr.bf16.gmra.mrb[0].mxu0 %v2845
      %v2963 = vpop.f32.mrb[0].mxu0
      %v2964 = vadd.f32 0.0, %v2963
      %v2965 = vpop.f32.mrb[0].mxu0
      %v2966 = vpop.f32.mrb[0].mxu0
      %v2967 = vadd.f32 0.0, %v2966
      %v2968 = vpop.f32.mrb[0].mxu0
      %2969 = vmatprep.mubr.bf16.mxu0 0
      %2970 = vmatmul.mubr.bf16.gmra.mrb[0].mxu0 %v2847
      %v2971 = vpop.f32.mrb[0].mxu0
      %v2972 = vadd.f32 0.0, %v2971
      %v2973 = vpop.f32.mrb[0].mxu0
      %v2974 = vpop.f32.mrb[0].mxu0
      %v2975 = vadd.f32 0.0, %v2974
      %v2976 = vpop.f32.mrb[0].mxu0
      %2977 = vmatprep.mubr.bf16.mxu0 0
      %2978 = vmatmul.mubr.bf16.gmra.mrb[0].mxu0 %v2849
      %v2979 = vpop.f32.mrb[0].mxu0
      %v2980 = vadd.f32 0.0, %v2979
      %v2981 = vpop.f32.mrb[0].mxu0
      %v2982 = vpop.f32.mrb[0].mxu0
      %v2983 = vadd.f32 0.0, %v2982
      %v2984 = vpop.f32.mrb[0].mxu0
      %2985 = vmatprep.mubr.bf16.mxu0 0
      %2986 = vmatmul.mubr.bf16.gmra.mrb[0].mxu0 %v2851
      %v2987 = vpop.f32.mrb[0].mxu0
      %v2988 = vadd.f32 0.0, %v2987
      %v2989 = vpop.f32.mrb[0].mxu0
      %v2990 = vpop.f32.mrb[0].mxu0
      %v2991 = vadd.f32 0.0, %v2990
      %v2992 = vpop.f32.mrb[0].mxu0
      %2993 = vmatprep.mubr.bf16.mxu0 0
      %2994 = vmatmul.mubr.bf16.gmra.mrb[0].mxu0 %v2853
      %v2995 = vpop.f32.mrb[0].mxu0
      %v2996 = vadd.f32 0.0, %v2995
      %v2997 = vpop.f32.mrb[0].mxu0
      %v2998 = vpop.f32.mrb[0].mxu0
      %v2999 = vadd.f32 0.0, %v2998
      %v3000 = vpop.f32.mrb[0].mxu0
      %3001 = vmatprep.mubr.bf16.mxu0 0
      %3002 = vmatmul.mubr.bf16.gmra.mrb[0].mxu0 %v2855
      %v3003 = vpop.f32.mrb[0].mxu0
      %v3004 = vadd.f32 0.0, %v3003
      %v3005 = vpop.f32.mrb[0].mxu0
      %v3006 = vpop.f32.mrb[0].mxu0
      %v3007 = vadd.f32 0.0, %v3006
      %v3008 = vpop.f32.mrb[0].mxu0
      %3009 = vmatprep.mubr.bf16.mxu0 0
      %3010 = vmatmul.mubr.bf16.gmra.mrb[0].mxu0 %v2857
      %v3011 = vpop.f32.mrb[0].mxu0
      %v3012 = vadd.f32 0.0, %v3011
      %v3013 = vpop.f32.mrb[0].mxu0
      %v3014 = vpop.f32.mrb[0].mxu0
      %v3015 = vadd.f32 0.0, %v3014
      %v3016 = vpop.f32.mrb[0].mxu0
      %3017 = vmatprep.mubr.bf16.mxu0 0
      %3018 = vmatmul.mubr.bf16.gmra.mrb[0].mxu0 %v2859
      %v3019 = vpop.f32.mrb[0].mxu0
      %v3020 = vadd.f32 0.0, %v3019
      %v3021 = vpop.f32.mrb[0].mxu0
      %v3022 = vpop.f32.mrb[0].mxu0
      %v3023 = vadd.f32 0.0, %v3022
      %v3024 = vpop.f32.mrb[0].mxu0
      %3025 = vdwg.mxu0
      %v3026 = vld [vmem:[%s3] sm:$0x1]
      %v3028 = vlaneseq
      %v3029 = vshrl.u32 %v3028, 7
      %v3030 = vsub.s32 0, %v3029
      %v3031 = vrot.slane %v3026, %v3030
      %v3033 = vmul.f32 %v2900, %v3031
      %v3034 = vmul.f32 %v2903, %v3031
      %v3035 = vmul.f32 %v2908, %v3031
      %v3036 = vmul.f32 %v2911, %v3031
      %v3037 = vmul.f32 %v2916, %v3031
      %v3038 = vmul.f32 %v2919, %v3031
      %v3039 = vmul.f32 %v2924, %v3031
      %v3040 = vmul.f32 %v2927, %v3031
      %v3041 = vmul.f32 %v2932, %v3031
      %v3042 = vmul.f32 %v2935, %v3031
      %v3043 = vmul.f32 %v2940, %v3031
      %v3044 = vmul.f32 %v2943, %v3031
      %v3045 = vmul.f32 %v2948, %v3031
      %v3046 = vmul.f32 %v2951, %v3031
      %v3047 = vmul.f32 %v2956, %v3031
      %v3048 = vmul.f32 %v2959, %v3031
      %v3049 = vmul.f32 %v2964, %v3031
      %v3050 = vmul.f32 %v2967, %v3031
      %v3051 = vmul.f32 %v2972, %v3031
      %v3052 = vmul.f32 %v2975, %v3031
      %v3053 = vmul.f32 %v2980, %v3031
      %v3054 = vmul.f32 %v2983, %v3031
      %v3055 = vmul.f32 %v2988, %v3031
      %v3056 = vmul.f32 %v2991, %v3031
      %v3057 = vmul.f32 %v2996, %v3031
      %v3058 = vmul.f32 %v2999, %v3031
      %v3059 = vmul.f32 %v3004, %v3031
      %v3060 = vmul.f32 %v3007, %v3031
      %v3061 = vmul.f32 %v3012, %v3031
      %v3062 = vmul.f32 %v3015, %v3031
      %v3063 = vmul.f32 %v3020, %v3031
      %v3064 = vmul.f32 %v3023, %v3031
      %v3065 = vld [vmem:[%s4] sm:$0x1]
      %v3067 = vlaneseq
      %v3068 = vshrl.u32 %v3067, 7
      %v3069 = vsub.s32 0, %v3068
      %v3070 = vrot.slane %v3065, %v3069
      %v3072 = vadd.f32 %v3033, %v3070
      %v3073 = vadd.f32 %v3034, %v3070
      %v3074 = vadd.f32 %v3035, %v3070
      %v3075 = vadd.f32 %v3036, %v3070
      %v3076 = vadd.f32 %v3037, %v3070
      %v3077 = vadd.f32 %v3038, %v3070
      %v3078 = vadd.f32 %v3039, %v3070
      %v3079 = vadd.f32 %v3040, %v3070
      %v3080 = vadd.f32 %v3041, %v3070
      %v3081 = vadd.f32 %v3042, %v3070
      %v3082 = vadd.f32 %v3043, %v3070
      %v3083 = vadd.f32 %v3044, %v3070
      %v3084 = vadd.f32 %v3045, %v3070
      %v3085 = vadd.f32 %v3046, %v3070
      %v3086 = vadd.f32 %v3047, %v3070
      %v3087 = vadd.f32 %v3048, %v3070
      %v3088 = vadd.f32 %v3049, %v3070
      %v3089 = vadd.f32 %v3050, %v3070
      %v3090 = vadd.f32 %v3051, %v3070
      %v3091 = vadd.f32 %v3052, %v3070
      %v3092 = vadd.f32 %v3053, %v3070
      %v3093 = vadd.f32 %v3054, %v3070
      %v3094 = vadd.f32 %v3055, %v3070
      %v3095 = vadd.f32 %v3056, %v3070
      %v3096 = vadd.f32 %v3057, %v3070
      %v3097 = vadd.f32 %v3058, %v3070
      %v3098 = vadd.f32 %v3059, %v3070
      %v3099 = vadd.f32 %v3060, %v3070
      %v3100 = vadd.f32 %v3061, %v3070
      %v3101 = vadd.f32 %v3062, %v3070
      %v3102 = vadd.f32 %v3063, %v3070
      %v3103 = vadd.f32 %v3064, %v3070
      %v3104 = vmax.f32 %v3072, 0.0
      %v3105 = vmax.f32 %v3073, 0.0
      %v3106 = vmax.f32 %v3074, 0.0
      %v3107 = vmax.f32 %v3075, 0.0
      %v3108 = vmax.f32 %v3076, 0.0
      %v3109 = vmax.f32 %v3077, 0.0
      %v3110 = vmax.f32 %v3078, 0.0
      %v3111 = vmax.f32 %v3079, 0.0
      %v3112 = vmax.f32 %v3080, 0.0
      %v3113 = vmax.f32 %v3081, 0.0
      %v3114 = vmax.f32 %v3082, 0.0
      %v3115 = vmax.f32 %v3083, 0.0
      %v3116 = vmax.f32 %v3084, 0.0
      %v3117 = vmax.f32 %v3085, 0.0
      %v3118 = vmax.f32 %v3086, 0.0
      %v3119 = vmax.f32 %v3087, 0.0
      %v3120 = vmax.f32 %v3088, 0.0
      %v3121 = vmax.f32 %v3089, 0.0
      %v3122 = vmax.f32 %v3090, 0.0
      %v3123 = vmax.f32 %v3091, 0.0
      %v3124 = vmax.f32 %v3092, 0.0
      %v3125 = vmax.f32 %v3093, 0.0
      %v3126 = vmax.f32 %v3094, 0.0
      %v3127 = vmax.f32 %v3095, 0.0
      %v3128 = vmax.f32 %v3096, 0.0
      %v3129 = vmax.f32 %v3097, 0.0
      %v3130 = vmax.f32 %v3098, 0.0
      %v3131 = vmax.f32 %v3099, 0.0
      %v3132 = vmax.f32 %v3100, 0.0
      %v3133 = vmax.f32 %v3101, 0.0
      %v3134 = vmax.f32 %v3102, 0.0
      %v3135 = vmax.f32 %v3103, 0.0
      %3136 = vst [vmem:[#allocation3] sm:$0xf] 0
      %3137 = vst [vmem:[#allocation3 + $0x4] sm:$0xf] 0
      %3138 = vst [vmem:[#allocation3 + $0x8] sm:$0x1] 0
      %3139 = vst [vmem:[#allocation3 + $0xc] sm:$0xf] 0
      %3140 = vst [vmem:[#allocation3 + $0x10] sm:$0xf] 0
      %3141 = vst [vmem:[#allocation3 + $0x14] sm:$0x1] 0
      %3142 = vst [vmem:[#allocation3 + $0x18] sm:$0xf] 0
      %3143 = vst [vmem:[#allocation3 + $0x1c] sm:$0xf] 0
      %3144 = vst [vmem:[#allocation3 + $0x20] sm:$0x1] 0
      %3145 = vst [vmem:[#allocation3 + $0x24] sm:$0xf] 0
      %3146 = vst [vmem:[#allocation3 + $0x28] sm:$0xf] 0
      %3147 = vst [vmem:[#allocation3 + $0x2c] sm:$0x1] 0
      %3148 = vst [vmem:[#allocation3 + $0x30] sm:$0xf] 0
      %3149 = vst [vmem:[#allocation3 + $0x34] sm:$0xf] 0
      %3150 = vst [vmem:[#allocation3 + $0x38] sm:$0x1] 0
      %3151 = vst [vmem:[#allocation3 + $0x3c] sm:$0xf] 0
      %3152 = vst [vmem:[#allocation3 + $0x40] sm:$0xf] 0
      %3153 = vst [vmem:[#allocation3 + $0x44] sm:$0x1] 0
      %3154 = vst [vmem:[#allocation3 + $0x48] sm:$0xf] 0
      %3155 = vst [vmem:[#allocation3 + $0x4c] sm:$0xf] 0
      %3156 = vst [vmem:[#allocation3 + $0x50] sm:$0x1] 0
      %3157 = vst [vmem:[#allocation3 + $0x54] sm:$0xf] 0
      %3158 = vst [vmem:[#allocation3 + $0x58] sm:$0xf] 0
      %3159 = vst [vmem:[#allocation3 + $0x5c] sm:$0x1] 0
      %3160 = vst [vmem:[#allocation3 + $0x60] sm:$0xf] 0
      %3161 = vst [vmem:[#allocation3 + $0x64] sm:$0xf] 0
      %3162 = vst [vmem:[#allocation3 + $0x68] sm:$0x1] 0
      %3163 = vst [vmem:[#allocation3 + $0x6c] sm:$0xf] 0
      %3164 = vst [vmem:[#allocation3 + $0x70] sm:$0xf] 0
      %3165 = vst [vmem:[#allocation3 + $0x74] sm:$0x1] 0
      %3166 = vst [vmem:[#allocation3 + $0x78] sm:$0xf] 0
      %3167 = vst [vmem:[#allocation3 + $0x7c] sm:$0xf] 0
      %3168 = vst [vmem:[#allocation3 + $0x80] sm:$0x1] 0
      %3169 = vst [vmem:[#allocation3 + $0x84] sm:$0xf] 0
      %3170 = vst [vmem:[#allocation3 + $0x88] sm:$0xf] 0
      %3171 = vst [vmem:[#allocation3 + $0x8c] sm:$0x1] 0
      %3172 = vst [vmem:[#allocation3 + $0x90] sm:$0xf] 0
      %3173 = vst [vmem:[#allocation3 + $0x94] sm:$0xf] 0
      %3174 = vst [vmem:[#allocation3 + $0x98] sm:$0x1] 0
      %3175 = vst [vmem:[#allocation3 + $0x9c] sm:$0xf] 0
      %3176 = vst [vmem:[#allocation3 + $0xa0] sm:$0xf] 0
      %3177 = vst [vmem:[#allocation3 + $0xa4] sm:$0x1] 0
      %3178 = vst [vmem:[#allocation3 + $0xa8] sm:$0xf] 0
      %3179 = vst [vmem:[#allocation3 + $0xac] sm:$0xf] 0
      %3180 = vst [vmem:[#allocation3 + $0xb0] sm:$0x1] 0
      %3181 = vst [vmem:[#allocation3 + $0xb4] sm:$0xf] 0
      %3182 = vst [vmem:[#allocation3 + $0xb8] sm:$0xf] 0
      %3183 = vst [vmem:[#allocation3 + $0xbc] sm:$0x1] 0
      %3184 = vst [vmem:[#allocation3 + $0xc0] sm:$0xf] 0
      %3185 = vst [vmem:[#allocation3 + $0xc4] sm:$0xf] 0
      %3186 = vst [vmem:[#allocation3 + $0xc8] sm:$0x1] 0
      %3187 = vst [vmem:[#allocation3 + $0xcc] sm:$0xf] 0
      %3188 = vst [vmem:[#allocation3 + $0xd0] sm:$0xf] 0
      %3189 = vst [vmem:[#allocation3 + $0xd4] sm:$0x1] 0
      %v3190 = vpack.c.bf16 %v3105, %v3104
      %v3191 = vpack.c.bf16 %v3107, %v3106
      %v3192 = vpack.c.bf16 %v3109, %v3108
      %v3193 = vpack.c.bf16 %v3111, %v3110
      %v3194 = vpack.c.bf16 %v3113, %v3112
      %v3195 = vpack.c.bf16 %v3115, %v3114
      %v3196 = vpack.c.bf16 %v3117, %v3116
      %v3197 = vpack.c.bf16 %v3119, %v3118
      %v3198 = vpack.c.bf16 %v3121, %v3120
      %v3199 = vpack.c.bf16 %v3123, %v3122
      %v3200 = vpack.c.bf16 %v3125, %v3124
      %v3201 = vpack.c.bf16 %v3127, %v3126
      %v3202 = vpack.c.bf16 %v3129, %v3128
      %v3203 = vpack.c.bf16 %v3131, %v3130
      %v3204 = vpack.c.bf16 %v3133, %v3132
      %v3205 = vpack.c.bf16 %v3135, %v3134
      %v3222 = vunpack.c.l.b16 %v3190
      %v3223 = vunpack.c.h.b16 %v3190
      %v3224 = vunpack.c.l.b16 %v3191
      %v3225 = vunpack.c.h.b16 %v3191
      %v3226 = vunpack.c.l.b16 %v3192
      %v3227 = vunpack.c.h.b16 %v3192
      %v3228 = vunpack.c.l.b16 %v3193
      %v3229 = vunpack.c.h.b16 %v3193
      %v3230 = vunpack.c.l.b16 %v3194
      %v3231 = vunpack.c.h.b16 %v3194
      %v3232 = vunpack.c.l.b16 %v3195
      %v3233 = vunpack.c.h.b16 %v3195
      %v3234 = vunpack.c.l.b16 %v3196
      %v3235 = vunpack.c.h.b16 %v3196
      %v3236 = vunpack.c.l.b16 %v3197
      %v3237 = vunpack.c.h.b16 %v3197
      %v3238 = vunpack.c.l.b16 %v3198
      %v3239 = vunpack.c.h.b16 %v3198
      %v3240 = vunpack.c.l.b16 %v3199
      %v3241 = vunpack.c.h.b16 %v3199
      %v3242 = vunpack.c.l.b16 %v3200
      %v3243 = vunpack.c.h.b16 %v3200
      %v3244 = vunpack.c.l.b16 %v3201
      %v3245 = vunpack.c.h.b16 %v3201
      %v3246 = vunpack.c.l.b16 %v3202
      %v3247 = vunpack.c.h.b16 %v3202
      %v3248 = vunpack.c.l.b16 %v3203
      %v3249 = vunpack.c.h.b16 %v3203
      %v3250 = vunpack.c.l.b16 %v3204
      %v3251 = vunpack.c.h.b16 %v3204
      %v3252 = vunpack.c.l.b16 %v3205
      %v3253 = vunpack.c.h.b16 %v3205
      %v3254 = vpack.c.b16 %v3222, %v3222
      %v3255 = vpack.c.b16 %v3223, %v3223
      %v3256 = vpack.c.b16 %v3224, %v3224
      %v3257 = vpack.c.b16 %v3225, %v3225
      %v3258 = vpack.c.b16 %v3226, %v3226
      %v3259 = vpack.c.b16 %v3227, %v3227
      %v3260 = vpack.c.b16 %v3228, %v3228
      %v3261 = vpack.c.b16 %v3229, %v3229
      %v3262 = vpack.c.b16 %v3230, %v3230
      %v3263 = vpack.c.b16 %v3231, %v3231
      %v3264 = vpack.c.b16 %v3232, %v3232
      %v3265 = vpack.c.b16 %v3233, %v3233
      %v3266 = vpack.c.b16 %v3234, %v3234
      %v3267 = vpack.c.b16 %v3235, %v3235
      %v3268 = vpack.c.b16 %v3236, %v3236
      %v3269 = vpack.c.b16 %v3237, %v3237
      %v3270 = vpack.c.b16 %v3238, %v3238
      %v3271 = vpack.c.b16 %v3239, %v3239
      %v3272 = vpack.c.b16 %v3240, %v3240
      %v3273 = vpack.c.b16 %v3241, %v3241
      %v3274 = vpack.c.b16 %v3242, %v3242
      %v3275 = vpack.c.b16 %v3243, %v3243
      %v3276 = vpack.c.b16 %v3244, %v3244
      %v3277 = vpack.c.b16 %v3245, %v3245
      %v3278 = vpack.c.b16 %v3246, %v3246
      %v3279 = vpack.c.b16 %v3247, %v3247
      %v3280 = vpack.c.b16 %v3248, %v3248
      %v3281 = vpack.c.b16 %v3249, %v3249
      %v3282 = vpack.c.b16 %v3250, %v3250
      %v3283 = vpack.c.b16 %v3251, %v3251
      %v3284 = vpack.c.b16 %v3252, %v3252
      %v3285 = vpack.c.b16 %v3253, %v3253
      %v3287 = vshrl.u32 %v3254, 16
      %v3289 = vrot.slane %v3287, 7
      %v3290 = vshll.u32 %v3254, 16
      %v3292 = vor.u32 %v3289, %v3290
      %v3293 = vrot.slane %v3289, 4
      %v3295 = vshrl.u32 %v3255, 16
      %v3297 = vrot.slane %v3295, 7
      %v3298 = vshll.u32 %v3255, 16
      %v3300 = vor.u32 %v3297, %v3298
      %v3301 = vsel %vm417, %v3293, %v3300
      %v3302 = vrot.slane %v3297, 4
      %v3304 = vshrl.u32 %v3256, 16
      %v3306 = vrot.slane %v3304, 7
      %v3307 = vshll.u32 %v3256, 16
      %v3309 = vor.u32 %v3306, %v3307
      %v3310 = vrot.slane %v3306, 4
      %v3312 = vshrl.u32 %v3257, 16
      %v3314 = vrot.slane %v3312, 7
      %v3315 = vshll.u32 %v3257, 16
      %v3317 = vor.u32 %v3314, %v3315
      %v3318 = vsel %vm417, %v3310, %v3317
      %v3319 = vrot.slane %v3314, 4
      %v3321 = vshrl.u32 %v3258, 16
      %v3323 = vrot.slane %v3321, 7
      %v3324 = vshll.u32 %v3258, 16
      %v3326 = vor.u32 %v3323, %v3324
      %v3327 = vrot.slane %v3323, 4
      %v3329 = vshrl.u32 %v3259, 16
      %v3331 = vrot.slane %v3329, 7
      %v3332 = vshll.u32 %v3259, 16
      %v3334 = vor.u32 %v3331, %v3332
      %v3335 = vsel %vm417, %v3327, %v3334
      %v3336 = vrot.slane %v3331, 4
      %v3338 = vshrl.u32 %v3260, 16
      %v3340 = vrot.slane %v3338, 7
      %v3341 = vshll.u32 %v3260, 16
      %v3343 = vor.u32 %v3340, %v3341
      %v3344 = vrot.slane %v3340, 4
      %v3346 = vshrl.u32 %v3261, 16
      %v3348 = vrot.slane %v3346, 7
      %v3349 = vshll.u32 %v3261, 16
      %v3351 = vor.u32 %v3348, %v3349
      %v3352 = vsel %vm417, %v3344, %v3351
      %v3353 = vrot.slane %v3348, 4
      %v3355 = vshrl.u32 %v3262, 16
      %v3357 = vrot.slane %v3355, 7
      %v3358 = vshll.u32 %v3262, 16
      %v3360 = vor.u32 %v3357, %v3358
      %v3361 = vrot.slane %v3357, 4
      %v3363 = vshrl.u32 %v3263, 16
      %v3365 = vrot.slane %v3363, 7
      %v3366 = vshll.u32 %v3263, 16
      %v3368 = vor.u32 %v3365, %v3366
      %v3369 = vsel %vm417, %v3361, %v3368
      %v3370 = vrot.slane %v3365, 4
      %v3372 = vshrl.u32 %v3264, 16
      %v3374 = vrot.slane %v3372, 7
      %v3375 = vshll.u32 %v3264, 16
      %v3377 = vor.u32 %v3374, %v3375
      %v3378 = vrot.slane %v3374, 4
      %v3380 = vshrl.u32 %v3265, 16
      %v3382 = vrot.slane %v3380, 7
      %v3383 = vshll.u32 %v3265, 16
      %v3385 = vor.u32 %v3382, %v3383
      %v3386 = vsel %vm417, %v3378, %v3385
      %v3387 = vrot.slane %v3382, 4
      %v3389 = vshrl.u32 %v3266, 16
      %v3391 = vrot.slane %v3389, 7
      %v3392 = vshll.u32 %v3266, 16
      %v3394 = vor.u32 %v3391, %v3392
      %v3395 = vrot.slane %v3391, 4
      %v3397 = vshrl.u32 %v3267, 16
      %v3399 = vrot.slane %v3397, 7
      %v3400 = vshll.u32 %v3267, 16
      %v3402 = vor.u32 %v3399, %v3400
      %v3403 = vsel %vm417, %v3395, %v3402
      %v3404 = vrot.slane %v3399, 4
      %v3406 = vshrl.u32 %v3268, 16
      %v3408 = vrot.slane %v3406, 7
      %v3409 = vshll.u32 %v3268, 16
      %v3411 = vor.u32 %v3408, %v3409
      %v3412 = vrot.slane %v3408, 4
      %v3414 = vshrl.u32 %v3269, 16
      %v3416 = vrot.slane %v3414, 7
      %v3417 = vshll.u32 %v3269, 16
      %v3419 = vor.u32 %v3416, %v3417
      %v3420 = vsel %vm417, %v3412, %v3419
      %v3421 = vrot.slane %v3416, 4
      %v3423 = vshrl.u32 %v3270, 16
      %v3425 = vrot.slane %v3423, 7
      %v3426 = vshll.u32 %v3270, 16
      %v3428 = vor.u32 %v3425, %v3426
      %v3429 = vrot.slane %v3425, 4
      %v3431 = vshrl.u32 %v3271, 16
      %v3433 = vrot.slane %v3431, 7
      %v3434 = vshll.u32 %v3271, 16
      %v3436 = vor.u32 %v3433, %v3434
      %v3437 = vsel %vm417, %v3429, %v3436
      %v3438 = vrot.slane %v3433, 4
      %v3440 = vshrl.u32 %v3272, 16
      %v3442 = vrot.slane %v3440, 7
      %v3443 = vshll.u32 %v3272, 16
      %v3445 = vor.u32 %v3442, %v3443
      %v3446 = vrot.slane %v3442, 4
      %v3448 = vshrl.u32 %v3273, 16
      %v3450 = vrot.slane %v3448, 7
      %v3451 = vshll.u32 %v3273, 16
      %v3453 = vor.u32 %v3450, %v3451
      %v3454 = vsel %vm417, %v3446, %v3453
      %v3455 = vrot.slane %v3450, 4
      %v3457 = vshrl.u32 %v3274, 16
      %v3459 = vrot.slane %v3457, 7
      %v3460 = vshll.u32 %v3274, 16
      %v3462 = vor.u32 %v3459, %v3460
      %v3463 = vrot.slane %v3459, 4
      %v3465 = vshrl.u32 %v3275, 16
      %v3467 = vrot.slane %v3465, 7
      %v3468 = vshll.u32 %v3275, 16
      %v3470 = vor.u32 %v3467, %v3468
      %v3471 = vsel %vm417, %v3463, %v3470
      %v3472 = vrot.slane %v3467, 4
      %v3474 = vshrl.u32 %v3276, 16
      %v3476 = vrot.slane %v3474, 7
      %v3477 = vshll.u32 %v3276, 16
      %v3479 = vor.u32 %v3476, %v3477
      %v3480 = vrot.slane %v3476, 4
      %v3482 = vshrl.u32 %v3277, 16
      %v3484 = vrot.slane %v3482, 7
      %v3485 = vshll.u32 %v3277, 16
      %v3487 = vor.u32 %v3484, %v3485
      %v3488 = vsel %vm417, %v3480, %v3487
      %v3489 = vrot.slane %v3484, 4
      %v3491 = vshrl.u32 %v3278, 16
      %v3493 = vrot.slane %v3491, 7
      %v3494 = vshll.u32 %v3278, 16
      %v3496 = vor.u32 %v3493, %v3494
      %v3497 = vrot.slane %v3493, 4
      %v3499 = vshrl.u32 %v3279, 16
      %v3501 = vrot.slane %v3499, 7
      %v3502 = vshll.u32 %v3279, 16
      %v3504 = vor.u32 %v3501, %v3502
      %v3505 = vsel %vm417, %v3497, %v3504
      %v3506 = vrot.slane %v3501, 4
      %v3508 = vshrl.u32 %v3280, 16
      %v3510 = vrot.slane %v3508, 7
      %v3511 = vshll.u32 %v3280, 16
      %v3513 = vor.u32 %v3510, %v3511
      %v3514 = vrot.slane %v3510, 4
      %v3516 = vshrl.u32 %v3281, 16
      %v3518 = vrot.slane %v3516, 7
      %v3519 = vshll.u32 %v3281, 16
      %v3521 = vor.u32 %v3518, %v3519
      %v3522 = vsel %vm417, %v3514, %v3521
      %v3523 = vrot.slane %v3518, 4
      %v3525 = vshrl.u32 %v3282, 16
      %v3527 = vrot.slane %v3525, 7
      %v3528 = vshll.u32 %v3282, 16
      %v3530 = vor.u32 %v3527, %v3528
      %v3531 = vrot.slane %v3527, 4
      %v3533 = vshrl.u32 %v3283, 16
      %v3535 = vrot.slane %v3533, 7
      %v3536 = vshll.u32 %v3283, 16
      %v3538 = vor.u32 %v3535, %v3536
      %v3539 = vsel %vm417, %v3531, %v3538
      %v3540 = vrot.slane %v3535, 4
      %v3542 = vshrl.u32 %v3284, 16
      %v3544 = vrot.slane %v3542, 7
      %v3545 = vshll.u32 %v3284, 16
      %v3547 = vor.u32 %v3544, %v3545
      %v3548 = vrot.slane %v3544, 4
      %v3550 = vshrl.u32 %v3285, 16
      %v3552 = vrot.slane %v3550, 7
      %v3553 = vshll.u32 %v3285, 16
      %v3555 = vor.u32 %v3552, %v3553
      %v3556 = vsel %vm417, %v3548, %v3555
      %v3557 = vrot.slane %v3552, 4
      %s3606 = scalar_lea.vmem [#allocation3], 12
      %vm3607 = vcmask 1043456
      %vm3608 = vmand %vm3607, %vm740
      %v3609 = vld [vmem:[%s3606] sm:$0xf]
      %v3610 = vsel %vm3608, %v3292, %v3609
      %3611 = vst [vmem:[%s3606] sm:$0xf] %v3610
      %3612 = vst [vmem:[%s3606 + $0x4] sm:$0xf] %v3301
      %vm3613 = vcmask 1040384
      %vm3614 = vmand %vm3613, %vm415
      %v3615 = vld [vmem:[%s3606 + $0x8] sm:$0x1]
      %v3616 = vsel %vm3614, %v3302, %v3615
      %3617 = vst [vmem:[%s3606 + $0x8] sm:$0x1] %v3616
      %v3618 = vld [vmem:[%s3606 + $0xc] sm:$0xf]
      %v3619 = vsel %vm3608, %v3309, %v3618
      %3620 = vst [vmem:[%s3606 + $0xc] sm:$0xf] %v3619
      %3621 = vst [vmem:[%s3606 + $0x10] sm:$0xf] %v3318
      %v3622 = vld [vmem:[%s3606 + $0x14] sm:$0x1]
      %v3623 = vsel %vm3614, %v3319, %v3622
      %3624 = vst [vmem:[%s3606 + $0x14] sm:$0x1] %v3623
      %v3625 = vld [vmem:[%s3606 + $0x18] sm:$0xf]
      %v3626 = vsel %vm3608, %v3326, %v3625
      %3627 = vst [vmem:[%s3606 + $0x18] sm:$0xf] %v3626
      %3628 = vst [vmem:[%s3606 + $0x1c] sm:$0xf] %v3335
      %v3629 = vld [vmem:[%s3606 + $0x20] sm:$0x1]
      %v3630 = vsel %vm3614, %v3336, %v3629
      %3631 = vst [vmem:[%s3606 + $0x20] sm:$0x1] %v3630
      %v3632 = vld [vmem:[%s3606 + $0x24] sm:$0xf]
      %v3633 = vsel %vm3608, %v3343, %v3632
      %3634 = vst [vmem:[%s3606 + $0x24] sm:$0xf] %v3633
      %3635 = vst [vmem:[%s3606 + $0x28] sm:$0xf] %v3352
      %v3636 = vld [vmem:[%s3606 + $0x2c] sm:$0x1]
      %v3637 = vsel %vm3614, %v3353, %v3636
      %3638 = vst [vmem:[%s3606 + $0x2c] sm:$0x1] %v3637
      %v3639 = vld [vmem:[%s3606 + $0x30] sm:$0xf]
      %v3640 = vsel %vm3608, %v3360, %v3639
      %3641 = vst [vmem:[%s3606 + $0x30] sm:$0xf] %v3640
      %3642 = vst [vmem:[%s3606 + $0x34] sm:$0xf] %v3369
      %v3643 = vld [vmem:[%s3606 + $0x38] sm:$0x1]
      %v3644 = vsel %vm3614, %v3370, %v3643
      %3645 = vst [vmem:[%s3606 + $0x38] sm:$0x1] %v3644
      %v3646 = vld [vmem:[%s3606 + $0x3c] sm:$0xf]
      %v3647 = vsel %vm3608, %v3377, %v3646
      %3648 = vst [vmem:[%s3606 + $0x3c] sm:$0xf] %v3647
      %3649 = vst [vmem:[%s3606 + $0x40] sm:$0xf] %v3386
      %v3650 = vld [vmem:[%s3606 + $0x44] sm:$0x1]
      %v3651 = vsel %vm3614, %v3387, %v3650
      %3652 = vst [vmem:[%s3606 + $0x44] sm:$0x1] %v3651
      %v3653 = vld [vmem:[%s3606 + $0x48] sm:$0xf]
      %v3654 = vsel %vm3608, %v3394, %v3653
      %3655 = vst [vmem:[%s3606 + $0x48] sm:$0xf] %v3654
      %3656 = vst [vmem:[%s3606 + $0x4c] sm:$0xf] %v3403
      %v3657 = vld [vmem:[%s3606 + $0x50] sm:$0x1]
      %v3658 = vsel %vm3614, %v3404, %v3657
      %3659 = vst [vmem:[%s3606 + $0x50] sm:$0x1] %v3658
      %v3660 = vld [vmem:[%s3606 + $0x54] sm:$0xf]
      %v3661 = vsel %vm3608, %v3411, %v3660
      %3662 = vst [vmem:[%s3606 + $0x54] sm:$0xf] %v3661
      %3663 = vst [vmem:[%s3606 + $0x58] sm:$0xf] %v3420
      %v3664 = vld [vmem:[%s3606 + $0x5c] sm:$0x1]
      %v3665 = vsel %vm3614, %v3421, %v3664
      %3666 = vst [vmem:[%s3606 + $0x5c] sm:$0x1] %v3665
      %v3667 = vld [vmem:[%s3606 + $0x60] sm:$0xf]
      %v3668 = vsel %vm3608, %v3428, %v3667
      %3669 = vst [vmem:[%s3606 + $0x60] sm:$0xf] %v3668
      %3670 = vst [vmem:[%s3606 + $0x64] sm:$0xf] %v3437
      %v3671 = vld [vmem:[%s3606 + $0x68] sm:$0x1]
      %v3672 = vsel %vm3614, %v3438, %v3671
      %3673 = vst [vmem:[%s3606 + $0x68] sm:$0x1] %v3672
      %v3674 = vld [vmem:[%s3606 + $0x6c] sm:$0xf]
      %v3675 = vsel %vm3608, %v3445, %v3674
      %3676 = vst [vmem:[%s3606 + $0x6c] sm:$0xf] %v3675
      %3677 = vst [vmem:[%s3606 + $0x70] sm:$0xf] %v3454
      %v3678 = vld [vmem:[%s3606 + $0x74] sm:$0x1]
      %v3679 = vsel %vm3614, %v3455, %v3678
      %3680 = vst [vmem:[%s3606 + $0x74] sm:$0x1] %v3679
      %v3681 = vld [vmem:[%s3606 + $0x78] sm:$0xf]
      %v3682 = vsel %vm3608, %v3462, %v3681
      %3683 = vst [vmem:[%s3606 + $0x78] sm:$0xf] %v3682
      %3684 = vst [vmem:[%s3606 + $0x7c] sm:$0xf] %v3471
      %v3685 = vld [vmem:[%s3606 + $0x80] sm:$0x1]
      %v3686 = vsel %vm3614, %v3472, %v3685
      %3687 = vst [vmem:[%s3606 + $0x80] sm:$0x1] %v3686
      %v3688 = vld [vmem:[%s3606 + $0x84] sm:$0xf]
      %v3689 = vsel %vm3608, %v3479, %v3688
      %3690 = vst [vmem:[%s3606 + $0x84] sm:$0xf] %v3689
      %3691 = vst [vmem:[%s3606 + $0x88] sm:$0xf] %v3488
      %v3692 = vld [vmem:[%s3606 + $0x8c] sm:$0x1]
      %v3693 = vsel %vm3614, %v3489, %v3692
      %3694 = vst [vmem:[%s3606 + $0x8c] sm:$0x1] %v3693
      %v3695 = vld [vmem:[%s3606 + $0x90] sm:$0xf]
      %v3696 = vsel %vm3608, %v3496, %v3695
      %3697 = vst [vmem:[%s3606 + $0x90] sm:$0xf] %v3696
      %3698 = vst [vmem:[%s3606 + $0x94] sm:$0xf] %v3505
      %v3699 = vld [vmem:[%s3606 + $0x98] sm:$0x1]
      %v3700 = vsel %vm3614, %v3506, %v3699
      %3701 = vst [vmem:[%s3606 + $0x98] sm:$0x1] %v3700
      %v3702 = vld [vmem:[%s3606 + $0x9c] sm:$0xf]
      %v3703 = vsel %vm3608, %v3513, %v3702
      %3704 = vst [vmem:[%s3606 + $0x9c] sm:$0xf] %v3703
      %3705 = vst [vmem:[%s3606 + $0xa0] sm:$0xf] %v3522
      %v3706 = vld [vmem:[%s3606 + $0xa4] sm:$0x1]
      %v3707 = vsel %vm3614, %v3523, %v3706
      %3708 = vst [vmem:[%s3606 + $0xa4] sm:$0x1] %v3707
      %v3709 = vld [vmem:[%s3606 + $0xa8] sm:$0xf]
      %v3710 = vsel %vm3608, %v3530, %v3709
      %3711 = vst [vmem:[%s3606 + $0xa8] sm:$0xf] %v3710
      %3712 = vst [vmem:[%s3606 + $0xac] sm:$0xf] %v3539
      %v3713 = vld [vmem:[%s3606 + $0xb0] sm:$0x1]
      %v3714 = vsel %vm3614, %v3540, %v3713
      %3715 = vst [vmem:[%s3606 + $0xb0] sm:$0x1] %v3714
      %v3716 = vld [vmem:[%s3606 + $0xb4] sm:$0xf]
      %v3717 = vsel %vm3608, %v3547, %v3716
      %3718 = vst [vmem:[%s3606 + $0xb4] sm:$0xf] %v3717
      %3719 = vst [vmem:[%s3606 + $0xb8] sm:$0xf] %v3556
      %v3720 = vld [vmem:[%s3606 + $0xbc] sm:$0x1]
      %v3721 = vsel %vm3614, %v3557, %v3720
      %3722 = vst [vmem:[%s3606 + $0xbc] sm:$0x1] %v3721
      %v3723 = vld [vmem:[#allocation3] sm:$0xf]
      %v3724 = vld [vmem:[#allocation3 + $0x4] sm:$0xf]
      %v3725 = vld [vmem:[#allocation3 + $0x8] sm:$0x1]
      %v3726 = vld [vmem:[#allocation3 + $0xc] sm:$0xf]
      %v3727 = vld [vmem:[#allocation3 + $0x10] sm:$0xf]
      %v3728 = vld [vmem:[#allocation3 + $0x14] sm:$0x1]
      %v3729 = vld [vmem:[#allocation3 + $0x18] sm:$0xf]
      %v3730 = vld [vmem:[#allocation3 + $0x1c] sm:$0xf]
      %v3731 = vld [vmem:[#allocation3 + $0x20] sm:$0x1]
      %v3732 = vld [vmem:[#allocation3 + $0x24] sm:$0xf]
      %v3733 = vld [vmem:[#allocation3 + $0x28] sm:$0xf]
      %v3734 = vld [vmem:[#allocation3 + $0x2c] sm:$0x1]
      %v3735 = vld [vmem:[#allocation3 + $0x30] sm:$0xf]
      %v3736 = vld [vmem:[#allocation3 + $0x34] sm:$0xf]
      %v3737 = vld [vmem:[#allocation3 + $0x38] sm:$0x1]
      %v3738 = vld [vmem:[#allocation3 + $0x3c] sm:$0xf]
      %v3739 = vld [vmem:[#allocation3 + $0x40] sm:$0xf]
      %v3740 = vld [vmem:[#allocation3 + $0x44] sm:$0x1]
      %v3741 = vld [vmem:[#allocation3 + $0x48] sm:$0xf]
      %v3742 = vld [vmem:[#allocation3 + $0x4c] sm:$0xf]
      %v3743 = vld [vmem:[#allocation3 + $0x50] sm:$0x1]
      %v3744 = vld [vmem:[#allocation3 + $0x54] sm:$0xf]
      %v3745 = vld [vmem:[#allocation3 + $0x58] sm:$0xf]
      %v3746 = vld [vmem:[#allocation3 + $0x5c] sm:$0x1]
      %v3747 = vld [vmem:[#allocation3 + $0x60] sm:$0xf]
      %v3748 = vld [vmem:[#allocation3 + $0x64] sm:$0xf]
      %v3749 = vld [vmem:[#allocation3 + $0x68] sm:$0x1]
      %v3750 = vld [vmem:[#allocation3 + $0x6c] sm:$0xf]
      %v3751 = vld [vmem:[#allocation3 + $0x70] sm:$0xf]
      %v3752 = vld [vmem:[#allocation3 + $0x74] sm:$0x1]
      %v3753 = vld [vmem:[#allocation3 + $0x78] sm:$0xf]
      %v3754 = vld [vmem:[#allocation3 + $0x7c] sm:$0xf]
      %v3755 = vld [vmem:[#allocation3 + $0x80] sm:$0x1]
      %v3756 = vld [vmem:[#allocation3 + $0x84] sm:$0xf]
      %v3757 = vld [vmem:[#allocation3 + $0x88] sm:$0xf]
      %v3758 = vld [vmem:[#allocation3 + $0x8c] sm:$0x1]
      %v3759 = vld [vmem:[#allocation3 + $0x90] sm:$0xf]
      %v3760 = vld [vmem:[#allocation3 + $0x94] sm:$0xf]
      %v3761 = vld [vmem:[#allocation3 + $0x98] sm:$0x1]
      %v3762 = vld [vmem:[#allocation3 + $0x9c] sm:$0xf]
      %v3763 = vld [vmem:[#allocation3 + $0xa0] sm:$0xf]
      %v3764 = vld [vmem:[#allocation3 + $0xa4] sm:$0x1]
      %v3765 = vld [vmem:[#allocation3 + $0xa8] sm:$0xf]
      %v3766 = vld [vmem:[#allocation3 + $0xac] sm:$0xf]
      %v3767 = vld [vmem:[#allocation3 + $0xb0] sm:$0x1]
      %v3768 = vld [vmem:[#allocation3 + $0xb4] sm:$0xf]
      %v3769 = vld [vmem:[#allocation3 + $0xb8] sm:$0xf]
      %v3770 = vld [vmem:[#allocation3 + $0xbc] sm:$0x1]
      %v3771 = vld [vmem:[#allocation3 + $0xc0] sm:$0xf]
      %v3772 = vld [vmem:[#allocation3 + $0xc4] sm:$0xf]
      %v3773 = vld [vmem:[#allocation3 + $0xc8] sm:$0x1]
      %v3774 = vld [vmem:[#allocation3 + $0xcc] sm:$0xf]
      %v3775 = vld [vmem:[#allocation3 + $0xd0] sm:$0xf]
      %v3776 = vld [vmem:[#allocation3 + $0xd4] sm:$0x1]
      %v3778 = vshrl.u32 %v3723, 16
      %v3780 = vrot.slane %v3778, 4
      %v3781 = vshll.u32 %v3723, 16
      %v3783 = vrot.slane %v3781, 5
      %v3784 = vor.u32 %v3780, %v3783
      %v3785 = vrot.slane %v3784, 4
      %v3787 = vshll.u32 %v3724, 16
      %v3789 = vrot.slane %v3787, 5
      %v3790 = vsel %vm1478, %v3785, %v3789
      %v3791 = vshrl.u32 %v3724, 16
      %v3793 = vrot.slane %v3791, 4
      %v3794 = vor.u32 %v3793, %v3789
      %v3795 = vrot.slane %v3794, 4
      %v3797 = vshll.u32 %v3725, 16
      %v3799 = vrot.slane %v3797, 5
      %v3800 = vsel %vm1478, %v3795, %v3799
      %v3802 = vshrl.u32 %v3726, 16
      %v3804 = vrot.slane %v3802, 4
      %v3805 = vshll.u32 %v3726, 16
      %v3807 = vrot.slane %v3805, 5
      %v3808 = vor.u32 %v3804, %v3807
      %v3809 = vrot.slane %v3808, 4
      %v3811 = vshll.u32 %v3727, 16
      %v3813 = vrot.slane %v3811, 5
      %v3814 = vsel %vm1478, %v3809, %v3813
      %v3815 = vshrl.u32 %v3727, 16
      %v3817 = vrot.slane %v3815, 4
      %v3818 = vor.u32 %v3817, %v3813
      %v3819 = vrot.slane %v3818, 4
      %v3821 = vshll.u32 %v3728, 16
      %v3823 = vrot.slane %v3821, 5
      %v3824 = vsel %vm1478, %v3819, %v3823
      %v3826 = vshrl.u32 %v3729, 16
      %v3828 = vrot.slane %v3826, 4
      %v3829 = vshll.u32 %v3729, 16
      %v3831 = vrot.slane %v3829, 5
      %v3832 = vor.u32 %v3828, %v3831
      %v3833 = vrot.slane %v3832, 4
      %v3835 = vshll.u32 %v3730, 16
      %v3837 = vrot.slane %v3835, 5
      %v3838 = vsel %vm1478, %v3833, %v3837
      %v3839 = vshrl.u32 %v3730, 16
      %v3841 = vrot.slane %v3839, 4
      %v3842 = vor.u32 %v3841, %v3837
      %v3843 = vrot.slane %v3842, 4
      %v3845 = vshll.u32 %v3731, 16
      %v3847 = vrot.slane %v3845, 5
      %v3848 = vsel %vm1478, %v3843, %v3847
      %v3850 = vshrl.u32 %v3732, 16
      %v3852 = vrot.slane %v3850, 4
      %v3853 = vshll.u32 %v3732, 16
      %v3855 = vrot.slane %v3853, 5
      %v3856 = vor.u32 %v3852, %v3855
      %v3857 = vrot.slane %v3856, 4
      %v3859 = vshll.u32 %v3733, 16
      %v3861 = vrot.slane %v3859, 5
      %v3862 = vsel %vm1478, %v3857, %v3861
      %v3863 = vshrl.u32 %v3733, 16
      %v3865 = vrot.slane %v3863, 4
      %v3866 = vor.u32 %v3865, %v3861
      %v3867 = vrot.slane %v3866, 4
      %v3869 = vshll.u32 %v3734, 16
      %v3871 = vrot.slane %v3869, 5
      %v3872 = vsel %vm1478, %v3867, %v3871
      %v3874 = vshrl.u32 %v3735, 16
      %v3876 = vrot.slane %v3874, 4
      %v3877 = vshll.u32 %v3735, 16
      %v3879 = vrot.slane %v3877, 5
      %v3880 = vor.u32 %v3876, %v3879
      %v3881 = vrot.slane %v3880, 4
      %v3883 = vshll.u32 %v3736, 16
      %v3885 = vrot.slane %v3883, 5
      %v3886 = vsel %vm1478, %v3881, %v3885
      %v3887 = vshrl.u32 %v3736, 16
      %v3889 = vrot.slane %v3887, 4
      %v3890 = vor.u32 %v3889, %v3885
      %v3891 = vrot.slane %v3890, 4
      %v3893 = vshll.u32 %v3737, 16
      %v3895 = vrot.slane %v3893, 5
      %v3896 = vsel %vm1478, %v3891, %v3895
      %v3898 = vshrl.u32 %v3738, 16
      %v3900 = vrot.slane %v3898, 4
      %v3901 = vshll.u32 %v3738, 16
      %v3903 = vrot.slane %v3901, 5
      %v3904 = vor.u32 %v3900, %v3903
      %v3905 = vrot.slane %v3904, 4
      %v3907 = vshll.u32 %v3739, 16
      %v3909 = vrot.slane %v3907, 5
      %v3910 = vsel %vm1478, %v3905, %v3909
      %v3911 = vshrl.u32 %v3739, 16
      %v3913 = vrot.slane %v3911, 4
      %v3914 = vor.u32 %v3913, %v3909
      %v3915 = vrot.slane %v3914, 4
      %v3917 = vshll.u32 %v3740, 16
      %v3919 = vrot.slane %v3917, 5
      %v3920 = vsel %vm1478, %v3915, %v3919
      %v3922 = vshrl.u32 %v3741, 16
      %v3924 = vrot.slane %v3922, 4
      %v3925 = vshll.u32 %v3741, 16
      %v3927 = vrot.slane %v3925, 5
      %v3928 = vor.u32 %v3924, %v3927
      %v3929 = vrot.slane %v3928, 4
      %v3931 = vshll.u32 %v3742, 16
      %v3933 = vrot.slane %v3931, 5
      %v3934 = vsel %vm1478, %v3929, %v3933
      %v3935 = vshrl.u32 %v3742, 16
      %v3937 = vrot.slane %v3935, 4
      %v3938 = vor.u32 %v3937, %v3933
      %v3939 = vrot.slane %v3938, 4
      %v3941 = vshll.u32 %v3743, 16
      %v3943 = vrot.slane %v3941, 5
      %v3944 = vsel %vm1478, %v3939, %v3943
      %v3946 = vshrl.u32 %v3744, 16
      %v3948 = vrot.slane %v3946, 4
      %v3949 = vshll.u32 %v3744, 16
      %v3951 = vrot.slane %v3949, 5
      %v3952 = vor.u32 %v3948, %v3951
      %v3953 = vrot.slane %v3952, 4
      %v3955 = vshll.u32 %v3745, 16
      %v3957 = vrot.slane %v3955, 5
      %v3958 = vsel %vm1478, %v3953, %v3957
      %v3959 = vshrl.u32 %v3745, 16
      %v3961 = vrot.slane %v3959, 4
      %v3962 = vor.u32 %v3961, %v3957
      %v3963 = vrot.slane %v3962, 4
      %v3965 = vshll.u32 %v3746, 16
      %v3967 = vrot.slane %v3965, 5
      %v3968 = vsel %vm1478, %v3963, %v3967
      %v3970 = vshrl.u32 %v3747, 16
      %v3972 = vrot.slane %v3970, 4
      %v3973 = vshll.u32 %v3747, 16
      %v3975 = vrot.slane %v3973, 5
      %v3976 = vor.u32 %v3972, %v3975
      %v3977 = vrot.slane %v3976, 4
      %v3979 = vshll.u32 %v3748, 16
      %v3981 = vrot.slane %v3979, 5
      %v3982 = vsel %vm1478, %v3977, %v3981
      %v3983 = vshrl.u32 %v3748, 16
      %v3985 = vrot.slane %v3983, 4
      %v3986 = vor.u32 %v3985, %v3981
      %v3987 = vrot.slane %v3986, 4
      %v3989 = vshll.u32 %v3749, 16
      %v3991 = vrot.slane %v3989, 5
      %v3992 = vsel %vm1478, %v3987, %v3991
      %v3994 = vshrl.u32 %v3750, 16
      %v3996 = vrot.slane %v3994, 4
      %v3997 = vshll.u32 %v3750, 16
      %v3999 = vrot.slane %v3997, 5
      %v4000 = vor.u32 %v3996, %v3999
      %v4001 = vrot.slane %v4000, 4
      %v4003 = vshll.u32 %v3751, 16
      %v4005 = vrot.slane %v4003, 5
      %v4006 = vsel %vm1478, %v4001, %v4005
      %v4007 = vshrl.u32 %v3751, 16
      %v4009 = vrot.slane %v4007, 4
      %v4010 = vor.u32 %v4009, %v4005
      %v4011 = vrot.slane %v4010, 4
      %v4013 = vshll.u32 %v3752, 16
      %v4015 = vrot.slane %v4013, 5
      %v4016 = vsel %vm1478, %v4011, %v4015
      %v4018 = vshrl.u32 %v3753, 16
      %v4020 = vrot.slane %v4018, 4
      %v4021 = vshll.u32 %v3753, 16
      %v4023 = vrot.slane %v4021, 5
      %v4024 = vor.u32 %v4020, %v4023
      %v4025 = vrot.slane %v4024, 4
      %v4027 = vshll.u32 %v3754, 16
      %v4029 = vrot.slane %v4027, 5
      %v4030 = vsel %vm1478, %v4025, %v4029
      %v4031 = vshrl.u32 %v3754, 16
      %v4033 = vrot.slane %v4031, 4
      %v4034 = vor.u32 %v4033, %v4029
      %v4035 = vrot.slane %v4034, 4
      %v4037 = vshll.u32 %v3755, 16
      %v4039 = vrot.slane %v4037, 5
      %v4040 = vsel %vm1478, %v4035, %v4039
      %v4042 = vshrl.u32 %v3756, 16
      %v4044 = vrot.slane %v4042, 4
      %v4045 = vshll.u32 %v3756, 16
      %v4047 = vrot.slane %v4045, 5
      %v4048 = vor.u32 %v4044, %v4047
      %v4049 = vrot.slane %v4048, 4
      %v4051 = vshll.u32 %v3757, 16
      %v4053 = vrot.slane %v4051, 5
      %v4054 = vsel %vm1478, %v4049, %v4053
      %v4055 = vshrl.u32 %v3757, 16
      %v4057 = vrot.slane %v4055, 4
      %v4058 = vor.u32 %v4057, %v4053
      %v4059 = vrot.slane %v4058, 4
      %v4061 = vshll.u32 %v3758, 16
      %v4063 = vrot.slane %v4061, 5
      %v4064 = vsel %vm1478, %v4059, %v4063
      %v4066 = vshrl.u32 %v3759, 16
      %v4068 = vrot.slane %v4066, 4
      %v4069 = vshll.u32 %v3759, 16
      %v4071 = vrot.slane %v4069, 5
      %v4072 = vor.u32 %v4068, %v4071
      %v4073 = vrot.slane %v4072, 4
      %v4075 = vshll.u32 %v3760, 16
      %v4077 = vrot.slane %v4075, 5
      %v4078 = vsel %vm1478, %v4073, %v4077
      %v4079 = vshrl.u32 %v3760, 16
      %v4081 = vrot.slane %v4079, 4
      %v4082 = vor.u32 %v4081, %v4077
      %v4083 = vrot.slane %v4082, 4
      %v4085 = vshll.u32 %v3761, 16
      %v4087 = vrot.slane %v4085, 5
      %v4088 = vsel %vm1478, %v4083, %v4087
      %v4090 = vshrl.u32 %v3762, 16
      %v4092 = vrot.slane %v4090, 4
      %v4093 = vshll.u32 %v3762, 16
      %v4095 = vrot.slane %v4093, 5
      %v4096 = vor.u32 %v4092, %v4095
      %v4097 = vrot.slane %v4096, 4
      %v4099 = vshll.u32 %v3763, 16
      %v4101 = vrot.slane %v4099, 5
      %v4102 = vsel %vm1478, %v4097, %v4101
      %v4103 = vshrl.u32 %v3763, 16
      %v4105 = vrot.slane %v4103, 4
      %v4106 = vor.u32 %v4105, %v4101
      %v4107 = vrot.slane %v4106, 4
      %v4109 = vshll.u32 %v3764, 16
      %v4111 = vrot.slane %v4109, 5
      %v4112 = vsel %vm1478, %v4107, %v4111
      %v4114 = vshrl.u32 %v3765, 16
      %v4116 = vrot.slane %v4114, 4
      %v4117 = vshll.u32 %v3765, 16
      %v4119 = vrot.slane %v4117, 5
      %v4120 = vor.u32 %v4116, %v4119
      %v4121 = vrot.slane %v4120, 4
      %v4123 = vshll.u32 %v3766, 16
      %v4125 = vrot.slane %v4123, 5
      %v4126 = vsel %vm1478, %v4121, %v4125
      %v4127 = vshrl.u32 %v3766, 16
      %v4129 = vrot.slane %v4127, 4
      %v4130 = vor.u32 %v4129, %v4125
      %v4131 = vrot.slane %v4130, 4
      %v4133 = vshll.u32 %v3767, 16
      %v4135 = vrot.slane %v4133, 5
      %v4136 = vsel %vm1478, %v4131, %v4135
      %v4138 = vshrl.u32 %v3768, 16
      %v4140 = vrot.slane %v4138, 4
      %v4141 = vshll.u32 %v3768, 16
      %v4143 = vrot.slane %v4141, 5
      %v4144 = vor.u32 %v4140, %v4143
      %v4145 = vrot.slane %v4144, 4
      %v4147 = vshll.u32 %v3769, 16
      %v4149 = vrot.slane %v4147, 5
      %v4150 = vsel %vm1478, %v4145, %v4149
      %v4151 = vshrl.u32 %v3769, 16
      %v4153 = vrot.slane %v4151, 4
      %v4154 = vor.u32 %v4153, %v4149
      %v4155 = vrot.slane %v4154, 4
      %v4157 = vshll.u32 %v3770, 16
      %v4159 = vrot.slane %v4157, 5
      %v4160 = vsel %vm1478, %v4155, %v4159
      %v4209 = vrot.slane %v3723, 5
      %v4210 = vrot.slane %v4209, 4
      %v4211 = vrot.slane %v3724, 5
      %v4212 = vsel %vm1913, %v4210, %v4211
      %v4213 = vrot.slane %v4211, 4
      %v4214 = vrot.slane %v3725, 5
      %v4215 = vsel %vm1913, %v4213, %v4214
      %v4216 = vrot.slane %v3726, 5
      %v4217 = vrot.slane %v4216, 4
      %v4218 = vrot.slane %v3727, 5
      %v4219 = vsel %vm1913, %v4217, %v4218
      %v4220 = vrot.slane %v4218, 4
      %v4221 = vrot.slane %v3728, 5
      %v4222 = vsel %vm1913, %v4220, %v4221
      %v4223 = vrot.slane %v3729, 5
      %v4224 = vrot.slane %v4223, 4
      %v4225 = vrot.slane %v3730, 5
      %v4226 = vsel %vm1913, %v4224, %v4225
      %v4227 = vrot.slane %v4225, 4
      %v4228 = vrot.slane %v3731, 5
      %v4229 = vsel %vm1913, %v4227, %v4228
      %v4230 = vrot.slane %v3732, 5
      %v4231 = vrot.slane %v4230, 4
      %v4232 = vrot.slane %v3733, 5
      %v4233 = vsel %vm1913, %v4231, %v4232
      %v4234 = vrot.slane %v4232, 4
      %v4235 = vrot.slane %v3734, 5
      %v4236 = vsel %vm1913, %v4234, %v4235
      %v4237 = vrot.slane %v3735, 5
      %v4238 = vrot.slane %v4237, 4
      %v4239 = vrot.slane %v3736, 5
      %v4240 = vsel %vm1913, %v4238, %v4239
      %v4241 = vrot.slane %v4239, 4
      %v4242 = vrot.slane %v3737, 5
      %v4243 = vsel %vm1913, %v4241, %v4242
      %v4244 = vrot.slane %v3738, 5
      %v4245 = vrot.slane %v4244, 4
      %v4246 = vrot.slane %v3739, 5
      %v4247 = vsel %vm1913, %v4245, %v4246
      %v4248 = vrot.slane %v4246, 4
      %v4249 = vrot.slane %v3740, 5
      %v4250 = vsel %vm1913, %v4248, %v4249
      %v4251 = vrot.slane %v3741, 5
      %v4252 = vrot.slane %v4251, 4
      %v4253 = vrot.slane %v3742, 5
      %v4254 = vsel %vm1913, %v4252, %v4253
      %v4255 = vrot.slane %v4253, 4
      %v4256 = vrot.slane %v3743, 5
      %v4257 = vsel %vm1913, %v4255, %v4256
      %v4258 = vrot.slane %v3744, 5
      %v4259 = vrot.slane %v4258, 4
      %v4260 = vrot.slane %v3745, 5
      %v4261 = vsel %vm1913, %v4259, %v4260
      %v4262 = vrot.slane %v4260, 4
      %v4263 = vrot.slane %v3746, 5
      %v4264 = vsel %vm1913, %v4262, %v4263
      %v4265 = vrot.slane %v3747, 5
      %v4266 = vrot.slane %v4265, 4
      %v4267 = vrot.slane %v3748, 5
      %v4268 = vsel %vm1913, %v4266, %v4267
      %v4269 = vrot.slane %v4267, 4
      %v4270 = vrot.slane %v3749, 5
      %v4271 = vsel %vm1913, %v4269, %v4270
      %v4272 = vrot.slane %v3750, 5
      %v4273 = vrot.slane %v4272, 4
      %v4274 = vrot.slane %v3751, 5
      %v4275 = vsel %vm1913, %v4273, %v4274
      %v4276 = vrot.slane %v4274, 4
      %v4277 = vrot.slane %v3752, 5
      %v4278 = vsel %vm1913, %v4276, %v4277
      %v4279 = vrot.slane %v3753, 5
      %v4280 = vrot.slane %v4279, 4
      %v4281 = vrot.slane %v3754, 5
      %v4282 = vsel %vm1913, %v4280, %v4281
      %v4283 = vrot.slane %v4281, 4
      %v4284 = vrot.slane %v3755, 5
      %v4285 = vsel %vm1913, %v4283, %v4284
      %v4286 = vrot.slane %v3756, 5
      %v4287 = vrot.slane %v4286, 4
      %v4288 = vrot.slane %v3757, 5
      %v4289 = vsel %vm1913, %v4287, %v4288
      %v4290 = vrot.slane %v4288, 4
      %v4291 = vrot.slane %v3758, 5
      %v4292 = vsel %vm1913, %v4290, %v4291
      %v4293 = vrot.slane %v3759, 5
      %v4294 = vrot.slane %v4293, 4
      %v4295 = vrot.slane %v3760, 5
      %v4296 = vsel %vm1913, %v4294, %v4295
      %v4297 = vrot.slane %v4295, 4
      %v4298 = vrot.slane %v3761, 5
      %v4299 = vsel %vm1913, %v4297, %v4298
      %v4300 = vrot.slane %v3762, 5
      %v4301 = vrot.slane %v4300, 4
      %v4302 = vrot.slane %v3763, 5
      %v4303 = vsel %vm1913, %v4301, %v4302
      %v4304 = vrot.slane %v4302, 4
      %v4305 = vrot.slane %v3764, 5
      %v4306 = vsel %vm1913, %v4304, %v4305
      %v4307 = vrot.slane %v3765, 5
      %v4308 = vrot.slane %v4307, 4
      %v4309 = vrot.slane %v3766, 5
      %v4310 = vsel %vm1913, %v4308, %v4309
      %v4311 = vrot.slane %v4309, 4
      %v4312 = vrot.slane %v3767, 5
      %v4313 = vsel %vm1913, %v4311, %v4312
      %v4314 = vrot.slane %v3768, 5
      %v4315 = vrot.slane %v4314, 4
      %v4316 = vrot.slane %v3769, 5
      %v4317 = vsel %vm1913, %v4315, %v4316
      %v4318 = vrot.slane %v4316, 4
      %v4319 = vrot.slane %v3770, 5
      %v4320 = vsel %vm1913, %v4318, %v4319
      %v4322 = vshrl.u32 %v3771, 16
      %v4324 = vrot.slane %v4322, 4
      %v4325 = vshll.u32 %v3771, 16
      %v4327 = vrot.slane %v4325, 5
      %v4328 = vor.u32 %v4324, %v4327
      %v4329 = vrot.slane %v4328, 4
      %v4331 = vshll.u32 %v3772, 16
      %v4333 = vrot.slane %v4331, 5
      %v4334 = vsel %vm1478, %v4329, %v4333
      %v4335 = vshrl.u32 %v3772, 16
      %v4337 = vrot.slane %v4335, 4
      %v4338 = vor.u32 %v4337, %v4333
      %v4339 = vrot.slane %v4338, 4
      %v4341 = vshll.u32 %v3773, 16
      %v4343 = vrot.slane %v4341, 5
      %v4344 = vsel %vm1478, %v4339, %v4343
      %v4348 = vrot.slane %v3771, 5
      %v4349 = vrot.slane %v4348, 4
      %v4350 = vrot.slane %v3772, 5
      %v4351 = vsel %vm1913, %v4349, %v4350
      %v4352 = vrot.slane %v4350, 4
      %v4353 = vrot.slane %v3773, 5
      %v4354 = vsel %vm1913, %v4352, %v4353
      %v4356 = vshrl.u32 %v3774, 16
      %v4358 = vrot.slane %v4356, 4
      %v4359 = vshll.u32 %v3774, 16
      %v4361 = vrot.slane %v4359, 5
      %v4362 = vor.u32 %v4358, %v4361
      %v4363 = vrot.slane %v4362, 4
      %v4365 = vshll.u32 %v3775, 16
      %v4367 = vrot.slane %v4365, 5
      %v4368 = vsel %vm1478, %v4363, %v4367
      %v4369 = vshrl.u32 %v3775, 16
      %v4371 = vrot.slane %v4369, 4
      %v4372 = vor.u32 %v4371, %v4367
      %v4373 = vrot.slane %v4372, 4
      %v4375 = vshll.u32 %v3776, 16
      %v4377 = vrot.slane %v4375, 5
      %v4378 = vsel %vm1478, %v4373, %v4377
      %v4382 = vrot.slane %v3774, 5
      %v4383 = vrot.slane %v4382, 4
      %v4384 = vrot.slane %v3775, 5
      %v4385 = vsel %vm1913, %v4383, %v4384
      %v4386 = vrot.slane %v4384, 4
      %v4387 = vrot.slane %v3776, 5
      %v4388 = vsel %vm1913, %v4386, %v4387
      %v4389 = vunpack.c.l.b16 %v3723
      %v4390 = vunpack.c.l.b16 %v3724
      %v4391 = vunpack.c.l.b16 %v3726
      %v4392 = vunpack.c.l.b16 %v3727
      %v4393 = vunpack.c.l.b16 %v3729
      %v4394 = vunpack.c.l.b16 %v3730
      %v4395 = vunpack.c.l.b16 %v3732
      %v4396 = vunpack.c.l.b16 %v3733
      %v4397 = vunpack.c.l.b16 %v3735
      %v4398 = vunpack.c.l.b16 %v3736
      %v4399 = vunpack.c.l.b16 %v3738
      %v4400 = vunpack.c.l.b16 %v3739
      %v4401 = vunpack.c.l.b16 %v3741
      %v4402 = vunpack.c.l.b16 %v3742
      %v4403 = vunpack.c.l.b16 %v3744
      %v4404 = vunpack.c.l.b16 %v3745
      %v4405 = vunpack.c.l.b16 %v3747
      %v4406 = vunpack.c.l.b16 %v3748
      %v4407 = vunpack.c.l.b16 %v3750
      %v4408 = vunpack.c.l.b16 %v3751
      %v4409 = vunpack.c.l.b16 %v3753
      %v4410 = vunpack.c.l.b16 %v3754
      %v4411 = vunpack.c.l.b16 %v3756
      %v4412 = vunpack.c.l.b16 %v3757
      %v4413 = vunpack.c.l.b16 %v3759
      %v4414 = vunpack.c.l.b16 %v3760
      %v4415 = vunpack.c.l.b16 %v3762
      %v4416 = vunpack.c.l.b16 %v3763
      %v4417 = vunpack.c.l.b16 %v3765
      %v4418 = vunpack.c.l.b16 %v3766
      %v4419 = vunpack.c.l.b16 %v3768
      %v4420 = vunpack.c.l.b16 %v3769
      %v4421 = vpack.c.b16 %v4390, %v4389
      %v4422 = vpack.c.b16 %v4392, %v4391
      %v4423 = vpack.c.b16 %v4394, %v4393
      %v4424 = vpack.c.b16 %v4396, %v4395
      %v4425 = vpack.c.b16 %v4398, %v4397
      %v4426 = vpack.c.b16 %v4400, %v4399
      %v4427 = vpack.c.b16 %v4402, %v4401
      %v4428 = vpack.c.b16 %v4404, %v4403
      %v4429 = vpack.c.b16 %v4406, %v4405
      %v4430 = vpack.c.b16 %v4408, %v4407
      %v4431 = vpack.c.b16 %v4410, %v4409
      %v4432 = vpack.c.b16 %v4412, %v4411
      %v4433 = vpack.c.b16 %v4414, %v4413
      %v4434 = vpack.c.b16 %v4416, %v4415
      %v4435 = vpack.c.b16 %v4418, %v4417
      %v4436 = vpack.c.b16 %v4420, %v4419
      %v4453 = vunpack.c.l.b16 %v3790
      %v4454 = vunpack.c.l.b16 %v3800
      %v4455 = vunpack.c.l.b16 %v3814
      %v4456 = vunpack.c.l.b16 %v3824
      %v4457 = vunpack.c.l.b16 %v3838
      %v4458 = vunpack.c.l.b16 %v3848
      %v4459 = vunpack.c.l.b16 %v3862
      %v4460 = vunpack.c.l.b16 %v3872
      %v4461 = vunpack.c.l.b16 %v3886
      %v4462 = vunpack.c.l.b16 %v3896
      %v4463 = vunpack.c.l.b16 %v3910
      %v4464 = vunpack.c.l.b16 %v3920
      %v4465 = vunpack.c.l.b16 %v3934
      %v4466 = vunpack.c.l.b16 %v3944
      %v4467 = vunpack.c.l.b16 %v3958
      %v4468 = vunpack.c.l.b16 %v3968
      %v4469 = vunpack.c.l.b16 %v3982
      %v4470 = vunpack.c.l.b16 %v3992
      %v4471 = vunpack.c.l.b16 %v4006
      %v4472 = vunpack.c.l.b16 %v4016
      %v4473 = vunpack.c.l.b16 %v4030
      %v4474 = vunpack.c.l.b16 %v4040
      %v4475 = vunpack.c.l.b16 %v4054
      %v4476 = vunpack.c.l.b16 %v4064
      %v4477 = vunpack.c.l.b16 %v4078
      %v4478 = vunpack.c.l.b16 %v4088
      %v4479 = vunpack.c.l.b16 %v4102
      %v4480 = vunpack.c.l.b16 %v4112
      %v4481 = vunpack.c.l.b16 %v4126
      %v4482 = vunpack.c.l.b16 %v4136
      %v4483 = vunpack.c.l.b16 %v4150
      %v4484 = vunpack.c.l.b16 %v4160
      %v4485 = vpack.c.b16 %v4454, %v4453
      %v4486 = vpack.c.b16 %v4456, %v4455
      %v4487 = vpack.c.b16 %v4458, %v4457
      %v4488 = vpack.c.b16 %v4460, %v4459
      %v4489 = vpack.c.b16 %v4462, %v4461
      %v4490 = vpack.c.b16 %v4464, %v4463
      %v4491 = vpack.c.b16 %v4466, %v4465
      %v4492 = vpack.c.b16 %v4468, %v4467
      %v4493 = vpack.c.b16 %v4470, %v4469
      %v4494 = vpack.c.b16 %v4472, %v4471
      %v4495 = vpack.c.b16 %v4474, %v4473
      %v4496 = vpack.c.b16 %v4476, %v4475
      %v4497 = vpack.c.b16 %v4478, %v4477
      %v4498 = vpack.c.b16 %v4480, %v4479
      %v4499 = vpack.c.b16 %v4482, %v4481
      %v4500 = vpack.c.b16 %v4484, %v4483
      %v4517 = vunpack.c.l.b16 %v4212
      %v4518 = vunpack.c.l.b16 %v4215
      %v4519 = vunpack.c.l.b16 %v4219
      %v4520 = vunpack.c.l.b16 %v4222
      %v4521 = vunpack.c.l.b16 %v4226
      %v4522 = vunpack.c.l.b16 %v4229
      %v4523 = vunpack.c.l.b16 %v4233
      %v4524 = vunpack.c.l.b16 %v4236
      %v4525 = vunpack.c.l.b16 %v4240
      %v4526 = vunpack.c.l.b16 %v4243
      %v4527 = vunpack.c.l.b16 %v4247
      %v4528 = vunpack.c.l.b16 %v4250
      %v4529 = vunpack.c.l.b16 %v4254
      %v4530 = vunpack.c.l.b16 %v4257
      %v4531 = vunpack.c.l.b16 %v4261
      %v4532 = vunpack.c.l.b16 %v4264
      %v4533 = vunpack.c.l.b16 %v4268
      %v4534 = vunpack.c.l.b16 %v4271
      %v4535 = vunpack.c.l.b16 %v4275
      %v4536 = vunpack.c.l.b16 %v4278
      %v4537 = vunpack.c.l.b16 %v4282
      %v4538 = vunpack.c.l.b16 %v4285
      %v4539 = vunpack.c.l.b16 %v4289
      %v4540 = vunpack.c.l.b16 %v4292
      %v4541 = vunpack.c.l.b16 %v4296
      %v4542 = vunpack.c.l.b16 %v4299
      %v4543 = vunpack.c.l.b16 %v4303
      %v4544 = vunpack.c.l.b16 %v4306
      %v4545 = vunpack.c.l.b16 %v4310
      %v4546 = vunpack.c.l.b16 %v4313
      %v4547 = vunpack.c.l.b16 %v4317
      %v4548 = vunpack.c.l.b16 %v4320
      %v4549 = vpack.c.b16 %v4518, %v4517
      %v4550 = vpack.c.b16 %v4520, %v4519
      %v4551 = vpack.c.b16 %v4522, %v4521
      %v4552 = vpack.c.b16 %v4524, %v4523
      %v4553 = vpack.c.b16 %v4526, %v4525
      %v4554 = vpack.c.b16 %v4528, %v4527
      %v4555 = vpack.c.b16 %v4530, %v4529
      %v4556 = vpack.c.b16 %v4532, %v4531
      %v4557 = vpack.c.b16 %v4534, %v4533
      %v4558 = vpack.c.b16 %v4536, %v4535
      %v4559 = vpack.c.b16 %v4538, %v4537
      %v4560 = vpack.c.b16 %v4540, %v4539
      %v4561 = vpack.c.b16 %v4542, %v4541
      %v4562 = vpack.c.b16 %v4544, %v4543
      %v4563 = vpack.c.b16 %v4546, %v4545
      %v4564 = vpack.c.b16 %v4548, %v4547
      %v4581 = vunpack.c.l.b16 %v3771
      %v4582 = vunpack.c.l.b16 %v3772
      %v4583 = vpack.c.b16 %v4582, %v4581
      %v4585 = vunpack.c.l.b16 %v4334
      %v4586 = vunpack.c.l.b16 %v4344
      %v4587 = vpack.c.b16 %v4586, %v4585
      %v4589 = vunpack.c.l.b16 %v4351
      %v4590 = vunpack.c.l.b16 %v4354
      %v4591 = vpack.c.b16 %v4590, %v4589
      %v4593 = vunpack.c.l.b16 %v3774
      %v4594 = vunpack.c.l.b16 %v3775
      %v4595 = vpack.c.b16 %v4594, %v4593
      %v4597 = vunpack.c.l.b16 %v4368
      %v4598 = vunpack.c.l.b16 %v4378
      %v4599 = vpack.c.b16 %v4598, %v4597
      %v4601 = vunpack.c.l.b16 %v4385
      %v4602 = vunpack.c.l.b16 %v4388
      %v4603 = vpack.c.b16 %v4602, %v4601
      %v4605 = vld [vmem:[%s5] sm:$0xf]
      %v4606 = vld [vmem:[%s5 + $0x4] sm:$0xf]
      %v4607 = vld [vmem:[%s5 + $0x8] sm:$0xf]
      %v4608 = vld [vmem:[%s5 + $0xc] sm:$0xf]
      %v4609 = vld [vmem:[%s5 + $0x10] sm:$0xf]
      %v4610 = vld [vmem:[%s5 + $0x14] sm:$0xf]
      %v4611 = vld [vmem:[%s5 + $0x18] sm:$0xf]
      %v4612 = vld [vmem:[%s5 + $0x1c] sm:$0xf]
      %v4613 = vld [vmem:[%s5 + $0x20] sm:$0xf]
      %v4614 = vld [vmem:[%s5 + $0x24] sm:$0xf]
      %v4615 = vld [vmem:[%s5 + $0x28] sm:$0xf]
      %v4616 = vld [vmem:[%s5 + $0x2c] sm:$0xf]
      %v4617 = vld [vmem:[%s5 + $0x30] sm:$0xf]
      %v4618 = vld [vmem:[%s5 + $0x34] sm:$0xf]
      %v4619 = vld [vmem:[%s5 + $0x38] sm:$0xf]
      %v4620 = vld [vmem:[%s5 + $0x3c] sm:$0xf]
      %v4621 = vld [vmem:[%s5 + $0x40] sm:$0xf]
      %v4622 = vld [vmem:[%s5 + $0x44] sm:$0xf]
      %v4623 = vld [vmem:[%s5 + $0x48] sm:$0xf]
      %v4624 = vld [vmem:[%s5 + $0x4c] sm:$0xf]
      %v4625 = vld [vmem:[%s5 + $0x50] sm:$0xf]
      %v4626 = vld [vmem:[%s5 + $0x54] sm:$0xf]
      %v4627 = vld [vmem:[%s5 + $0x58] sm:$0xf]
      %v4628 = vld [vmem:[%s5 + $0x5c] sm:$0xf]
      %v4629 = vld [vmem:[%s5 + $0x60] sm:$0xf]
      %v4630 = vld [vmem:[%s5 + $0x64] sm:$0xf]
      %v4631 = vld [vmem:[%s5 + $0x68] sm:$0xf]
      %v4632 = vld [vmem:[%s5 + $0x6c] sm:$0xf]
      %v4633 = vld [vmem:[%s5 + $0x70] sm:$0xf]
      %v4634 = vld [vmem:[%s5 + $0x74] sm:$0xf]
      %v4635 = vld [vmem:[%s5 + $0x78] sm:$0xf]
      %v4636 = vld [vmem:[%s5 + $0x7c] sm:$0xf]
      %v4637 = vld [vmem:[%s5 + $0x80] sm:$0xf]
      %v4638 = vld [vmem:[%s5 + $0x84] sm:$0xf]
      %v4639 = vld [vmem:[%s5 + $0x88] sm:$0xf]
      %v4640 = vld [vmem:[%s5 + $0x8c] sm:$0xf]
      %v4641 = vld [vmem:[%s5 + $0x90] sm:$0xf]
      %v4642 = vld [vmem:[%s5 + $0x94] sm:$0xf]
      %v4643 = vld [vmem:[%s5 + $0x98] sm:$0xf]
      %v4644 = vld [vmem:[%s5 + $0x9c] sm:$0xf]
      %v4645 = vld [vmem:[%s5 + $0xa0] sm:$0xf]
      %v4646 = vld [vmem:[%s5 + $0xa4] sm:$0xf]
      %v4647 = vld [vmem:[%s5 + $0xa8] sm:$0xf]
      %v4648 = vld [vmem:[%s5 + $0xac] sm:$0xf]
      %v4649 = vld [vmem:[%s5 + $0xb0] sm:$0xf]
      %v4650 = vld [vmem:[%s5 + $0xb4] sm:$0xf]
      %v4651 = vld [vmem:[%s5 + $0xb8] sm:$0xf]
      %v4652 = vld [vmem:[%s5 + $0xbc] sm:$0xf]
      %v4653 = vld [vmem:[%s5 + $0xc0] sm:$0xf]
      %v4654 = vld [vmem:[%s5 + $0xc4] sm:$0xf]
      %v4655 = vld [vmem:[%s5 + $0xc8] sm:$0xf]
      %v4656 = vld [vmem:[%s5 + $0xcc] sm:$0xf]
      %v4657 = vld [vmem:[%s5 + $0xd0] sm:$0xf]
      %v4658 = vld [vmem:[%s5 + $0xd4] sm:$0xf]
      %v4659 = vld [vmem:[%s5 + $0xd8] sm:$0xf]
      %v4660 = vld [vmem:[%s5 + $0xdc] sm:$0xf]
      %v4661 = vld [vmem:[%s5 + $0xe0] sm:$0xf]
      %v4662 = vld [vmem:[%s5 + $0xe4] sm:$0xf]
      %v4663 = vld [vmem:[%s5 + $0xe8] sm:$0xf]
      %v4664 = vld [vmem:[%s5 + $0xec] sm:$0xf]
      %v4665 = vld [vmem:[%s5 + $0xf0] sm:$0xf]
      %v4666 = vld [vmem:[%s5 + $0xf4] sm:$0xf]
      %v4667 = vld [vmem:[%s5 + $0xf8] sm:$0xf]
      %v4668 = vld [vmem:[%s5 + $0xfc] sm:$0xf]
      %v4669 = vld [vmem:[%s5 + $0x100] sm:$0xf]
      %v4670 = vld [vmem:[%s5 + $0x104] sm:$0xf]
      %v4671 = vld [vmem:[%s5 + $0x108] sm:$0xf]
      %v4672 = vld [vmem:[%s5 + $0x10c] sm:$0xf]
      %v4673 = vld [vmem:[%s5 + $0x110] sm:$0xf]
      %v4674 = vld [vmem:[%s5 + $0x114] sm:$0xf]
      %v4675 = vld [vmem:[%s5 + $0x118] sm:$0xf]
      %v4676 = vld [vmem:[%s5 + $0x11c] sm:$0xf]
      %v4677 = vld [vmem:[%s5 + $0x120] sm:$0xf]
      %v4678 = vld [vmem:[%s5 + $0x124] sm:$0xf]
      %v4679 = vld [vmem:[%s5 + $0x128] sm:$0xf]
      %v4680 = vld [vmem:[%s5 + $0x12c] sm:$0xf]
      %v4681 = vld [vmem:[%s5 + $0x130] sm:$0xf]
      %v4682 = vld [vmem:[%s5 + $0x134] sm:$0xf]
      %v4683 = vld [vmem:[%s5 + $0x138] sm:$0xf]
      %v4684 = vld [vmem:[%s5 + $0x13c] sm:$0xf]
      %v4685 = vld [vmem:[%s5 + $0x140] sm:$0xf]
      %v4686 = vld [vmem:[%s5 + $0x144] sm:$0xf]
      %v4687 = vld [vmem:[%s5 + $0x148] sm:$0xf]
      %v4688 = vld [vmem:[%s5 + $0x14c] sm:$0xf]
      %v4689 = vld [vmem:[%s5 + $0x150] sm:$0xf]
      %v4690 = vld [vmem:[%s5 + $0x154] sm:$0xf]
      %v4691 = vld [vmem:[%s5 + $0x158] sm:$0xf]
      %v4692 = vld [vmem:[%s5 + $0x15c] sm:$0xf]
      %v4693 = vld [vmem:[%s5 + $0x160] sm:$0xf]
      %v4694 = vld [vmem:[%s5 + $0x164] sm:$0xf]
      %v4695 = vld [vmem:[%s5 + $0x168] sm:$0xf]
      %v4696 = vld [vmem:[%s5 + $0x16c] sm:$0xf]
      %v4697 = vld [vmem:[%s5 + $0x170] sm:$0xf]
      %v4698 = vld [vmem:[%s5 + $0x174] sm:$0xf]
      %v4699 = vld [vmem:[%s5 + $0x178] sm:$0xf]
      %v4700 = vld [vmem:[%s5 + $0x17c] sm:$0xf]
      %v4701 = vld [vmem:[%s5 + $0x180] sm:$0xf]
      %v4702 = vld [vmem:[%s5 + $0x184] sm:$0xf]
      %v4703 = vld [vmem:[%s5 + $0x188] sm:$0xf]
      %v4704 = vld [vmem:[%s5 + $0x18c] sm:$0xf]
      %v4705 = vld [vmem:[%s5 + $0x190] sm:$0xf]
      %v4706 = vld [vmem:[%s5 + $0x194] sm:$0xf]
      %v4707 = vld [vmem:[%s5 + $0x198] sm:$0xf]
      %v4708 = vld [vmem:[%s5 + $0x19c] sm:$0xf]
      %v4709 = vld [vmem:[%s5 + $0x1a0] sm:$0xf]
      %v4710 = vld [vmem:[%s5 + $0x1a4] sm:$0xf]
      %v4711 = vld [vmem:[%s5 + $0x1a8] sm:$0xf]
      %v4712 = vld [vmem:[%s5 + $0x1ac] sm:$0xf]
      %v4713 = vld [vmem:[%s5 + $0x1b0] sm:$0xf]
      %v4714 = vld [vmem:[%s5 + $0x1b4] sm:$0xf]
      %v4715 = vld [vmem:[%s5 + $0x1b8] sm:$0xf]
      %v4716 = vld [vmem:[%s5 + $0x1bc] sm:$0xf]
      %v4717 = vld [vmem:[%s5 + $0x1c0] sm:$0xf]
      %v4718 = vld [vmem:[%s5 + $0x1c4] sm:$0xf]
      %v4719 = vld [vmem:[%s5 + $0x1c8] sm:$0xf]
      %v4720 = vld [vmem:[%s5 + $0x1cc] sm:$0xf]
      %v4721 = vld [vmem:[%s5 + $0x1d0] sm:$0xf]
      %v4722 = vld [vmem:[%s5 + $0x1d4] sm:$0xf]
      %v4723 = vld [vmem:[%s5 + $0x1d8] sm:$0xf]
      %v4724 = vld [vmem:[%s5 + $0x1dc] sm:$0xf]
      %v4725 = vld [vmem:[%s5 + $0x1e0] sm:$0xf]
      %v4726 = vld [vmem:[%s5 + $0x1e4] sm:$0xf]
      %v4727 = vld [vmem:[%s5 + $0x1e8] sm:$0xf]
      %v4728 = vld [vmem:[%s5 + $0x1ec] sm:$0xf]
      %v4729 = vld [vmem:[%s5 + $0x1f0] sm:$0xf]
      %v4730 = vld [vmem:[%s5 + $0x1f4] sm:$0xf]
      %v4731 = vld [vmem:[%s5 + $0x1f8] sm:$0xf]
      %v4732 = vld [vmem:[%s5 + $0x1fc] sm:$0xf]
      %v4733 = vld [vmem:[%s5 + $0x200] sm:$0xf]
      %v4734 = vld [vmem:[%s5 + $0x204] sm:$0xf]
      %v4735 = vld [vmem:[%s5 + $0x208] sm:$0xf]
      %v4736 = vld [vmem:[%s5 + $0x20c] sm:$0xf]
      %v4737 = vld [vmem:[%s5 + $0x210] sm:$0xf]
      %v4738 = vld [vmem:[%s5 + $0x214] sm:$0xf]
      %v4739 = vld [vmem:[%s5 + $0x218] sm:$0xf]
      %v4740 = vld [vmem:[%s5 + $0x21c] sm:$0xf]
      %v4741 = vld [vmem:[%s5 + $0x220] sm:$0xf]
      %v4742 = vld [vmem:[%s5 + $0x224] sm:$0xf]
      %v4743 = vld [vmem:[%s5 + $0x228] sm:$0xf]
      %v4744 = vld [vmem:[%s5 + $0x22c] sm:$0xf]
      %v4745 = vld [vmem:[%s5 + $0x230] sm:$0xf]
      %v4746 = vld [vmem:[%s5 + $0x234] sm:$0xf]
      %v4747 = vld [vmem:[%s5 + $0x238] sm:$0xf]
      %v4748 = vld [vmem:[%s5 + $0x23c] sm:$0xf]
      %v4893 = vunpack.c.l.b16 %v4605
      %v4894 = vunpack.c.l.b16 %v4606
      %v4895 = vunpack.c.l.b16 %v4607
      %v4896 = vunpack.c.l.b16 %v4608
      %v4897 = vunpack.c.l.b16 %v4609
      %v4898 = vunpack.c.l.b16 %v4610
      %v4899 = vunpack.c.l.b16 %v4611
      %v4900 = vunpack.c.l.b16 %v4612
      %v4901 = vunpack.c.l.b16 %v4613
      %v4902 = vunpack.c.l.b16 %v4614
      %v4903 = vunpack.c.l.b16 %v4615
      %v4904 = vunpack.c.l.b16 %v4616
      %v4905 = vunpack.c.l.b16 %v4617
      %v4906 = vunpack.c.l.b16 %v4618
      %v4907 = vunpack.c.l.b16 %v4619
      %v4908 = vunpack.c.l.b16 %v4620
      %v4909 = vunpack.c.l.b16 %v4621
      %v4910 = vunpack.c.l.b16 %v4622
      %v4911 = vunpack.c.l.b16 %v4623
      %v4912 = vunpack.c.l.b16 %v4624
      %v4913 = vunpack.c.l.b16 %v4625
      %v4914 = vunpack.c.l.b16 %v4626
      %v4915 = vunpack.c.l.b16 %v4627
      %v4916 = vunpack.c.l.b16 %v4628
      %v4917 = vunpack.c.l.b16 %v4629
      %v4918 = vunpack.c.l.b16 %v4630
      %v4919 = vunpack.c.l.b16 %v4631
      %v4920 = vunpack.c.l.b16 %v4632
      %v4921 = vunpack.c.l.b16 %v4633
      %v4922 = vunpack.c.l.b16 %v4634
      %v4923 = vunpack.c.l.b16 %v4635
      %v4924 = vunpack.c.l.b16 %v4636
      %v4925 = vunpack.c.l.b16 %v4637
      %v4926 = vunpack.c.l.b16 %v4638
      %v4927 = vunpack.c.l.b16 %v4639
      %v4928 = vunpack.c.l.b16 %v4640
      %v4929 = vunpack.c.l.b16 %v4641
      %v4930 = vunpack.c.l.b16 %v4642
      %v4931 = vunpack.c.l.b16 %v4643
      %v4932 = vunpack.c.l.b16 %v4644
      %v4933 = vunpack.c.l.b16 %v4645
      %v4934 = vunpack.c.l.b16 %v4646
      %v4935 = vunpack.c.l.b16 %v4647
      %v4936 = vunpack.c.l.b16 %v4648
      %v4937 = vunpack.c.l.b16 %v4649
      %v4938 = vunpack.c.l.b16 %v4650
      %v4939 = vunpack.c.l.b16 %v4651
      %v4940 = vunpack.c.l.b16 %v4652
      %v4941 = vunpack.c.l.b16 %v4653
      %v4942 = vunpack.c.l.b16 %v4654
      %v4943 = vunpack.c.l.b16 %v4655
      %v4944 = vunpack.c.l.b16 %v4656
      %v4945 = vunpack.c.l.b16 %v4657
      %v4946 = vunpack.c.l.b16 %v4658
      %v4947 = vunpack.c.l.b16 %v4659
      %v4948 = vunpack.c.l.b16 %v4660
      %v4949 = vunpack.c.l.b16 %v4661
      %v4950 = vunpack.c.l.b16 %v4662
      %v4951 = vunpack.c.l.b16 %v4663
      %v4952 = vunpack.c.l.b16 %v4664
      %v4953 = vunpack.c.l.b16 %v4665
      %v4954 = vunpack.c.l.b16 %v4666
      %v4955 = vunpack.c.l.b16 %v4667
      %v4956 = vunpack.c.l.b16 %v4668
      %v4957 = vunpack.c.l.b16 %v4669
      %v4958 = vunpack.c.l.b16 %v4670
      %v4959 = vunpack.c.l.b16 %v4671
      %v4960 = vunpack.c.l.b16 %v4672
      %v4961 = vunpack.c.l.b16 %v4673
      %v4962 = vunpack.c.l.b16 %v4674
      %v4963 = vunpack.c.l.b16 %v4675
      %v4964 = vunpack.c.l.b16 %v4676
      %v4965 = vunpack.c.l.b16 %v4677
      %v4966 = vunpack.c.l.b16 %v4678
      %v4967 = vunpack.c.l.b16 %v4679
      %v4968 = vunpack.c.l.b16 %v4680
      %v4969 = vunpack.c.l.b16 %v4681
      %v4970 = vunpack.c.l.b16 %v4682
      %v4971 = vunpack.c.l.b16 %v4683
      %v4972 = vunpack.c.l.b16 %v4684
      %v4973 = vunpack.c.l.b16 %v4685
      %v4974 = vunpack.c.l.b16 %v4686
      %v4975 = vunpack.c.l.b16 %v4687
      %v4976 = vunpack.c.l.b16 %v4688
      %v4977 = vunpack.c.l.b16 %v4689
      %v4978 = vunpack.c.l.b16 %v4690
      %v4979 = vunpack.c.l.b16 %v4691
      %v4980 = vunpack.c.l.b16 %v4692
      %v4981 = vunpack.c.l.b16 %v4693
      %v4982 = vunpack.c.l.b16 %v4694
      %v4983 = vunpack.c.l.b16 %v4695
      %v4984 = vunpack.c.l.b16 %v4696
      %v4985 = vunpack.c.l.b16 %v4697
      %v4986 = vunpack.c.l.b16 %v4698
      %v4987 = vunpack.c.l.b16 %v4699
      %v4988 = vunpack.c.l.b16 %v4700
      %v4989 = vunpack.c.l.b16 %v4701
      %v4990 = vunpack.c.l.b16 %v4702
      %v4991 = vunpack.c.l.b16 %v4703
      %v4992 = vunpack.c.l.b16 %v4704
      %v4993 = vunpack.c.l.b16 %v4705
      %v4994 = vunpack.c.l.b16 %v4706
      %v4995 = vunpack.c.l.b16 %v4707
      %v4996 = vunpack.c.l.b16 %v4708
      %v4997 = vunpack.c.l.b16 %v4709
      %v4998 = vunpack.c.l.b16 %v4710
      %v4999 = vunpack.c.l.b16 %v4711
      %v5000 = vunpack.c.l.b16 %v4712
      %v5001 = vunpack.c.l.b16 %v4713
      %v5002 = vunpack.c.l.b16 %v4714
      %v5003 = vunpack.c.l.b16 %v4715
      %v5004 = vunpack.c.l.b16 %v4716
      %v5005 = vunpack.c.l.b16 %v4717
      %v5006 = vunpack.c.l.b16 %v4718
      %v5007 = vunpack.c.l.b16 %v4719
      %v5008 = vunpack.c.l.b16 %v4720
      %v5009 = vunpack.c.l.b16 %v4721
      %v5010 = vunpack.c.l.b16 %v4722
      %v5011 = vunpack.c.l.b16 %v4723
      %v5012 = vunpack.c.l.b16 %v4724
      %v5013 = vunpack.c.l.b16 %v4725
      %v5014 = vunpack.c.l.b16 %v4726
      %v5015 = vunpack.c.l.b16 %v4727
      %v5016 = vunpack.c.l.b16 %v4728
      %v5017 = vunpack.c.l.b16 %v4729
      %v5018 = vunpack.c.l.b16 %v4730
      %v5019 = vunpack.c.l.b16 %v4731
      %v5020 = vunpack.c.l.b16 %v4732
      %v5021 = vunpack.c.l.b16 %v4733
      %v5022 = vunpack.c.l.b16 %v4734
      %v5023 = vunpack.c.l.b16 %v4735
      %v5024 = vunpack.c.l.b16 %v4736
      %v5025 = vunpack.c.l.b16 %v4737
      %v5026 = vunpack.c.l.b16 %v4738
      %v5027 = vunpack.c.l.b16 %v4739
      %v5028 = vunpack.c.l.b16 %v4740
      %v5029 = vunpack.c.l.b16 %v4741
      %v5030 = vunpack.c.l.b16 %v4742
      %v5031 = vunpack.c.l.b16 %v4743
      %v5032 = vunpack.c.l.b16 %v4744
      %v5033 = vunpack.c.l.b16 %v4745
      %v5034 = vunpack.c.l.b16 %v4746
      %v5035 = vunpack.c.l.b16 %v4747
      %v5036 = vunpack.c.l.b16 %v4748
      %v5037 = vpack.c.b16 %v4894, %v4893
      %v5038 = vpack.c.b16 %v4896, %v4895
      %v5039 = vpack.c.b16 %v4898, %v4897
      %v5040 = vpack.c.b16 %v4900, %v4899
      %v5041 = vpack.c.b16 %v4902, %v4901
      %v5042 = vpack.c.b16 %v4904, %v4903
      %v5043 = vpack.c.b16 %v4906, %v4905
      %v5044 = vpack.c.b16 %v4908, %v4907
      %v5045 = vpack.c.b16 %v4910, %v4909
      %v5046 = vpack.c.b16 %v4912, %v4911
      %v5047 = vpack.c.b16 %v4914, %v4913
      %v5048 = vpack.c.b16 %v4916, %v4915
      %v5049 = vpack.c.b16 %v4918, %v4917
      %v5050 = vpack.c.b16 %v4920, %v4919
      %v5051 = vpack.c.b16 %v4922, %v4921
      %v5052 = vpack.c.b16 %v4924, %v4923
      %v5053 = vpack.c.b16 %v4926, %v4925
      %v5054 = vpack.c.b16 %v4928, %v4927
      %v5055 = vpack.c.b16 %v4930, %v4929
      %v5056 = vpack.c.b16 %v4932, %v4931
      %v5057 = vpack.c.b16 %v4934, %v4933
      %v5058 = vpack.c.b16 %v4936, %v4935
      %v5059 = vpack.c.b16 %v4938, %v4937
      %v5060 = vpack.c.b16 %v4940, %v4939
      %v5061 = vpack.c.b16 %v4942, %v4941
      %v5062 = vpack.c.b16 %v4944, %v4943
      %v5063 = vpack.c.b16 %v4946, %v4945
      %v5064 = vpack.c.b16 %v4948, %v4947
      %v5065 = vpack.c.b16 %v4950, %v4949
      %v5066 = vpack.c.b16 %v4952, %v4951
      %v5067 = vpack.c.b16 %v4954, %v4953
      %v5068 = vpack.c.b16 %v4956, %v4955
      %v5069 = vpack.c.b16 %v4958, %v4957
      %v5070 = vpack.c.b16 %v4960, %v4959
      %v5071 = vpack.c.b16 %v4962, %v4961
      %v5072 = vpack.c.b16 %v4964, %v4963
      %v5073 = vpack.c.b16 %v4966, %v4965
      %v5074 = vpack.c.b16 %v4968, %v4967
      %v5075 = vpack.c.b16 %v4970, %v4969
      %v5076 = vpack.c.b16 %v4972, %v4971
      %v5077 = vpack.c.b16 %v4974, %v4973
      %v5078 = vpack.c.b16 %v4976, %v4975
      %v5079 = vpack.c.b16 %v4978, %v4977
      %v5080 = vpack.c.b16 %v4980, %v4979
      %v5081 = vpack.c.b16 %v4982, %v4981
      %v5082 = vpack.c.b16 %v4984, %v4983
      %v5083 = vpack.c.b16 %v4986, %v4985
      %v5084 = vpack.c.b16 %v4988, %v4987
      %v5085 = vpack.c.b16 %v4990, %v4989
      %v5086 = vpack.c.b16 %v4992, %v4991
      %v5087 = vpack.c.b16 %v4994, %v4993
      %v5088 = vpack.c.b16 %v4996, %v4995
      %v5089 = vpack.c.b16 %v4998, %v4997
      %v5090 = vpack.c.b16 %v5000, %v4999
      %v5091 = vpack.c.b16 %v5002, %v5001
      %v5092 = vpack.c.b16 %v5004, %v5003
      %v5093 = vpack.c.b16 %v5006, %v5005
      %v5094 = vpack.c.b16 %v5008, %v5007
      %v5095 = vpack.c.b16 %v5010, %v5009
      %v5096 = vpack.c.b16 %v5012, %v5011
      %v5097 = vpack.c.b16 %v5014, %v5013
      %v5098 = vpack.c.b16 %v5016, %v5015
      %v5099 = vpack.c.b16 %v5018, %v5017
      %v5100 = vpack.c.b16 %v5020, %v5019
      %v5101 = vpack.c.b16 %v5022, %v5021
      %v5102 = vpack.c.b16 %v5024, %v5023
      %v5103 = vpack.c.b16 %v5026, %v5025
      %v5104 = vpack.c.b16 %v5028, %v5027
      %v5105 = vpack.c.b16 %v5030, %v5029
      %v5106 = vpack.c.b16 %v5032, %v5031
      %v5107 = vpack.c.b16 %v5034, %v5033
      %v5108 = vpack.c.b16 %v5036, %v5035
      %5181 = vmatprep.subr.bf16.mxu0 0
      %5182 = vmatpush1.bf16.msra.mxu0 %v5037
      %5183 = vmatprep.subr.bf16.mxu0 0
      %5184 = vmatpush1.bf16.msra.mxu0 %v5038
      %5185 = vmatprep.subr.bf16.mxu0 0
      %5186 = vmatpush1.bf16.msra.mxu0 %v5039
      %5187 = vmatprep.subr.bf16.mxu0 0
      %5188 = vmatpush1.bf16.msra.mxu0 %v5040
      %5189 = vmatprep.subr.bf16.mxu0 0
      %5190 = vmatpush1.bf16.msra.mxu0 %v5041
      %5191 = vmatprep.subr.bf16.mxu0 0
      %5192 = vmatpush1.bf16.msra.mxu0 %v5042
      %5193 = vmatprep.subr.bf16.mxu0 0
      %5194 = vmatpush1.bf16.msra.mxu0 %v5043
      %5195 = vmatprep.subr.bf16.mxu0 0
      %5196 = vmatpush1.bf16.msra.mxu0 %v5044
      %5197 = vmatprep.subr.bf16.mxu0 0
      %5198 = vmatpush1.bf16.msra.mxu0 %v5045
      %5199 = vmatprep.subr.bf16.mxu0 0
      %5200 = vmatpush1.bf16.msra.mxu0 %v5046
      %5201 = vmatprep.subr.bf16.mxu0 0
      %5202 = vmatpush1.bf16.msra.mxu0 %v5047
      %5203 = vmatprep.subr.bf16.mxu0 0
      %5204 = vmatpush1.bf16.msra.mxu0 %v5048
      %5205 = vmatprep.subr.bf16.mxu0 0
      %5206 = vmatpush1.bf16.msra.mxu0 %v5049
      %5207 = vmatprep.subr.bf16.mxu0 0
      %5208 = vmatpush1.bf16.msra.mxu0 %v5050
      %5209 = vmatprep.subr.bf16.mxu0 0
      %5210 = vmatpush1.bf16.msra.mxu0 %v5051
      %5211 = vmatprep.subr.bf16.mxu0 0
      %5212 = vmatpush1.bf16.msra.mxu0 %v5052
      %5213 = vmatprep.mubr.bf16.mxu0 %v4485
      %5214 = vmatmul.mubr.bf16.gmra.mrb[0].mxu0 %v4421
      %v5215 = vpop.f32.mrb[0].mxu0
      %v5216 = vadd.f32 0.0, %v5215
      %v5217 = vpop.f32.mrb[0].mxu0
      %v5218 = vpop.f32.mrb[0].mxu0
      %v5219 = vadd.f32 0.0, %v5218
      %v5220 = vpop.f32.mrb[0].mxu0
      %5221 = vmatprep.mubr.bf16.mxu0 %v4486
      %5222 = vmatmul.mubr.bf16.gmra.mrb[0].mxu0 %v4422
      %v5223 = vpop.f32.mrb[0].mxu0
      %v5224 = vadd.f32 0.0, %v5223
      %v5225 = vpop.f32.mrb[0].mxu0
      %v5226 = vpop.f32.mrb[0].mxu0
      %v5227 = vadd.f32 0.0, %v5226
      %v5228 = vpop.f32.mrb[0].mxu0
      %5229 = vmatprep.mubr.bf16.mxu0 %v4487
      %5230 = vmatmul.mubr.bf16.gmra.mrb[0].mxu0 %v4423
      %v5231 = vpop.f32.mrb[0].mxu0
      %v5232 = vadd.f32 0.0, %v5231
      %v5233 = vpop.f32.mrb[0].mxu0
      %v5234 = vpop.f32.mrb[0].mxu0
      %v5235 = vadd.f32 0.0, %v5234
      %v5236 = vpop.f32.mrb[0].mxu0
      %5237 = vmatprep.mubr.bf16.mxu0 %v4488
      %5238 = vmatmul.mubr.bf16.gmra.mrb[0].mxu0 %v4424
      %v5239 = vpop.f32.mrb[0].mxu0
      %v5240 = vadd.f32 0.0, %v5239
      %v5241 = vpop.f32.mrb[0].mxu0
      %v5242 = vpop.f32.mrb[0].mxu0
      %v5243 = vadd.f32 0.0, %v5242
      %v5244 = vpop.f32.mrb[0].mxu0
      %5245 = vmatprep.mubr.bf16.mxu0 %v4489
      %5246 = vmatmul.mubr.bf16.gmra.mrb[0].mxu0 %v4425
      %v5247 = vpop.f32.mrb[0].mxu0
      %v5248 = vadd.f32 0.0, %v5247
      %v5249 = vpop.f32.mrb[0].mxu0
      %v5250 = vpop.f32.mrb[0].mxu0
      %v5251 = vadd.f32 0.0, %v5250
      %v5252 = vpop.f32.mrb[0].mxu0
      %5253 = vmatprep.mubr.bf16.mxu0 %v4490
      %5254 = vmatmul.mubr.bf16.gmra.mrb[0].mxu0 %v4426
      %v5255 = vpop.f32.mrb[0].mxu0
      %v5256 = vadd.f32 0.0, %v5255
      %v5257 = vpop.f32.mrb[0].mxu0
      %v5258 = vpop.f32.mrb[0].mxu0
      %v5259 = vadd.f32 0.0, %v5258
      %v5260 = vpop.f32.mrb[0].mxu0
      %5261 = vmatprep.mubr.bf16.mxu0 %v4491
      %5262 = vmatmul.mubr.bf16.gmra.mrb[0].mxu0 %v4427
      %v5263 = vpop.f32.mrb[0].mxu0
      %v5264 = vadd.f32 0.0, %v5263
      %v5265 = vpop.f32.mrb[0].mxu0
      %v5266 = vpop.f32.mrb[0].mxu0
      %v5267 = vadd.f32 0.0, %v5266
      %v5268 = vpop.f32.mrb[0].mxu0
      %5269 = vmatprep.mubr.bf16.mxu0 %v4492
      %5270 = vmatmul.mubr.bf16.gmra.mrb[0].mxu0 %v4428
      %v5271 = vpop.f32.mrb[0].mxu0
      %v5272 = vadd.f32 0.0, %v5271
      %v5273 = vpop.f32.mrb[0].mxu0
      %v5274 = vpop.f32.mrb[0].mxu0
      %v5275 = vadd.f32 0.0, %v5274
      %v5276 = vpop.f32.mrb[0].mxu0
      %5277 = vmatprep.mubr.bf16.mxu0 %v4493
      %5278 = vmatmul.mubr.bf16.gmra.mrb[0].mxu0 %v4429
      %v5279 = vpop.f32.mrb[0].mxu0
      %v5280 = vadd.f32 0.0, %v5279
      %v5281 = vpop.f32.mrb[0].mxu0
      %v5282 = vpop.f32.mrb[0].mxu0
      %v5283 = vadd.f32 0.0, %v5282
      %v5284 = vpop.f32.mrb[0].mxu0
      %5285 = vmatprep.mubr.bf16.mxu0 %v4494
      %5286 = vmatmul.mubr.bf16.gmra.mrb[0].mxu0 %v4430
      %v5287 = vpop.f32.mrb[0].mxu0
      %v5288 = vadd.f32 0.0, %v5287
      %v5289 = vpop.f32.mrb[0].mxu0
      %v5290 = vpop.f32.mrb[0].mxu0
      %v5291 = vadd.f32 0.0, %v5290
      %v5292 = vpop.f32.mrb[0].mxu0
      %5293 = vmatprep.mubr.bf16.mxu0 %v4495
      %5294 = vmatmul.mubr.bf16.gmra.mrb[0].mxu0 %v4431
      %v5295 = vpop.f32.mrb[0].mxu0
      %v5296 = vadd.f32 0.0, %v5295
      %v5297 = vpop.f32.mrb[0].mxu0
      %v5298 = vpop.f32.mrb[0].mxu0
      %v5299 = vadd.f32 0.0, %v5298
      %v5300 = vpop.f32.mrb[0].mxu0
      %5301 = vmatprep.mubr.bf16.mxu0 %v4496
      %5302 = vmatmul.mubr.bf16.gmra.mrb[0].mxu0 %v4432
      %v5303 = vpop.f32.mrb[0].mxu0
      %v5304 = vadd.f32 0.0, %v5303
      %v5305 = vpop.f32.mrb[0].mxu0
      %v5306 = vpop.f32.mrb[0].mxu0
      %v5307 = vadd.f32 0.0, %v5306
      %v5308 = vpop.f32.mrb[0].mxu0
      %5309 = vmatprep.mubr.bf16.mxu0 %v4497
      %5310 = vmatmul.mubr.bf16.gmra.mrb[0].mxu0 %v4433
      %v5311 = vpop.f32.mrb[0].mxu0
      %v5312 = vadd.f32 0.0, %v5311
      %v5313 = vpop.f32.mrb[0].mxu0
      %v5314 = vpop.f32.mrb[0].mxu0
      %v5315 = vadd.f32 0.0, %v5314
      %v5316 = vpop.f32.mrb[0].mxu0
      %5317 = vmatprep.mubr.bf16.mxu0 %v4498
      %5318 = vmatmul.mubr.bf16.gmra.mrb[0].mxu0 %v4434
      %v5319 = vpop.f32.mrb[0].mxu0
      %v5320 = vadd.f32 0.0, %v5319
      %v5321 = vpop.f32.mrb[0].mxu0
      %v5322 = vpop.f32.mrb[0].mxu0
      %v5323 = vadd.f32 0.0, %v5322
      %v5324 = vpop.f32.mrb[0].mxu0
      %5325 = vmatprep.mubr.bf16.mxu0 %v4499
      %5326 = vmatmul.mubr.bf16.gmra.mrb[0].mxu0 %v4435
      %v5327 = vpop.f32.mrb[0].mxu0
      %v5328 = vadd.f32 0.0, %v5327
      %v5329 = vpop.f32.mrb[0].mxu0
      %v5330 = vpop.f32.mrb[0].mxu0
      %v5331 = vadd.f32 0.0, %v5330
      %v5332 = vpop.f32.mrb[0].mxu0
      %5333 = vmatprep.mubr.bf16.mxu0 %v4500
      %5334 = vmatmul.mubr.bf16.gmra.mrb[0].mxu0 %v4436
      %v5335 = vpop.f32.mrb[0].mxu0
      %v5336 = vadd.f32 0.0, %v5335
      %v5337 = vpop.f32.mrb[0].mxu0
      %v5338 = vpop.f32.mrb[0].mxu0
      %v5339 = vadd.f32 0.0, %v5338
      %v5340 = vpop.f32.mrb[0].mxu0
      %5341 = vdwg.mxu0
      %5342 = vmatprep.subr.bf16.mxu0 0
      %5343 = vmatpush1.bf16.msra.mxu0 %v5053
      %5344 = vmatprep.subr.bf16.mxu0 0
      %5345 = vmatpush1.bf16.msra.mxu0 %v5054
      %5346 = vmatprep.subr.bf16.mxu0 0
      %5347 = vmatpush1.bf16.msra.mxu0 %v5055
      %5348 = vmatprep.subr.bf16.mxu0 0
      %5349 = vmatpush1.bf16.msra.mxu0 %v5056
      %5350 = vmatprep.subr.bf16.mxu0 0
      %5351 = vmatpush1.bf16.msra.mxu0 %v5057
      %5352 = vmatprep.subr.bf16.mxu0 0
      %5353 = vmatpush1.bf16.msra.mxu0 %v5058
      %5354 = vmatprep.subr.bf16.mxu0 0
      %5355 = vmatpush1.bf16.msra.mxu0 %v5059
      %5356 = vmatprep.subr.bf16.mxu0 0
      %5357 = vmatpush1.bf16.msra.mxu0 %v5060
      %5358 = vmatprep.subr.bf16.mxu0 0
      %5359 = vmatpush1.bf16.msra.mxu0 %v5061
      %5360 = vmatprep.subr.bf16.mxu0 0
      %5361 = vmatpush1.bf16.msra.mxu0 %v5062
      %5362 = vmatprep.subr.bf16.mxu0 0
      %5363 = vmatpush1.bf16.msra.mxu0 %v5063
      %5364 = vmatprep.subr.bf16.mxu0 0
      %5365 = vmatpush1.bf16.msra.mxu0 %v5064
      %5366 = vmatprep.subr.bf16.mxu0 0
      %5367 = vmatpush1.bf16.msra.mxu0 %v5065
      %5368 = vmatprep.subr.bf16.mxu0 0
      %5369 = vmatpush1.bf16.msra.mxu0 %v5066
      %5370 = vmatprep.subr.bf16.mxu0 0
      %5371 = vmatpush1.bf16.msra.mxu0 %v5067
      %5372 = vmatprep.subr.bf16.mxu0 0
      %5373 = vmatpush1.bf16.msra.mxu0 %v5068
      %5374 = vmatprep.mubr.bf16.mxu0 %v4422
      %5375 = vmatmul.mubr.bf16.gmra.mrb[0].mxu0 %v4549
      %v5376 = vpop.f32.mrb[0].mxu0
      %v5377 = vadd.f32 %v5216, %v5376
      %v5378 = vpop.f32.mrb[0].mxu0
      %v5379 = vpop.f32.mrb[0].mxu0
      %v5380 = vadd.f32 %v5219, %v5379
      %v5381 = vpop.f32.mrb[0].mxu0
      %5382 = vmatprep.mubr.bf16.mxu0 %v4423
      %5383 = vmatmul.mubr.bf16.gmra.mrb[0].mxu0 %v4550
      %v5384 = vpop.f32.mrb[0].mxu0
      %v5385 = vadd.f32 %v5224, %v5384
      %v5386 = vpop.f32.mrb[0].mxu0
      %v5387 = vpop.f32.mrb[0].mxu0
      %v5388 = vadd.f32 %v5227, %v5387
      %v5389 = vpop.f32.mrb[0].mxu0
      %5390 = vmatprep.mubr.bf16.mxu0 %v4424
      %5391 = vmatmul.mubr.bf16.gmra.mrb[0].mxu0 %v4551
      %v5392 = vpop.f32.mrb[0].mxu0
      %v5393 = vadd.f32 %v5232, %v5392
      %v5394 = vpop.f32.mrb[0].mxu0
      %v5395 = vpop.f32.mrb[0].mxu0
      %v5396 = vadd.f32 %v5235, %v5395
      %v5397 = vpop.f32.mrb[0].mxu0
      %5398 = vmatprep.mubr.bf16.mxu0 %v4425
      %5399 = vmatmul.mubr.bf16.gmra.mrb[0].mxu0 %v4552
      %v5400 = vpop.f32.mrb[0].mxu0
      %v5401 = vadd.f32 %v5240, %v5400
      %v5402 = vpop.f32.mrb[0].mxu0
      %v5403 = vpop.f32.mrb[0].mxu0
      %v5404 = vadd.f32 %v5243, %v5403
      %v5405 = vpop.f32.mrb[0].mxu0
      %5406 = vmatprep.mubr.bf16.mxu0 %v4426
      %5407 = vmatmul.mubr.bf16.gmra.mrb[0].mxu0 %v4553
      %v5408 = vpop.f32.mrb[0].mxu0
      %v5409 = vadd.f32 %v5248, %v5408
      %v5410 = vpop.f32.mrb[0].mxu0
      %v5411 = vpop.f32.mrb[0].mxu0
      %v5412 = vadd.f32 %v5251, %v5411
      %v5413 = vpop.f32.mrb[0].mxu0
      %5414 = vmatprep.mubr.bf16.mxu0 %v4427
      %5415 = vmatmul.mubr.bf16.gmra.mrb[0].mxu0 %v4554
      %v5416 = vpop.f32.mrb[0].mxu0
      %v5417 = vadd.f32 %v5256, %v5416
      %v5418 = vpop.f32.mrb[0].mxu0
      %v5419 = vpop.f32.mrb[0].mxu0
      %v5420 = vadd.f32 %v5259, %v5419
      %v5421 = vpop.f32.mrb[0].mxu0
      %5422 = vmatprep.mubr.bf16.mxu0 %v4428
      %5423 = vmatmul.mubr.bf16.gmra.mrb[0].mxu0 %v4555
      %v5424 = vpop.f32.mrb[0].mxu0
      %v5425 = vadd.f32 %v5264, %v5424
      %v5426 = vpop.f32.mrb[0].mxu0
      %v5427 = vpop.f32.mrb[0].mxu0
      %v5428 = vadd.f32 %v5267, %v5427
      %v5429 = vpop.f32.mrb[0].mxu0
      %5430 = vmatprep.mubr.bf16.mxu0 %v4429
      %5431 = vmatmul.mubr.bf16.gmra.mrb[0].mxu0 %v4556
      %v5432 = vpop.f32.mrb[0].mxu0
      %v5433 = vadd.f32 %v5272, %v5432
      %v5434 = vpop.f32.mrb[0].mxu0
      %v5435 = vpop.f32.mrb[0].mxu0
      %v5436 = vadd.f32 %v5275, %v5435
      %v5437 = vpop.f32.mrb[0].mxu0
      %5438 = vmatprep.mubr.bf16.mxu0 %v4430
      %5439 = vmatmul.mubr.bf16.gmra.mrb[0].mxu0 %v4557
      %v5440 = vpop.f32.mrb[0].mxu0
      %v5441 = vadd.f32 %v5280, %v5440
      %v5442 = vpop.f32.mrb[0].mxu0
      %v5443 = vpop.f32.mrb[0].mxu0
      %v5444 = vadd.f32 %v5283, %v5443
      %v5445 = vpop.f32.mrb[0].mxu0
      %5446 = vmatprep.mubr.bf16.mxu0 %v4431
      %5447 = vmatmul.mubr.bf16.gmra.mrb[0].mxu0 %v4558
      %v5448 = vpop.f32.mrb[0].mxu0
      %v5449 = vadd.f32 %v5288, %v5448
      %v5450 = vpop.f32.mrb[0].mxu0
      %v5451 = vpop.f32.mrb[0].mxu0
      %v5452 = vadd.f32 %v5291, %v5451
      %v5453 = vpop.f32.mrb[0].mxu0
      %5454 = vmatprep.mubr.bf16.mxu0 %v4432
      %5455 = vmatmul.mubr.bf16.gmra.mrb[0].mxu0 %v4559
      %v5456 = vpop.f32.mrb[0].mxu0
      %v5457 = vadd.f32 %v5296, %v5456
      %v5458 = vpop.f32.mrb[0].mxu0
      %v5459 = vpop.f32.mrb[0].mxu0
      %v5460 = vadd.f32 %v5299, %v5459
      %v5461 = vpop.f32.mrb[0].mxu0
      %5462 = vmatprep.mubr.bf16.mxu0 %v4433
      %5463 = vmatmul.mubr.bf16.gmra.mrb[0].mxu0 %v4560
      %v5464 = vpop.f32.mrb[0].mxu0
      %v5465 = vadd.f32 %v5304, %v5464
      %v5466 = vpop.f32.mrb[0].mxu0
      %v5467 = vpop.f32.mrb[0].mxu0
      %v5468 = vadd.f32 %v5307, %v5467
      %v5469 = vpop.f32.mrb[0].mxu0
      %5470 = vmatprep.mubr.bf16.mxu0 %v4434
      %5471 = vmatmul.mubr.bf16.gmra.mrb[0].mxu0 %v4561
      %v5472 = vpop.f32.mrb[0].mxu0
      %v5473 = vadd.f32 %v5312, %v5472
      %v5474 = vpop.f32.mrb[0].mxu0
      %v5475 = vpop.f32.mrb[0].mxu0
      %v5476 = vadd.f32 %v5315, %v5475
      %v5477 = vpop.f32.mrb[0].mxu0
      %5478 = vmatprep.mubr.bf16.mxu0 %v4435
      %5479 = vmatmul.mubr.bf16.gmra.mrb[0].mxu0 %v4562
      %v5480 = vpop.f32.mrb[0].mxu0
      %v5481 = vadd.f32 %v5320, %v5480
      %v5482 = vpop.f32.mrb[0].mxu0
      %v5483 = vpop.f32.mrb[0].mxu0
      %v5484 = vadd.f32 %v5323, %v5483
      %v5485 = vpop.f32.mrb[0].mxu0
      %5486 = vmatprep.mubr.bf16.mxu0 %v4436
      %5487 = vmatmul.mubr.bf16.gmra.mrb[0].mxu0 %v4563
      %v5488 = vpop.f32.mrb[0].mxu0
      %v5489 = vadd.f32 %v5328, %v5488
      %v5490 = vpop.f32.mrb[0].mxu0
      %v5491 = vpop.f32.mrb[0].mxu0
      %v5492 = vadd.f32 %v5331, %v5491
      %v5493 = vpop.f32.mrb[0].mxu0
      %5494 = vmatprep.mubr.bf16.mxu0 %v4583
      %5495 = vmatmul.mubr.bf16.gmra.mrb[0].mxu0 %v4564
      %v5496 = vpop.f32.mrb[0].mxu0
      %v5497 = vadd.f32 %v5336, %v5496
      %v5498 = vpop.f32.mrb[0].mxu0
      %v5499 = vpop.f32.mrb[0].mxu0
      %v5500 = vadd.f32 %v5339, %v5499
      %v5501 = vpop.f32.mrb[0].mxu0
      %5502 = vdwg.mxu0
      %5503 = vmatprep.subr.bf16.mxu0 0
      %5504 = vmatpush1.bf16.msra.mxu0 %v5069
      %5505 = vmatprep.subr.bf16.mxu0 0
      %5506 = vmatpush1.bf16.msra.mxu0 %v5070
      %5507 = vmatprep.subr.bf16.mxu0 0
      %5508 = vmatpush1.bf16.msra.mxu0 %v5071
      %5509 = vmatprep.subr.bf16.mxu0 0
      %5510 = vmatpush1.bf16.msra.mxu0 %v5072
      %5511 = vmatprep.subr.bf16.mxu0 0
      %5512 = vmatpush1.bf16.msra.mxu0 %v5073
      %5513 = vmatprep.subr.bf16.mxu0 0
      %5514 = vmatpush1.bf16.msra.mxu0 %v5074
      %5515 = vmatprep.subr.bf16.mxu0 0
      %5516 = vmatpush1.bf16.msra.mxu0 %v5075
      %5517 = vmatprep.subr.bf16.mxu0 0
      %5518 = vmatpush1.bf16.msra.mxu0 %v5076
      %5519 = vmatprep.subr.bf16.mxu0 0
      %5520 = vmatpush1.bf16.msra.mxu0 %v5077
      %5521 = vmatprep.subr.bf16.mxu0 0
      %5522 = vmatpush1.bf16.msra.mxu0 %v5078
      %5523 = vmatprep.subr.bf16.mxu0 0
      %5524 = vmatpush1.bf16.msra.mxu0 %v5079
      %5525 = vmatprep.subr.bf16.mxu0 0
      %5526 = vmatpush1.bf16.msra.mxu0 %v5080
      %5527 = vmatprep.subr.bf16.mxu0 0
      %5528 = vmatpush1.bf16.msra.mxu0 %v5081
      %5529 = vmatprep.subr.bf16.mxu0 0
      %5530 = vmatpush1.bf16.msra.mxu0 %v5082
      %5531 = vmatprep.subr.bf16.mxu0 0
      %5532 = vmatpush1.bf16.msra.mxu0 %v5083
      %5533 = vmatprep.subr.bf16.mxu0 0
      %5534 = vmatpush1.bf16.msra.mxu0 %v5084
      %5535 = vmatprep.mubr.bf16.mxu0 %v4550
      %5536 = vmatmul.mubr.bf16.gmra.mrb[0].mxu0 %v4486
      %v5537 = vpop.f32.mrb[0].mxu0
      %v5538 = vadd.f32 %v5377, %v5537
      %v5539 = vpop.f32.mrb[0].mxu0
      %v5540 = vpop.f32.mrb[0].mxu0
      %v5541 = vadd.f32 %v5380, %v5540
      %v5542 = vpop.f32.mrb[0].mxu0
      %5543 = vmatprep.mubr.bf16.mxu0 %v4551
      %5544 = vmatmul.mubr.bf16.gmra.mrb[0].mxu0 %v4487
      %v5545 = vpop.f32.mrb[0].mxu0
      %v5546 = vadd.f32 %v5385, %v5545
      %v5547 = vpop.f32.mrb[0].mxu0
      %v5548 = vpop.f32.mrb[0].mxu0
      %v5549 = vadd.f32 %v5388, %v5548
      %v5550 = vpop.f32.mrb[0].mxu0
      %5551 = vmatprep.mubr.bf16.mxu0 %v4552
      %5552 = vmatmul.mubr.bf16.gmra.mrb[0].mxu0 %v4488
      %v5553 = vpop.f32.mrb[0].mxu0
      %v5554 = vadd.f32 %v5393, %v5553
      %v5555 = vpop.f32.mrb[0].mxu0
      %v5556 = vpop.f32.mrb[0].mxu0
      %v5557 = vadd.f32 %v5396, %v5556
      %v5558 = vpop.f32.mrb[0].mxu0
      %5559 = vmatprep.mubr.bf16.mxu0 %v4553
      %5560 = vmatmul.mubr.bf16.gmra.mrb[0].mxu0 %v4489
      %v5561 = vpop.f32.mrb[0].mxu0
      %v5562 = vadd.f32 %v5401, %v5561
      %v5563 = vpop.f32.mrb[0].mxu0
      %v5564 = vpop.f32.mrb[0].mxu0
      %v5565 = vadd.f32 %v5404, %v5564
      %v5566 = vpop.f32.mrb[0].mxu0
      %5567 = vmatprep.mubr.bf16.mxu0 %v4554
      %5568 = vmatmul.mubr.bf16.gmra.mrb[0].mxu0 %v4490
      %v5569 = vpop.f32.mrb[0].mxu0
      %v5570 = vadd.f32 %v5409, %v5569
      %v5571 = vpop.f32.mrb[0].mxu0
      %v5572 = vpop.f32.mrb[0].mxu0
      %v5573 = vadd.f32 %v5412, %v5572
      %v5574 = vpop.f32.mrb[0].mxu0
      %5575 = vmatprep.mubr.bf16.mxu0 %v4555
      %5576 = vmatmul.mubr.bf16.gmra.mrb[0].mxu0 %v4491
      %v5577 = vpop.f32.mrb[0].mxu0
      %v5578 = vadd.f32 %v5417, %v5577
      %v5579 = vpop.f32.mrb[0].mxu0
      %v5580 = vpop.f32.mrb[0].mxu0
      %v5581 = vadd.f32 %v5420, %v5580
      %v5582 = vpop.f32.mrb[0].mxu0
      %5583 = vmatprep.mubr.bf16.mxu0 %v4556
      %5584 = vmatmul.mubr.bf16.gmra.mrb[0].mxu0 %v4492
      %v5585 = vpop.f32.mrb[0].mxu0
      %v5586 = vadd.f32 %v5425, %v5585
      %v5587 = vpop.f32.mrb[0].mxu0
      %v5588 = vpop.f32.mrb[0].mxu0
      %v5589 = vadd.f32 %v5428, %v5588
      %v5590 = vpop.f32.mrb[0].mxu0
      %5591 = vmatprep.mubr.bf16.mxu0 %v4557
      %5592 = vmatmul.mubr.bf16.gmra.mrb[0].mxu0 %v4493
      %v5593 = vpop.f32.mrb[0].mxu0
      %v5594 = vadd.f32 %v5433, %v5593
      %v5595 = vpop.f32.mrb[0].mxu0
      %v5596 = vpop.f32.mrb[0].mxu0
      %v5597 = vadd.f32 %v5436, %v5596
      %v5598 = vpop.f32.mrb[0].mxu0
      %5599 = vmatprep.mubr.bf16.mxu0 %v4558
      %5600 = vmatmul.mubr.bf16.gmra.mrb[0].mxu0 %v4494
      %v5601 = vpop.f32.mrb[0].mxu0
      %v5602 = vadd.f32 %v5441, %v5601
      %v5603 = vpop.f32.mrb[0].mxu0
      %v5604 = vpop.f32.mrb[0].mxu0
      %v5605 = vadd.f32 %v5444, %v5604
      %v5606 = vpop.f32.mrb[0].mxu0
      %5607 = vmatprep.mubr.bf16.mxu0 %v4559
      %5608 = vmatmul.mubr.bf16.gmra.mrb[0].mxu0 %v4495
      %v5609 = vpop.f32.mrb[0].mxu0
      %v5610 = vadd.f32 %v5449, %v5609
      %v5611 = vpop.f32.mrb[0].mxu0
      %v5612 = vpop.f32.mrb[0].mxu0
      %v5613 = vadd.f32 %v5452, %v5612
      %v5614 = vpop.f32.mrb[0].mxu0
      %5615 = vmatprep.mubr.bf16.mxu0 %v4560
      %5616 = vmatmul.mubr.bf16.gmra.mrb[0].mxu0 %v4496
      %v5617 = vpop.f32.mrb[0].mxu0
      %v5618 = vadd.f32 %v5457, %v5617
      %v5619 = vpop.f32.mrb[0].mxu0
      %v5620 = vpop.f32.mrb[0].mxu0
      %v5621 = vadd.f32 %v5460, %v5620
      %v5622 = vpop.f32.mrb[0].mxu0
      %5623 = vmatprep.mubr.bf16.mxu0 %v4561
      %5624 = vmatmul.mubr.bf16.gmra.mrb[0].mxu0 %v4497
      %v5625 = vpop.f32.mrb[0].mxu0
      %v5626 = vadd.f32 %v5465, %v5625
      %v5627 = vpop.f32.mrb[0].mxu0
      %v5628 = vpop.f32.mrb[0].mxu0
      %v5629 = vadd.f32 %v5468, %v5628
      %v5630 = vpop.f32.mrb[0].mxu0
      %5631 = vmatprep.mubr.bf16.mxu0 %v4562
      %5632 = vmatmul.mubr.bf16.gmra.mrb[0].mxu0 %v4498
      %v5633 = vpop.f32.mrb[0].mxu0
      %v5634 = vadd.f32 %v5473, %v5633
      %v5635 = vpop.f32.mrb[0].mxu0
      %v5636 = vpop.f32.mrb[0].mxu0
      %v5637 = vadd.f32 %v5476, %v5636
      %v5638 = vpop.f32.mrb[0].mxu0
      %5639 = vmatprep.mubr.bf16.mxu0 %v4563
      %5640 = vmatmul.mubr.bf16.gmra.mrb[0].mxu0 %v4499
      %v5641 = vpop.f32.mrb[0].mxu0
      %v5642 = vadd.f32 %v5481, %v5641
      %v5643 = vpop.f32.mrb[0].mxu0
      %v5644 = vpop.f32.mrb[0].mxu0
      %v5645 = vadd.f32 %v5484, %v5644
      %v5646 = vpop.f32.mrb[0].mxu0
      %5647 = vmatprep.mubr.bf16.mxu0 %v4564
      %5648 = vmatmul.mubr.bf16.gmra.mrb[0].mxu0 %v4500
      %v5649 = vpop.f32.mrb[0].mxu0
      %v5650 = vadd.f32 %v5489, %v5649
      %v5651 = vpop.f32.mrb[0].mxu0
      %v5652 = vpop.f32.mrb[0].mxu0
      %v5653 = vadd.f32 %v5492, %v5652
      %v5654 = vpop.f32.mrb[0].mxu0
      %5655 = vmatprep.mubr.bf16.mxu0 %v4591
      %5656 = vmatmul.mubr.bf16.gmra.mrb[0].mxu0 %v4587
      %v5657 = vpop.f32.mrb[0].mxu0
      %v5658 = vadd.f32 %v5497, %v5657
      %v5659 = vpop.f32.mrb[0].mxu0
      %v5660 = vpop.f32.mrb[0].mxu0
      %v5661 = vadd.f32 %v5500, %v5660
      %v5662 = vpop.f32.mrb[0].mxu0
      %5663 = vdwg.mxu0
      %5664 = vmatprep.subr.bf16.mxu0 0
      %5665 = vmatpush1.bf16.msra.mxu0 %v5085
      %5666 = vmatprep.subr.bf16.mxu0 0
      %5667 = vmatpush1.bf16.msra.mxu0 %v5086
      %5668 = vmatprep.subr.bf16.mxu0 0
      %5669 = vmatpush1.bf16.msra.mxu0 %v5087
      %5670 = vmatprep.subr.bf16.mxu0 0
      %5671 = vmatpush1.bf16.msra.mxu0 %v5088
      %5672 = vmatprep.subr.bf16.mxu0 0
      %5673 = vmatpush1.bf16.msra.mxu0 %v5089
      %5674 = vmatprep.subr.bf16.mxu0 0
      %5675 = vmatpush1.bf16.msra.mxu0 %v5090
      %5676 = vmatprep.subr.bf16.mxu0 0
      %5677 = vmatpush1.bf16.msra.mxu0 %v5091
      %5678 = vmatprep.subr.bf16.mxu0 0
      %5679 = vmatpush1.bf16.msra.mxu0 %v5092
      %5680 = vmatprep.subr.bf16.mxu0 0
      %5681 = vmatpush1.bf16.msra.mxu0 %v5093
      %5682 = vmatprep.subr.bf16.mxu0 0
      %5683 = vmatpush1.bf16.msra.mxu0 %v5094
      %5684 = vmatprep.subr.bf16.mxu0 0
      %5685 = vmatpush1.bf16.msra.mxu0 %v5095
      %5686 = vmatprep.subr.bf16.mxu0 0
      %5687 = vmatpush1.bf16.msra.mxu0 %v5096
      %5688 = vmatprep.subr.bf16.mxu0 0
      %5689 = vmatpush1.bf16.msra.mxu0 %v5097
      %5690 = vmatprep.subr.bf16.mxu0 0
      %5691 = vmatpush1.bf16.msra.mxu0 %v5098
      %5692 = vmatprep.subr.bf16.mxu0 0
      %5693 = vmatpush1.bf16.msra.mxu0 %v5099
      %5694 = vmatprep.subr.bf16.mxu0 0
      %5695 = vmatpush1.bf16.msra.mxu0 %v5100
      %5696 = vmatprep.mubr.bf16.mxu0 %v4487
      %5697 = vmatmul.mubr.bf16.gmra.mrb[0].mxu0 %v4423
      %v5698 = vpop.f32.mrb[0].mxu0
      %v5699 = vadd.f32 %v5538, %v5698
      %v5700 = vpop.f32.mrb[0].mxu0
      %v5701 = vpop.f32.mrb[0].mxu0
      %v5702 = vadd.f32 %v5541, %v5701
      %v5703 = vpop.f32.mrb[0].mxu0
      %5704 = vmatprep.mubr.bf16.mxu0 %v4488
      %5705 = vmatmul.mubr.bf16.gmra.mrb[0].mxu0 %v4424
      %v5706 = vpop.f32.mrb[0].mxu0
      %v5707 = vadd.f32 %v5546, %v5706
      %v5708 = vpop.f32.mrb[0].mxu0
      %v5709 = vpop.f32.mrb[0].mxu0
      %v5710 = vadd.f32 %v5549, %v5709
      %v5711 = vpop.f32.mrb[0].mxu0
      %5712 = vmatprep.mubr.bf16.mxu0 %v4489
      %5713 = vmatmul.mubr.bf16.gmra.mrb[0].mxu0 %v4425
      %v5714 = vpop.f32.mrb[0].mxu0
      %v5715 = vadd.f32 %v5554, %v5714
      %v5716 = vpop.f32.mrb[0].mxu0
      %v5717 = vpop.f32.mrb[0].mxu0
      %v5718 = vadd.f32 %v5557, %v5717
      %v5719 = vpop.f32.mrb[0].mxu0
      %5720 = vmatprep.mubr.bf16.mxu0 %v4490
      %5721 = vmatmul.mubr.bf16.gmra.mrb[0].mxu0 %v4426
      %v5722 = vpop.f32.mrb[0].mxu0
      %v5723 = vadd.f32 %v5562, %v5722
      %v5724 = vpop.f32.mrb[0].mxu0
      %v5725 = vpop.f32.mrb[0].mxu0
      %v5726 = vadd.f32 %v5565, %v5725
      %v5727 = vpop.f32.mrb[0].mxu0
      %5728 = vmatprep.mubr.bf16.mxu0 %v4491
      %5729 = vmatmul.mubr.bf16.gmra.mrb[0].mxu0 %v4427
      %v5730 = vpop.f32.mrb[0].mxu0
      %v5731 = vadd.f32 %v5570, %v5730
      %v5732 = vpop.f32.mrb[0].mxu0
      %v5733 = vpop.f32.mrb[0].mxu0
      %v5734 = vadd.f32 %v5573, %v5733
      %v5735 = vpop.f32.mrb[0].mxu0
      %5736 = vmatprep.mubr.bf16.mxu0 %v4492
      %5737 = vmatmul.mubr.bf16.gmra.mrb[0].mxu0 %v4428
      %v5738 = vpop.f32.mrb[0].mxu0
      %v5739 = vadd.f32 %v5578, %v5738
      %v5740 = vpop.f32.mrb[0].mxu0
      %v5741 = vpop.f32.mrb[0].mxu0
      %v5742 = vadd.f32 %v5581, %v5741
      %v5743 = vpop.f32.mrb[0].mxu0
      %5744 = vmatprep.mubr.bf16.mxu0 %v4493
      %5745 = vmatmul.mubr.bf16.gmra.mrb[0].mxu0 %v4429
      %v5746 = vpop.f32.mrb[0].mxu0
      %v5747 = vadd.f32 %v5586, %v5746
      %v5748 = vpop.f32.mrb[0].mxu0
      %v5749 = vpop.f32.mrb[0].mxu0
      %v5750 = vadd.f32 %v5589, %v5749
      %v5751 = vpop.f32.mrb[0].mxu0
      %5752 = vmatprep.mubr.bf16.mxu0 %v4494
      %5753 = vmatmul.mubr.bf16.gmra.mrb[0].mxu0 %v4430
      %v5754 = vpop.f32.mrb[0].mxu0
      %v5755 = vadd.f32 %v5594, %v5754
      %v5756 = vpop.f32.mrb[0].mxu0
      %v5757 = vpop.f32.mrb[0].mxu0
      %v5758 = vadd.f32 %v5597, %v5757
      %v5759 = vpop.f32.mrb[0].mxu0
      %5760 = vmatprep.mubr.bf16.mxu0 %v4495
      %5761 = vmatmul.mubr.bf16.gmra.mrb[0].mxu0 %v4431
      %v5762 = vpop.f32.mrb[0].mxu0
      %v5763 = vadd.f32 %v5602, %v5762
      %v5764 = vpop.f32.mrb[0].mxu0
      %v5765 = vpop.f32.mrb[0].mxu0
      %v5766 = vadd.f32 %v5605, %v5765
      %v5767 = vpop.f32.mrb[0].mxu0
      %5768 = vmatprep.mubr.bf16.mxu0 %v4496
      %5769 = vmatmul.mubr.bf16.gmra.mrb[0].mxu0 %v4432
      %v5770 = vpop.f32.mrb[0].mxu0
      %v5771 = vadd.f32 %v5610, %v5770
      %v5772 = vpop.f32.mrb[0].mxu0
      %v5773 = vpop.f32.mrb[0].mxu0
      %v5774 = vadd.f32 %v5613, %v5773
      %v5775 = vpop.f32.mrb[0].mxu0
      %5776 = vmatprep.mubr.bf16.mxu0 %v4497
      %5777 = vmatmul.mubr.bf16.gmra.mrb[0].mxu0 %v4433
      %v5778 = vpop.f32.mrb[0].mxu0
      %v5779 = vadd.f32 %v5618, %v5778
      %v5780 = vpop.f32.mrb[0].mxu0
      %v5781 = vpop.f32.mrb[0].mxu0
      %v5782 = vadd.f32 %v5621, %v5781
      %v5783 = vpop.f32.mrb[0].mxu0
      %5784 = vmatprep.mubr.bf16.mxu0 %v4498
      %5785 = vmatmul.mubr.bf16.gmra.mrb[0].mxu0 %v4434
      %v5786 = vpop.f32.mrb[0].mxu0
      %v5787 = vadd.f32 %v5626, %v5786
      %v5788 = vpop.f32.mrb[0].mxu0
      %v5789 = vpop.f32.mrb[0].mxu0
      %v5790 = vadd.f32 %v5629, %v5789
      %v5791 = vpop.f32.mrb[0].mxu0
      %5792 = vmatprep.mubr.bf16.mxu0 %v4499
      %5793 = vmatmul.mubr.bf16.gmra.mrb[0].mxu0 %v4435
      %v5794 = vpop.f32.mrb[0].mxu0
      %v5795 = vadd.f32 %v5634, %v5794
      %v5796 = vpop.f32.mrb[0].mxu0
      %v5797 = vpop.f32.mrb[0].mxu0
      %v5798 = vadd.f32 %v5637, %v5797
      %v5799 = vpop.f32.mrb[0].mxu0
      %5800 = vmatprep.mubr.bf16.mxu0 %v4500
      %5801 = vmatmul.mubr.bf16.gmra.mrb[0].mxu0 %v4436
      %v5802 = vpop.f32.mrb[0].mxu0
      %v5803 = vadd.f32 %v5642, %v5802
      %v5804 = vpop.f32.mrb[0].mxu0
      %v5805 = vpop.f32.mrb[0].mxu0
      %v5806 = vadd.f32 %v5645, %v5805
      %v5807 = vpop.f32.mrb[0].mxu0
      %5808 = vmatprep.mubr.bf16.mxu0 %v4587
      %5809 = vmatmul.mubr.bf16.gmra.mrb[0].mxu0 %v4583
      %v5810 = vpop.f32.mrb[0].mxu0
      %v5811 = vadd.f32 %v5650, %v5810
      %v5812 = vpop.f32.mrb[0].mxu0
      %v5813 = vpop.f32.mrb[0].mxu0
      %v5814 = vadd.f32 %v5653, %v5813
      %v5815 = vpop.f32.mrb[0].mxu0
      %5816 = vmatprep.mubr.bf16.mxu0 %v4599
      %5817 = vmatmul.mubr.bf16.gmra.mrb[0].mxu0 %v4595
      %v5818 = vpop.f32.mrb[0].mxu0
      %v5819 = vadd.f32 %v5658, %v5818
      %v5820 = vpop.f32.mrb[0].mxu0
      %v5821 = vpop.f32.mrb[0].mxu0
      %v5822 = vadd.f32 %v5661, %v5821
      %v5823 = vpop.f32.mrb[0].mxu0
      %5824 = vdwg.mxu0
      %5825 = vmatprep.subr.bf16.mxu0 0
      %5826 = vmatpush1.bf16.msra.mxu0 %v5101
      %5827 = vmatprep.subr.bf16.mxu0 0
      %5828 = vmatpush1.bf16.msra.mxu0 %v5102
      %5829 = vmatprep.subr.bf16.mxu0 0
      %5830 = vmatpush1.bf16.msra.mxu0 %v5103
      %5831 = vmatprep.subr.bf16.mxu0 0
      %5832 = vmatpush1.bf16.msra.mxu0 %v5104
      %5833 = vmatprep.subr.bf16.mxu0 0
      %5834 = vmatpush1.bf16.msra.mxu0 %v5105
      %5835 = vmatprep.subr.bf16.mxu0 0
      %5836 = vmatpush1.bf16.msra.mxu0 %v5106
      %5837 = vmatprep.subr.bf16.mxu0 0
      %5838 = vmatpush1.bf16.msra.mxu0 %v5107
      %5839 = vmatprep.subr.bf16.mxu0 0
      %5840 = vmatpush1.bf16.msra.mxu0 %v5108
      %5841 = vmatprep.subr.bf16.mxu0 0
      %5842 = vmatpush1.bf16.msra.mxu0 0
      %5843 = vmatprep.subr.bf16.mxu0 0
      %5844 = vmatpush1.bf16.msra.mxu0 0
      %5845 = vmatprep.subr.bf16.mxu0 0
      %5846 = vmatpush1.bf16.msra.mxu0 0
      %5847 = vmatprep.subr.bf16.mxu0 0
      %5848 = vmatpush1.bf16.msra.mxu0 0
      %5849 = vmatprep.subr.bf16.mxu0 0
      %5850 = vmatpush1.bf16.msra.mxu0 0
      %5851 = vmatprep.subr.bf16.mxu0 0
      %5852 = vmatpush1.bf16.msra.mxu0 0
      %5853 = vmatprep.subr.bf16.mxu0 0
      %5854 = vmatpush1.bf16.msra.mxu0 0
      %5855 = vmatprep.subr.bf16.mxu0 0
      %5856 = vmatpush1.bf16.msra.mxu0 0
      %5857 = vmatprep.mubr.bf16.mxu0 0
      %5858 = vmatmul.mubr.bf16.gmra.mrb[0].mxu0 %v4551
      %v5859 = vpop.f32.mrb[0].mxu0
      %v5860 = vadd.f32 %v5699, %v5859
      %v5861 = vpop.f32.mrb[0].mxu0
      %v5862 = vpop.f32.mrb[0].mxu0
      %v5863 = vadd.f32 %v5702, %v5862
      %v5864 = vpop.f32.mrb[0].mxu0
      %5865 = vmatprep.mubr.bf16.mxu0 0
      %5866 = vmatmul.mubr.bf16.gmra.mrb[0].mxu0 %v4552
      %v5867 = vpop.f32.mrb[0].mxu0
      %v5868 = vadd.f32 %v5707, %v5867
      %v5869 = vpop.f32.mrb[0].mxu0
      %v5870 = vpop.f32.mrb[0].mxu0
      %v5871 = vadd.f32 %v5710, %v5870
      %v5872 = vpop.f32.mrb[0].mxu0
      %5873 = vmatprep.mubr.bf16.mxu0 0
      %5874 = vmatmul.mubr.bf16.gmra.mrb[0].mxu0 %v4553
      %v5875 = vpop.f32.mrb[0].mxu0
      %v5876 = vadd.f32 %v5715, %v5875
      %v5877 = vpop.f32.mrb[0].mxu0
      %v5878 = vpop.f32.mrb[0].mxu0
      %v5879 = vadd.f32 %v5718, %v5878
      %v5880 = vpop.f32.mrb[0].mxu0
      %5881 = vmatprep.mubr.bf16.mxu0 0
      %5882 = vmatmul.mubr.bf16.gmra.mrb[0].mxu0 %v4554
      %v5883 = vpop.f32.mrb[0].mxu0
      %v5884 = vadd.f32 %v5723, %v5883
      %v5885 = vpop.f32.mrb[0].mxu0
      %v5886 = vpop.f32.mrb[0].mxu0
      %v5887 = vadd.f32 %v5726, %v5886
      %v5888 = vpop.f32.mrb[0].mxu0
      %5889 = vmatprep.mubr.bf16.mxu0 0
      %5890 = vmatmul.mubr.bf16.gmra.mrb[0].mxu0 %v4555
      %v5891 = vpop.f32.mrb[0].mxu0
      %v5892 = vadd.f32 %v5731, %v5891
      %v5893 = vpop.f32.mrb[0].mxu0
      %v5894 = vpop.f32.mrb[0].mxu0
      %v5895 = vadd.f32 %v5734, %v5894
      %v5896 = vpop.f32.mrb[0].mxu0
      %5897 = vmatprep.mubr.bf16.mxu0 0
      %5898 = vmatmul.mubr.bf16.gmra.mrb[0].mxu0 %v4556
      %v5899 = vpop.f32.mrb[0].mxu0
      %v5900 = vadd.f32 %v5739, %v5899
      %v5901 = vpop.f32.mrb[0].mxu0
      %v5902 = vpop.f32.mrb[0].mxu0
      %v5903 = vadd.f32 %v5742, %v5902
      %v5904 = vpop.f32.mrb[0].mxu0
      %5905 = vmatprep.mubr.bf16.mxu0 0
      %5906 = vmatmul.mubr.bf16.gmra.mrb[0].mxu0 %v4557
      %v5907 = vpop.f32.mrb[0].mxu0
      %v5908 = vadd.f32 %v5747, %v5907
      %v5909 = vpop.f32.mrb[0].mxu0
      %v5910 = vpop.f32.mrb[0].mxu0
      %v5911 = vadd.f32 %v5750, %v5910
      %v5912 = vpop.f32.mrb[0].mxu0
      %5913 = vmatprep.mubr.bf16.mxu0 0
      %5914 = vmatmul.mubr.bf16.gmra.mrb[0].mxu0 %v4558
      %v5915 = vpop.f32.mrb[0].mxu0
      %v5916 = vadd.f32 %v5755, %v5915
      %v5917 = vpop.f32.mrb[0].mxu0
      %v5918 = vpop.f32.mrb[0].mxu0
      %v5919 = vadd.f32 %v5758, %v5918
      %v5920 = vpop.f32.mrb[0].mxu0
      %5921 = vmatprep.mubr.bf16.mxu0 0
      %5922 = vmatmul.mubr.bf16.gmra.mrb[0].mxu0 %v4559
      %v5923 = vpop.f32.mrb[0].mxu0
      %v5924 = vadd.f32 %v5763, %v5923
      %v5925 = vpop.f32.mrb[0].mxu0
      %v5926 = vpop.f32.mrb[0].mxu0
      %v5927 = vadd.f32 %v5766, %v5926
      %v5928 = vpop.f32.mrb[0].mxu0
      %5929 = vmatprep.mubr.bf16.mxu0 0
      %5930 = vmatmul.mubr.bf16.gmra.mrb[0].mxu0 %v4560
      %v5931 = vpop.f32.mrb[0].mxu0
      %v5932 = vadd.f32 %v5771, %v5931
      %v5933 = vpop.f32.mrb[0].mxu0
      %v5934 = vpop.f32.mrb[0].mxu0
      %v5935 = vadd.f32 %v5774, %v5934
      %v5936 = vpop.f32.mrb[0].mxu0
      %5937 = vmatprep.mubr.bf16.mxu0 0
      %5938 = vmatmul.mubr.bf16.gmra.mrb[0].mxu0 %v4561
      %v5939 = vpop.f32.mrb[0].mxu0
      %v5940 = vadd.f32 %v5779, %v5939
      %v5941 = vpop.f32.mrb[0].mxu0
      %v5942 = vpop.f32.mrb[0].mxu0
      %v5943 = vadd.f32 %v5782, %v5942
      %v5944 = vpop.f32.mrb[0].mxu0
      %5945 = vmatprep.mubr.bf16.mxu0 0
      %5946 = vmatmul.mubr.bf16.gmra.mrb[0].mxu0 %v4562
      %v5947 = vpop.f32.mrb[0].mxu0
      %v5948 = vadd.f32 %v5787, %v5947
      %v5949 = vpop.f32.mrb[0].mxu0
      %v5950 = vpop.f32.mrb[0].mxu0
      %v5951 = vadd.f32 %v5790, %v5950
      %v5952 = vpop.f32.mrb[0].mxu0
      %5953 = vmatprep.mubr.bf16.mxu0 0
      %5954 = vmatmul.mubr.bf16.gmra.mrb[0].mxu0 %v4563
      %v5955 = vpop.f32.mrb[0].mxu0
      %v5956 = vadd.f32 %v5795, %v5955
      %v5957 = vpop.f32.mrb[0].mxu0
      %v5958 = vpop.f32.mrb[0].mxu0
      %v5959 = vadd.f32 %v5798, %v5958
      %v5960 = vpop.f32.mrb[0].mxu0
      %5961 = vmatprep.mubr.bf16.mxu0 0
      %5962 = vmatmul.mubr.bf16.gmra.mrb[0].mxu0 %v4564
      %v5963 = vpop.f32.mrb[0].mxu0
      %v5964 = vadd.f32 %v5803, %v5963
      %v5965 = vpop.f32.mrb[0].mxu0
      %v5966 = vpop.f32.mrb[0].mxu0
      %v5967 = vadd.f32 %v5806, %v5966
      %v5968 = vpop.f32.mrb[0].mxu0
      %5969 = vmatprep.mubr.bf16.mxu0 0
      %5970 = vmatmul.mubr.bf16.gmra.mrb[0].mxu0 %v4591
      %v5971 = vpop.f32.mrb[0].mxu0
      %v5972 = vadd.f32 %v5811, %v5971
      %v5973 = vpop.f32.mrb[0].mxu0
      %v5974 = vpop.f32.mrb[0].mxu0
      %v5975 = vadd.f32 %v5814, %v5974
      %v5976 = vpop.f32.mrb[0].mxu0
      %5977 = vmatprep.mubr.bf16.mxu0 0
      %5978 = vmatmul.mubr.bf16.gmra.mrb[0].mxu0 %v4603
      %v5979 = vpop.f32.mrb[0].mxu0
      %v5980 = vadd.f32 %v5819, %v5979
      %v5981 = vpop.f32.mrb[0].mxu0
      %v5982 = vpop.f32.mrb[0].mxu0
      %v5983 = vadd.f32 %v5822, %v5982
      %v5984 = vpop.f32.mrb[0].mxu0
      %5985 = vdwg.mxu0
      %v5986 = vld [vmem:[%s6] sm:$0x1]
      %v5988 = vlaneseq
      %v5989 = vshrl.u32 %v5988, 7
      %v5990 = vsub.s32 0, %v5989
      %v5991 = vrot.slane %v5986, %v5990
      %v5993 = vmul.f32 %v5860, %v5991
      %v5994 = vmul.f32 %v5863, %v5991
      %v5995 = vmul.f32 %v5868, %v5991
      %v5996 = vmul.f32 %v5871, %v5991
      %v5997 = vmul.f32 %v5876, %v5991
      %v5998 = vmul.f32 %v5879, %v5991
      %v5999 = vmul.f32 %v5884, %v5991
      %v6000 = vmul.f32 %v5887, %v5991
      %v6001 = vmul.f32 %v5892, %v5991
      %v6002 = vmul.f32 %v5895, %v5991
      %v6003 = vmul.f32 %v5900, %v5991
      %v6004 = vmul.f32 %v5903, %v5991
      %v6005 = vmul.f32 %v5908, %v5991
      %v6006 = vmul.f32 %v5911, %v5991
      %v6007 = vmul.f32 %v5916, %v5991
      %v6008 = vmul.f32 %v5919, %v5991
      %v6009 = vmul.f32 %v5924, %v5991
      %v6010 = vmul.f32 %v5927, %v5991
      %v6011 = vmul.f32 %v5932, %v5991
      %v6012 = vmul.f32 %v5935, %v5991
      %v6013 = vmul.f32 %v5940, %v5991
      %v6014 = vmul.f32 %v5943, %v5991
      %v6015 = vmul.f32 %v5948, %v5991
      %v6016 = vmul.f32 %v5951, %v5991
      %v6017 = vmul.f32 %v5956, %v5991
      %v6018 = vmul.f32 %v5959, %v5991
      %v6019 = vmul.f32 %v5964, %v5991
      %v6020 = vmul.f32 %v5967, %v5991
      %v6021 = vmul.f32 %v5972, %v5991
      %v6022 = vmul.f32 %v5975, %v5991
      %v6023 = vmul.f32 %v5980, %v5991
      %v6024 = vmul.f32 %v5983, %v5991
      %v6025 = vld [vmem:[%s7] sm:$0x1]
      %v6027 = vlaneseq
      %v6028 = vshrl.u32 %v6027, 7
      %v6029 = vsub.s32 0, %v6028
      %v6030 = vrot.slane %v6025, %v6029
      %v6032 = vadd.f32 %v5993, %v6030
      %v6033 = vadd.f32 %v5994, %v6030
      %v6034 = vadd.f32 %v5995, %v6030
      %v6035 = vadd.f32 %v5996, %v6030
      %v6036 = vadd.f32 %v5997, %v6030
      %v6037 = vadd.f32 %v5998, %v6030
      %v6038 = vadd.f32 %v5999, %v6030
      %v6039 = vadd.f32 %v6000, %v6030
      %v6040 = vadd.f32 %v6001, %v6030
      %v6041 = vadd.f32 %v6002, %v6030
      %v6042 = vadd.f32 %v6003, %v6030
      %v6043 = vadd.f32 %v6004, %v6030
      %v6044 = vadd.f32 %v6005, %v6030
      %v6045 = vadd.f32 %v6006, %v6030
      %v6046 = vadd.f32 %v6007, %v6030
      %v6047 = vadd.f32 %v6008, %v6030
      %v6048 = vadd.f32 %v6009, %v6030
      %v6049 = vadd.f32 %v6010, %v6030
      %v6050 = vadd.f32 %v6011, %v6030
      %v6051 = vadd.f32 %v6012, %v6030
      %v6052 = vadd.f32 %v6013, %v6030
      %v6053 = vadd.f32 %v6014, %v6030
      %v6054 = vadd.f32 %v6015, %v6030
      %v6055 = vadd.f32 %v6016, %v6030
      %v6056 = vadd.f32 %v6017, %v6030
      %v6057 = vadd.f32 %v6018, %v6030
      %v6058 = vadd.f32 %v6019, %v6030
      %v6059 = vadd.f32 %v6020, %v6030
      %v6060 = vadd.f32 %v6021, %v6030
      %v6061 = vadd.f32 %v6022, %v6030
      %v6062 = vadd.f32 %v6023, %v6030
      %v6063 = vadd.f32 %v6024, %v6030
      %v6064 = vmax.f32 %v6032, 0.0
      %v6065 = vmax.f32 %v6033, 0.0
      %v6066 = vmax.f32 %v6034, 0.0
      %v6067 = vmax.f32 %v6035, 0.0
      %v6068 = vmax.f32 %v6036, 0.0
      %v6069 = vmax.f32 %v6037, 0.0
      %v6070 = vmax.f32 %v6038, 0.0
      %v6071 = vmax.f32 %v6039, 0.0
      %v6072 = vmax.f32 %v6040, 0.0
      %v6073 = vmax.f32 %v6041, 0.0
      %v6074 = vmax.f32 %v6042, 0.0
      %v6075 = vmax.f32 %v6043, 0.0
      %v6076 = vmax.f32 %v6044, 0.0
      %v6077 = vmax.f32 %v6045, 0.0
      %v6078 = vmax.f32 %v6046, 0.0
      %v6079 = vmax.f32 %v6047, 0.0
      %v6080 = vmax.f32 %v6048, 0.0
      %v6081 = vmax.f32 %v6049, 0.0
      %v6082 = vmax.f32 %v6050, 0.0
      %v6083 = vmax.f32 %v6051, 0.0
      %v6084 = vmax.f32 %v6052, 0.0
      %v6085 = vmax.f32 %v6053, 0.0
      %v6086 = vmax.f32 %v6054, 0.0
      %v6087 = vmax.f32 %v6055, 0.0
      %v6088 = vmax.f32 %v6056, 0.0
      %v6089 = vmax.f32 %v6057, 0.0
      %v6090 = vmax.f32 %v6058, 0.0
      %v6091 = vmax.f32 %v6059, 0.0
      %v6092 = vmax.f32 %v6060, 0.0
      %v6093 = vmax.f32 %v6061, 0.0
      %v6094 = vmax.f32 %v6062, 0.0
      %v6095 = vmax.f32 %v6063, 0.0
      %6096 = vst [vmem:[%s325] sm:$0xff] %v6064
      %6097 = vst [vmem:[%s325 + $0x8] sm:$0xff] %v6065
      %6098 = vst [vmem:[%s325 + $0x10] sm:$0xff] %v6066
      %6099 = vst [vmem:[%s325 + $0x18] sm:$0xff] %v6067
      %6100 = vst [vmem:[%s325 + $0x20] sm:$0xff] %v6068
      %6101 = vst [vmem:[%s325 + $0x28] sm:$0xff] %v6069
      %6102 = vst [vmem:[%s325 + $0x30] sm:$0xff] %v6070
      %6103 = vst [vmem:[%s325 + $0x38] sm:$0xff] %v6071
      %6104 = vst [vmem:[%s325 + $0x40] sm:$0xff] %v6072
      %6105 = vst [vmem:[%s325 + $0x48] sm:$0xff] %v6073
      %6106 = vst [vmem:[%s325 + $0x50] sm:$0xff] %v6074
      %6107 = vst [vmem:[%s325 + $0x58] sm:$0xff] %v6075
      %6108 = vst [vmem:[%s325 + $0x60] sm:$0xff] %v6076
      %6109 = vst [vmem:[%s325 + $0x68] sm:$0xff] %v6077
      %6110 = vst [vmem:[%s325 + $0x70] sm:$0xff] %v6078
      %6111 = vst [vmem:[%s325 + $0x78] sm:$0xff] %v6079
      %6112 = vst [vmem:[%s325 + $0x80] sm:$0xff] %v6080
      %6113 = vst [vmem:[%s325 + $0x88] sm:$0xff] %v6081
      %6114 = vst [vmem:[%s325 + $0x90] sm:$0xff] %v6082
      %6115 = vst [vmem:[%s325 + $0x98] sm:$0xff] %v6083
      %6116 = vst [vmem:[%s325 + $0xa0] sm:$0xff] %v6084
      %6117 = vst [vmem:[%s325 + $0xa8] sm:$0xff] %v6085
      %6118 = vst [vmem:[%s325 + $0xb0] sm:$0xff] %v6086
      %6119 = vst [vmem:[%s325 + $0xb8] sm:$0xff] %v6087
      %6120 = vst [vmem:[%s325 + $0xc0] sm:$0xff] %v6088
      %6121 = vst [vmem:[%s325 + $0xc8] sm:$0xff] %v6089
      %6122 = vst [vmem:[%s325 + $0xd0] sm:$0xff] %v6090
      %6123 = vst [vmem:[%s325 + $0xd8] sm:$0xff] %v6091
      %6124 = vst [vmem:[%s325 + $0xe0] sm:$0xff] %v6092
      %6125 = vst [vmem:[%s325 + $0xe8] sm:$0xff] %v6093
      %6126 = vst [vmem:[%s325 + $0xf0] sm:$0xff] %v6094
      %6127 = vst [vmem:[%s325 + $0xf8] sm:$0xff] %v6095
      %p6128 = scmp.lt.s32.totalorder %s19, 1
      %s6129 = scalar_select %p6128, %s19, 1
      %s6130 = smul.addr %s6129, 32
      %s6131 = smul.addr %s6130, 8
      %s6132 = scalar_lea.vmem %s8, %s6131
      // Predicated region
      $region53: #{up_forward.1} parent=51 // pred_check
        %p6133 = pneg %p215
      $region54: #{up_forward.1} parent=51 // pred_check_branch
        %6135 = sbr.rel (%p6133) target = $region56
      $region55: #{up_forward.1} parent=51 // pred_region
        _
      $region56: #{up_forward.1} parent=51 // pred_fallthru
        _
    $region52: #{up_forward.1} parent=5 // pred_fallthru
      _
    %p6136 = scmp.le.s32.totalorder 2, %s14
    // Predicated region
    $region57: #{up_forward.1} parent=5 // pred_check
      %p6137 = pneg %p6136
    $region58: #{up_forward.1} parent=5 // pred_check_branch
      %6139 = sbr.rel (%p6137) target = $region60
    $region59: #{up_forward.1} parent=5 // pred_region
      %s6140 = ssub.s32 %s14, 2
      // Predicated region
      $region61: #{up_forward.1} parent=59 // pred_check
        %p6141 = pneg %p221
      $region62: #{up_forward.1} parent=59 // pred_check_branch
        %6143 = sbr.rel (%p6141) target = $region64
      $region63: #{up_forward.1} parent=59 // pred_region
        %p6144 = scmp.lt.s32.totalorder %s20, 1
        %s6145 = scalar_select %p6144, %s20, 1
        %s6146 = smul.addr %s6145, 32
        %s6147 = smul.addr %s6146, 8
        %s6148 = scalar_lea.vmem %s8, %s6147
      $region64: #{up_forward.1} parent=59 // pred_fallthru
        _
    $region60: #{up_forward.1} parent=5 // pred_fallthru
      _
  $region6: #{up_forward.1} parent=0 // loop_footer
    %s18 = sadd.s32 1, %s14
  $region7: #{up_forward.1} parent=0 // loop_footer_branch
    %13 = sbr.rel target = $region3
  $region8: #{up_forward.1} parent=0 // loop_exit
    _

</llo_original>
